<compile_context>
chip_gen: v6e
topology: v6e:2x2x1
jax: 0.10.0
libtpu: 0.0.40
codegen_flags: <defaults>
</compile_context>

<pallas_src>
import math

import jax
import jax.numpy as jnp
from jax.experimental import pallas as pl
from jax.experimental.pallas import tpu as pltpu


def _fdffn_kernel(x_ref, w1_ref, w2_ref, cmat_ref, nsmat_ref, ch_ref, bn2b_ref,
                  o_ref, ha_ref):
    TB, N, C = x_ref.shape
    Hp = w1_ref.shape[1]
    mdt = w1_ref.dtype          # fc1/fc2 MXU operand dtype (bf16 by default)
    fdt = cmat_ref.dtype        # DFT MXU operand dtype (f32 by default)

    # ---- fc1: Conv1d(C->H, k=1), BN1 scale folded into w1; all TB samples in a
    # single matmul.  Leading-dim reshape is layout preserving (no copy).
    x2 = x_ref[...].reshape(TB * N, C)
    h = jnp.dot(x2.astype(mdt), w1_ref[...],
                preferred_element_type=jnp.float32)                  # (TB*N, Hp)
    h = jnp.maximum(h + ch_ref[4:5, :], 0.0)        # BN1 shift + ReLU, (1,Hp) bcast

    # ---- re-block to the lane-dense frequency layout (N, TB*Hp): store
    # 128-aligned lane slices into VMEM scratch (no concatenates, bounded lifetime).
    hs = h.astype(fdt)
    for b in range(TB):
        ha_ref[:, b * Hp:(b + 1) * Hp] = hs[b * N:(b + 1) * N, :]

    # ---- FFT along N (norm='ortho') as two wide dense-DFT matmuls ---------------
    cm = cmat_ref[...]           # cos(2*pi*k*n/N)/sqrt(N)
    nsm = nsmat_ref[...]         # -sin(2*pi*k*n/N)/sqrt(N)   (shared with the IFFT)
    hA = ha_ref[...]
    xr = jnp.dot(cm, hA, preferred_element_type=jnp.float32)         # Re(FFT)
    xi = jnp.dot(nsm, hA, preferred_element_type=jnp.float32)        # Im(FFT)
    # TODO(synk): Hermitian-symmetry half-spectrum trick for N >= 512.

    # ---- per-channel complex scale (diag r / diag i) + bias + ReLU --------------
    # Channel params live once at width Hp; widen to TB*Hp with one lane concat.
    chv = ch_ref[...]                                                 # (8, Hp)
    fp = jnp.concatenate([chv] * TB, axis=1) if TB > 1 else chv      # (8, TB*Hp)
    dr, di, rb, ib = fp[0:1], fp[1:2], fp[2:3], fp[3:4]
    yr = jnp.maximum(xr * dr - xi * di + rb, 0.0).astype(fdt)
    yi = jnp.maximum(xi * dr + xr * di + ib, 0.0).astype(fdt)

    # ---- IFFT along N (ortho), real part ----------------------------------------
    z = (jnp.dot(cm, yr, preferred_element_type=jnp.float32)
         + jnp.dot(nsm, yi, preferred_element_type=jnp.float32))     # (N, TB*Hp)

    # ---- fc2: Conv1d(H->C) + BN2 per sample on 128-aligned lane slices of z -----
    bn2b = bn2b_ref[...]
    for b in range(TB):
        zb = z[:, b * Hp:(b + 1) * Hp].astype(mdt)
        o_ref[b] = jnp.dot(zb, w2_ref[...],
                           preferred_element_type=jnp.float32) + bn2b


def _vmem_estimate(tb, n, c, hp, mm_size, dft_size):
    """Rough per-step VMEM bytes (constants counted double-buffered = worst case)."""
    consts = 2 * ((2 * n * n) * dft_size + (2 * c * hp) * mm_size
                  + (8 * hp + c) * 4)
    io = 2 * (2 * tb * n * c * 4)            # x block + out block, double-buffered
    scratch = tb * n * hp * dft_size         # (N, TB*Hp) frequency-layout scratch
    live = 8 * tb * n * hp * 4               # h, xr, xi, yr, yi, z + cast copies
    return consts + io + scratch + live


def _vmem_policy():
    """(budget_bytes, mxu_row_target) derived from the actual chip generation."""
    try:
        cap = int(pltpu.get_tpu_info().vmem_capacity_bytes)
    except Exception:
        cap = 64 * 1024 * 1024               # conservative default (v7x-sized)
    budget = (cap * 3) // 4                  # ~25% headroom for Mosaic scratch
    row_target = 512 if cap >= 128 * 1024 * 1024 else 256
    return budget, row_target


def _choose_tb(B, N, C, Hp, mm_size, dft_size, budget, row_target):
    """Largest useful batch tile that fits VMEM; prefers zero batch padding,
    an even number of grid steps (v7x dual-core balance), and >=256 MXU rows."""
    tb_hi = max(1, min(B, -(-row_target // N)))
    best, best_key = 1, None
    for tb in range(1, tb_hi + 1):
        if _vmem_estimate(tb, N, C, Hp, mm_size, dft_size) > budget:
            continue
        gb = -(-B // tb)
        pad = gb * tb - B
        odd_gb = gb % 2 if B > 1 else 0
        small_m = 0 if tb * N >= min(256, B * N) else 1
        key = (pad, odd_gb, small_m, gb)
        if best_key is None or key < best_key:
            best, best_key = tb, key
    return best


def _const_spec(shape, single_buffer):
    """BlockSpec for a grid-invariant operand; single-buffered when supported."""
    index_map = lambda g: (0,) * len(shape)
    if single_buffer and hasattr(pl, "Buffered"):
        try:
            return pl.BlockSpec(shape, index_map, pipeline_mode=pl.Buffered(1))
        except TypeError:
            pass
    return pl.BlockSpec(shape, index_map)


def frequencydomain_ffn(x, params, *, matmul_dtype=jnp.bfloat16,
                        dft_dtype=jnp.float32, single_buffer_consts=True):
    """x: (B, N, C) float32 -> (B, N, C) float32 (eval-mode BatchNorm)."""
    B, N, C = x.shape
    H = params["w1"].shape[0]            # Conv1d(dim -> dim*mlp_ratio) weight (H, C)
    eps = 1e-5
    LANE = 128
    Hp = ((H + LANE - 1) // LANE) * LANE
    mm_size = jnp.dtype(matmul_dtype).itemsize
    dft_size = jnp.dtype(dft_dtype).itemsize

    budget, row_target = _vmem_policy()
    TB = _choose_tb(B, N, C, Hp, mm_size, dft_size, budget, row_target)
    GB = -(-B // TB)
    Bp = GB * TB

    # DFT matrices (ortho normalization); -sin shared by FFT and IFFT.
    idx = jnp.arange(N, dtype=jnp.float32)
    theta = 2.0 * math.pi * jnp.outer(idx, idx) / float(N)
    inv_sqrt_n = 1.0 / math.sqrt(float(N))
    cmat = (jnp.cos(theta) * inv_sqrt_n).astype(dft_dtype)
    nsmat = (-jnp.sin(theta) * inv_sqrt_n).astype(dft_dtype)

    # Fold eval-mode BatchNorm scales into the conv weights; keep only the shifts.
    bn1_scale = params["bn1_gamma"] / jnp.sqrt(params["bn1_var"] + eps)
    bn1_shift = params["bn1_beta"] - params["bn1_mean"] * bn1_scale
    bn2_scale = params["bn2_gamma"] / jnp.sqrt(params["bn2_var"] + eps)
    bn2_shift = params["bn2_beta"] - params["bn2_mean"] * bn2_scale

    # H is zero-padded to Hp (multiple of 128): inert through the whole pipeline.
    w1s = jnp.zeros((C, Hp), jnp.float32).at[:, :H].set(
        params["w1"].T * bn1_scale[None, :]).astype(matmul_dtype)
    w2s = jnp.zeros((Hp, C), jnp.float32).at[:H, :].set(
        params["w2"].T * bn2_scale[None, :]).astype(matmul_dtype)

    def _pad_h(v):
        return jnp.zeros((Hp,), jnp.float32).at[:H].set(v)

    # Per-H-channel vectors stored ONCE at width Hp (widened in-kernel).
    ch_stack = jnp.zeros((8, Hp), jnp.float32)
    ch_stack = ch_stack.at[0].set(_pad_h(jnp.diag(params["r"])))
    ch_stack = ch_stack.at[1].set(_pad_h(jnp.diag(params["i"])))
    ch_stack = ch_stack.at[2].set(_pad_h(params["rb"]))
    ch_stack = ch_stack.at[3].set(_pad_h(params["ib"]))
    ch_stack = ch_stack.at[4].set(_pad_h(bn1_shift))
    bn2b = bn2_shift.reshape(1, C).astype(jnp.float32)

    # Only the batch is padded; the channel dim stays at C in HBM (less DMA).
    x = x.astype(jnp.float32)
    xp = x if Bp == B else jnp.zeros((Bp, N, C), jnp.float32).at[:B].set(x)

    vmem_limit = int(min(budget, max(32 * 1024 * 1024,
                                     2 * _vmem_estimate(TB, N, C, Hp,
                                                        mm_size, dft_size))))

    def _build(single_buffer):
        return pl.pallas_call(
            _fdffn_kernel,
            out_shape=jax.ShapeDtypeStruct((Bp, N, C), jnp.float32),
            grid=(GB,),
            in_specs=[
                pl.BlockSpec((TB, N, C), lambda g: (g, 0, 0)),     # x (batch tile)
                _const_spec((C, Hp), single_buffer),               # w1^T (BN1 folded)
                _const_spec((Hp, C), single_buffer),               # w2^T (BN2 folded)
                _const_spec((N, N), single_buffer),                # cos DFT matrix
                _const_spec((N, N), single_buffer),                # -sin DFT matrix
                _const_spec((8, Hp), single_buffer),               # channel params
                _const_spec((1, C), single_buffer),                # BN2 shift
            ],
            out_specs=pl.BlockSpec((TB, N, C), lambda g: (g, 0, 0)),
            scratch_shapes=[pltpu.VMEM((N, TB * Hp), dft_dtype)],
            compiler_params=pltpu.CompilerParams(
                dimension_semantics=("parallel",),
                vmem_limit_bytes=vmem_limit),
        )

    args = (xp, w1s, w2s, cmat, nsmat, ch_stack, bn2b)
    if single_buffer_consts:
        try:
            out_p = _build(True)(*args)
        except Exception:
            # pl.Buffered(1) unsupported in this jax build -> default buffering.
            out_p = _build(False)(*args)
    else:
        out_p = _build(False)(*args)
    return out_p[:B]


def _reference(x, params):
    """Pure-JAX reference (uses jnp.fft) for correctness checking."""
    eps = 1e-5
    bn1s = params["bn1_gamma"] / jnp.sqrt(params["bn1_var"] + eps)
    bn1b = params["bn1_beta"] - params["bn1_mean"] * bn1s
    bn2s = params["bn2_gamma"] / jnp.sqrt(params["bn2_var"] + eps)
    bn2b = params["bn2_beta"] - params["bn2_mean"] * bn2s

    h = jnp.einsum("bnc,hc->bnh", x, params["w1"]) * bn1s + bn1b
    h = jnp.maximum(h, 0.0)
    xf = jnp.fft.fft(h, axis=1, norm="ortho")
    dr = jnp.diag(params["r"])
    di = jnp.diag(params["i"])
    yr = jnp.maximum(xf.real * dr - xf.imag * di + params["rb"], 0.0)
    yi = jnp.maximum(xf.imag * dr + xf.real * di + params["ib"], 0.0)
    z = jnp.fft.ifft(yr + 1j * yi, axis=1, norm="ortho").real.astype(jnp.float32)
    out = jnp.einsum("bnh,ch->bnc", z, params["w2"]) * bn2s + bn2b
    return out


def init_params(key, dim, mlp_ratio):
    H = dim * mlp_ratio
    scale = 0.02
    ks = jax.random.split(key, 6)
    return {
        "r": scale * jax.random.normal(ks[0], (H, H), jnp.float32),
        "i": scale * jax.random.normal(ks[1], (H, H), jnp.float32),
        "rb": scale * jax.random.normal(ks[2], (H,), jnp.float32),
        "ib": scale * jax.random.normal(ks[3], (H,), jnp.float32),
        "w1": 0.1 * jax.random.normal(ks[4], (H, dim), jnp.float32),  # Conv1d(dim->H)
        "w2": 0.1 * jax.random.normal(ks[5], (dim, H), jnp.float32),  # Conv1d(H->dim)
        # BatchNorm1d defaults (eval mode)
        "bn1_gamma": jnp.ones((H,), jnp.float32),
        "bn1_beta": jnp.zeros((H,), jnp.float32),
        "bn1_mean": jnp.zeros((H,), jnp.float32),
        "bn1_var": jnp.ones((H,), jnp.float32),
        "bn2_gamma": jnp.ones((dim,), jnp.float32),
        "bn2_beta": jnp.zeros((dim,), jnp.float32),
        "bn2_mean": jnp.zeros((dim,), jnp.float32),
        "bn2_var": jnp.ones((dim,), jnp.float32),
    }


if __name__ == "__main__":
    B, N, dim, mlp_ratio = 8, 16, 16, 2
    key = jax.random.PRNGKey(0)
    kx, kp = jax.random.split(key)
    x = jax.random.normal(kx, (B, N, dim), jnp.float32)
    params = init_params(kp, dim, mlp_ratio)

    ref = jax.block_until_ready(_reference(x, params))

    # Default path: bf16 fc1/fc2 MXU operands, f32 DFT matrices, f32 accumulation.
    out_bf = jax.block_until_ready(frequencydomain_ffn(x, params))
    assert out_bf.shape == (B, N, dim)
    assert jnp.allclose(out_bf, ref, atol=2e-2, rtol=2e-2), (
        float(jnp.max(jnp.abs(out_bf - ref))))

    # Full-f32 path (tight tolerance).
    out_f32 = jax.block_until_ready(
        frequencydomain_ffn(x, params, matmul_dtype=jnp.float32))
    assert out_f32.shape == (B, N, dim)
    assert jnp.allclose(out_f32, ref, atol=2e-4, rtol=2e-4), (
        float(jnp.max(jnp.abs(out_f32 - ref))))

    print("KERNEL_OK")
</pallas_src>

<mosaic_0001>
module attributes {stable_mosaic.version = 11 : i64} {
  func.func @_fdffn_kernel(%arg0: i32, %arg1: memref<4x16x16xf32, #tpu.memory_space<vmem>>, %arg2: memref<16x128xbf16, #tpu.memory_space<vmem>>, %arg3: memref<128x16xbf16, #tpu.memory_space<vmem>>, %arg4: memref<16x16xf32, #tpu.memory_space<vmem>>, %arg5: memref<16x16xf32, #tpu.memory_space<vmem>>, %arg6: memref<8x128xf32, #tpu.memory_space<vmem>>, %arg7: memref<1x16xf32, #tpu.memory_space<vmem>>, %arg8: memref<4x16x16xf32, #tpu.memory_space<vmem>>, %arg9: memref<16x512xf32, #tpu.memory_space<vmem>>) attributes {dimension_semantics = [#tpu.dimension_semantics<parallel>], iteration_bounds = array<i64: 2>, scalar_prefetch = 0 : i64, scratch_operands = 1 : i64, tpu.core_type = #tpu.core_type<tc>, window_params = [{transform_indices = @transform_0, window_bounds = array<i64: 4, 16, 16>}, {pipeline_mode = #tpu.pipeline_mode<synchronous>, transform_indices = @transform_1, window_bounds = array<i64: 16, 128>}, {pipeline_mode = #tpu.pipeline_mode<synchronous>, transform_indices = @transform_2, window_bounds = array<i64: 128, 16>}, {pipeline_mode = #tpu.pipeline_mode<synchronous>, transform_indices = @transform_3, window_bounds = array<i64: 16, 16>}, {pipeline_mode = #tpu.pipeline_mode<synchronous>, transform_indices = @transform_4, window_bounds = array<i64: 16, 16>}, {pipeline_mode = #tpu.pipeline_mode<synchronous>, transform_indices = @transform_5, window_bounds = array<i64: 8, 128>}, {pipeline_mode = #tpu.pipeline_mode<synchronous>, transform_indices = @transform_6, window_bounds = array<i64: 1, 16>}, {transform_indices = @transform_7, window_bounds = array<i64: 4, 16, 16>}]} {
    %c0 = arith.constant 0 : index
    %c0_0 = arith.constant 0 : index
    %c0_1 = arith.constant 0 : index
    %0 = vector.load %arg1[%c0, %c0_0, %c0_1] : memref<4x16x16xf32, #tpu.memory_space<vmem>>, vector<4x16x16xf32>
    %1 = vector.shape_cast %0 : vector<4x16x16xf32> to vector<64x16xf32>
    %2 = arith.truncf %1 : vector<64x16xf32> to vector<64x16xbf16>
    %c0_2 = arith.constant 0 : index
    %c0_3 = arith.constant 0 : index
    %3 = vector.load %arg2[%c0_2, %c0_3] : memref<16x128xbf16, #tpu.memory_space<vmem>>, vector<16x128xbf16>
    %cst = arith.constant dense<0.000000e+00> : vector<64x128xf32>
    %4 = tpu.matmul %2, %3, %cst {dimension_numbers = #tpu.dot_dimension_numbers<[1], [0], [0], [1], [0, 0, 1, 1], [], []>} : vector<64x16xbf16>, vector<16x128xbf16>, vector<64x128xf32> -> vector<64x128xf32>
    %c4 = arith.constant 4 : index
    %c0_4 = arith.constant 0 : index
    %5 = vector.load %arg6[%c4, %c0_4] : memref<8x128xf32, #tpu.memory_space<vmem>>, vector<1x128xf32>
    %6 = vector.broadcast %5 : vector<1x128xf32> to vector<64x128xf32>
    %7 = arith.addf %4, %6 : vector<64x128xf32>
    %cst_5 = arith.constant 0.000000e+00 : f32
    %8 = vector.broadcast %cst_5 : f32 to vector<64x128xf32>
    %9 = arith.maximumf %7, %8 : vector<64x128xf32>
    %10 = vector.extract_strided_slice %9 {offsets = [0, 0], sizes = [16, 128], strides = [1, 1]} : vector<64x128xf32> to vector<16x128xf32>
    %c0_6 = arith.constant 0 : index
    %c0_7 = arith.constant 0 : index
    %11 = vector.load %arg9[%c0_6, %c0_7] : memref<16x512xf32, #tpu.memory_space<vmem>>, vector<16x128xf32>
    tpu.vector_store %arg9[%c0_6, %c0_7], %10 {strides = array<i32>} : memref<16x512xf32, #tpu.memory_space<vmem>>, vector<16x128xf32>,
    %12 = vector.extract_strided_slice %9 {offsets = [16, 0], sizes = [16, 128], strides = [1, 1]} : vector<64x128xf32> to vector<16x128xf32>
    %c0_8 = arith.constant 0 : index
    %c128 = arith.constant 128 : index
    %13 = vector.load %arg9[%c0_8, %c128] : memref<16x512xf32, #tpu.memory_space<vmem>>, vector<16x128xf32>
    tpu.vector_store %arg9[%c0_8, %c128], %12 {strides = array<i32>} : memref<16x512xf32, #tpu.memory_space<vmem>>, vector<16x128xf32>,
    %14 = vector.extract_strided_slice %9 {offsets = [32, 0], sizes = [16, 128], strides = [1, 1]} : vector<64x128xf32> to vector<16x128xf32>
    %c0_9 = arith.constant 0 : index
    %c256 = arith.constant 256 : index
    %15 = vector.load %arg9[%c0_9, %c256] : memref<16x512xf32, #tpu.memory_space<vmem>>, vector<16x128xf32>
    tpu.vector_store %arg9[%c0_9, %c256], %14 {strides = array<i32>} : memref<16x512xf32, #tpu.memory_space<vmem>>, vector<16x128xf32>,
    %16 = vector.extract_strided_slice %9 {offsets = [48, 0], sizes = [16, 128], strides = [1, 1]} : vector<64x128xf32> to vector<16x128xf32>
    %c0_10 = arith.constant 0 : index
    %c384 = arith.constant 384 : index
    %17 = vector.load %arg9[%c0_10, %c384] : memref<16x512xf32, #tpu.memory_space<vmem>>, vector<16x128xf32>
    tpu.vector_store %arg9[%c0_10, %c384], %16 {strides = array<i32>} : memref<16x512xf32, #tpu.memory_space<vmem>>, vector<16x128xf32>,
    %c0_11 = arith.constant 0 : index
    %c0_12 = arith.constant 0 : index
    %18 = vector.load %arg4[%c0_11, %c0_12] : memref<16x16xf32, #tpu.memory_space<vmem>>, vector<16x16xf32>
    %c0_13 = arith.constant 0 : index
    %c0_14 = arith.constant 0 : index
    %19 = vector.load %arg5[%c0_13, %c0_14] : memref<16x16xf32, #tpu.memory_space<vmem>>, vector<16x16xf32>
    %c0_15 = arith.constant 0 : index
    %c0_16 = arith.constant 0 : index
    %20 = vector.load %arg9[%c0_15, %c0_16] : memref<16x512xf32, #tpu.memory_space<vmem>>, vector<16x512xf32>
    %cst_17 = arith.constant dense<0.000000e+00> : vector<16x512xf32>
    %21 = tpu.matmul %18, %20, %cst_17 {dimension_numbers = #tpu.dot_dimension_numbers<[1], [0], [0], [1], [0, 0, 1, 1], [], []>} : vector<16x16xf32>, vector<16x512xf32>, vector<16x512xf32> -> vector<16x512xf32>
    %cst_18 = arith.constant dense<0.000000e+00> : vector<16x512xf32>
    %22 = tpu.matmul %19, %20, %cst_18 {dimension_numbers = #tpu.dot_dimension_numbers<[1], [0], [0], [1], [0, 0, 1, 1], [], []>} : vector<16x16xf32>, vector<16x512xf32>, vector<16x512xf32> -> vector<16x512xf32>
    %c0_19 = arith.constant 0 : index
    %c0_20 = arith.constant 0 : index
    %23 = vector.load %arg6[%c0_19, %c0_20] : memref<8x128xf32, #tpu.memory_space<vmem>>, vector<8x128xf32>
    %24 = tpu.concatenate %23, %23, %23, %23 in 1 : vector<8x128xf32>, vector<8x128xf32>, vector<8x128xf32>, vector<8x128xf32> -> vector<8x512xf32>
    %25 = vector.extract_strided_slice %24 {offsets = [0, 0], sizes = [1, 512], strides = [1, 1]} : vector<8x512xf32> to vector<1x512xf32>
    %26 = vector.extract_strided_slice %24 {offsets = [1, 0], sizes = [1, 512], strides = [1, 1]} : vector<8x512xf32> to vector<1x512xf32>
    %27 = vector.extract_strided_slice %24 {offsets = [2, 0], sizes = [1, 512], strides = [1, 1]} : vector<8x512xf32> to vector<1x512xf32>
    %28 = vector.extract_strided_slice %24 {offsets = [3, 0], sizes = [1, 512], strides = [1, 1]} : vector<8x512xf32> to vector<1x512xf32>
    %29 = vector.broadcast %25 : vector<1x512xf32> to vector<16x512xf32>
    %30 = arith.mulf %21, %29 : vector<16x512xf32>
    %31 = vector.broadcast %26 : vector<1x512xf32> to vector<16x512xf32>
    %32 = arith.mulf %22, %31 : vector<16x512xf32>
    %33 = arith.subf %30, %32 : vector<16x512xf32>
    %34 = vector.broadcast %27 : vector<1x512xf32> to vector<16x512xf32>
    %35 = arith.addf %33, %34 : vector<16x512xf32>
    %cst_21 = arith.constant 0.000000e+00 : f32
    %36 = vector.broadcast %cst_21 : f32 to vector<16x512xf32>
    %37 = arith.maximumf %35, %36 : vector<16x512xf32>
    %38 = vector.broadcast %25 : vector<1x512xf32> to vector<16x512xf32>
    %39 = arith.mulf %22, %38 : vector<16x512xf32>
    %40 = vector.broadcast %26 : vector<1x512xf32> to vector<16x512xf32>
    %41 = arith.mulf %21, %40 : vector<16x512xf32>
    %42 = arith.addf %39, %41 : vector<16x512xf32>
    %43 = vector.broadcast %28 : vector<1x512xf32> to vector<16x512xf32>
    %44 = arith.addf %42, %43 : vector<16x512xf32>
    %cst_22 = arith.constant 0.000000e+00 : f32
    %45 = vector.broadcast %cst_22 : f32 to vector<16x512xf32>
    %46 = arith.maximumf %44, %45 : vector<16x512xf32>
    %cst_23 = arith.constant dense<0.000000e+00> : vector<16x512xf32>
    %47 = tpu.matmul %18, %37, %cst_23 {dimension_numbers = #tpu.dot_dimension_numbers<[1], [0], [0], [1], [0, 0, 1, 1], [], []>} : vector<16x16xf32>, vector<16x512xf32>, vector<16x512xf32> -> vector<16x512xf32>
    %cst_24 = arith.constant dense<0.000000e+00> : vector<16x512xf32>
    %48 = tpu.matmul %19, %46, %cst_24 {dimension_numbers = #tpu.dot_dimension_numbers<[1], [0], [0], [1], [0, 0, 1, 1], [], []>} : vector<16x16xf32>, vector<16x512xf32>, vector<16x512xf32> -> vector<16x512xf32>
    %49 = arith.addf %47, %48 : vector<16x512xf32>
    %c0_25 = arith.constant 0 : index
    %c0_26 = arith.constant 0 : index
    %50 = vector.load %arg7[%c0_25, %c0_26] : memref<1x16xf32, #tpu.memory_space<vmem>>, vector<1x16xf32>
    %51 = vector.extract_strided_slice %49 {offsets = [0, 0], sizes = [16, 128], strides = [1, 1]} : vector<16x512xf32> to vector<16x128xf32>
    %52 = arith.truncf %51 : vector<16x128xf32> to vector<16x128xbf16>
    %c0_27 = arith.constant 0 : index
    %c0_28 = arith.constant 0 : index
    %53 = vector.load %arg3[%c0_27, %c0_28] : memref<128x16xbf16, #tpu.memory_space<vmem>>, vector<128x16xbf16>
    %cst_29 = arith.constant dense<0.000000e+00> : vector<16x16xf32>
    %54 = tpu.matmul %52, %53, %cst_29 {dimension_numbers = #tpu.dot_dimension_numbers<[1], [0], [0], [1], [0, 0, 1, 1], [], []>} : vector<16x128xbf16>, vector<128x16xbf16>, vector<16x16xf32> -> vector<16x16xf32>
    %55 = vector.broadcast %50 : vector<1x16xf32> to vector<16x16xf32>
    %56 = arith.addf %54, %55 : vector<16x16xf32>
    %c0_30 = arith.constant 0 : index
    %c0_31 = arith.constant 0 : index
    %c0_32 = arith.constant 0 : index
    %57 = vector.load %arg8[%c0_30, %c0_31, %c0_32] : memref<4x16x16xf32, #tpu.memory_space<vmem>>, vector<1x16x16xf32>
    %58 = vector.shape_cast %57 : vector<1x16x16xf32> to vector<16x16xf32>
    %59 = vector.shape_cast %56 : vector<16x16xf32> to vector<1x16x16xf32>
    tpu.vector_store %arg8[%c0_30, %c0_31, %c0_32], %59 {strides = array<i32>} : memref<4x16x16xf32, #tpu.memory_space<vmem>>, vector<1x16x16xf32>,
    %60 = vector.extract_strided_slice %49 {offsets = [0, 128], sizes = [16, 128], strides = [1, 1]} : vector<16x512xf32> to vector<16x128xf32>
    %61 = arith.truncf %60 : vector<16x128xf32> to vector<16x128xbf16>
    %c0_33 = arith.constant 0 : index
    %c0_34 = arith.constant 0 : index
    %62 = vector.load %arg3[%c0_33, %c0_34] : memref<128x16xbf16, #tpu.memory_space<vmem>>, vector<128x16xbf16>
    %cst_35 = arith.constant dense<0.000000e+00> : vector<16x16xf32>
    %63 = tpu.matmul %61, %62, %cst_35 {dimension_numbers = #tpu.dot_dimension_numbers<[1], [0], [0], [1], [0, 0, 1, 1], [], []>} : vector<16x128xbf16>, vector<128x16xbf16>, vector<16x16xf32> -> vector<16x16xf32>
    %64 = vector.broadcast %50 : vector<1x16xf32> to vector<16x16xf32>
    %65 = arith.addf %63, %64 : vector<16x16xf32>
    %c1 = arith.constant 1 : index
    %c0_36 = arith.constant 0 : index
    %c0_37 = arith.constant 0 : index
    %66 = vector.load %arg8[%c1, %c0_36, %c0_37] : memref<4x16x16xf32, #tpu.memory_space<vmem>>, vector<1x16x16xf32>
    %67 = vector.shape_cast %66 : vector<1x16x16xf32> to vector<16x16xf32>
    %68 = vector.shape_cast %65 : vector<16x16xf32> to vector<1x16x16xf32>
    tpu.vector_store %arg8[%c1, %c0_36, %c0_37], %68 {strides = array<i32>} : memref<4x16x16xf32, #tpu.memory_space<vmem>>, vector<1x16x16xf32>,
    %69 = vector.extract_strided_slice %49 {offsets = [0, 256], sizes = [16, 128], strides = [1, 1]} : vector<16x512xf32> to vector<16x128xf32>
    %70 = arith.truncf %69 : vector<16x128xf32> to vector<16x128xbf16>
    %c0_38 = arith.constant 0 : index
    %c0_39 = arith.constant 0 : index
    %71 = vector.load %arg3[%c0_38, %c0_39] : memref<128x16xbf16, #tpu.memory_space<vmem>>, vector<128x16xbf16>
    %cst_40 = arith.constant dense<0.000000e+00> : vector<16x16xf32>
    %72 = tpu.matmul %70, %71, %cst_40 {dimension_numbers = #tpu.dot_dimension_numbers<[1], [0], [0], [1], [0, 0, 1, 1], [], []>} : vector<16x128xbf16>, vector<128x16xbf16>, vector<16x16xf32> -> vector<16x16xf32>
    %73 = vector.broadcast %50 : vector<1x16xf32> to vector<16x16xf32>
    %74 = arith.addf %72, %73 : vector<16x16xf32>
    %c2 = arith.constant 2 : index
    %c0_41 = arith.constant 0 : index
    %c0_42 = arith.constant 0 : index
    %75 = vector.load %arg8[%c2, %c0_41, %c0_42] : memref<4x16x16xf32, #tpu.memory_space<vmem>>, vector<1x16x16xf32>
    %76 = vector.shape_cast %75 : vector<1x16x16xf32> to vector<16x16xf32>
    %77 = vector.shape_cast %74 : vector<16x16xf32> to vector<1x16x16xf32>
    tpu.vector_store %arg8[%c2, %c0_41, %c0_42], %77 {strides = array<i32>} : memref<4x16x16xf32, #tpu.memory_space<vmem>>, vector<1x16x16xf32>,
    %78 = vector.extract_strided_slice %49 {offsets = [0, 384], sizes = [16, 128], strides = [1, 1]} : vector<16x512xf32> to vector<16x128xf32>
    %79 = arith.truncf %78 : vector<16x128xf32> to vector<16x128xbf16>
    %c0_43 = arith.constant 0 : index
    %c0_44 = arith.constant 0 : index
    %80 = vector.load %arg3[%c0_43, %c0_44] : memref<128x16xbf16, #tpu.memory_space<vmem>>, vector<128x16xbf16>
    %cst_45 = arith.constant dense<0.000000e+00> : vector<16x16xf32>
    %81 = tpu.matmul %79, %80, %cst_45 {dimension_numbers = #tpu.dot_dimension_numbers<[1], [0], [0], [1], [0, 0, 1, 1], [], []>} : vector<16x128xbf16>, vector<128x16xbf16>, vector<16x16xf32> -> vector<16x16xf32>
    %82 = vector.broadcast %50 : vector<1x16xf32> to vector<16x16xf32>
    %83 = arith.addf %81, %82 : vector<16x16xf32>
    %c3 = arith.constant 3 : index
    %c0_46 = arith.constant 0 : index
    %c0_47 = arith.constant 0 : index
    %84 = vector.load %arg8[%c3, %c0_46, %c0_47] : memref<4x16x16xf32, #tpu.memory_space<vmem>>, vector<1x16x16xf32>
    %85 = vector.shape_cast %84 : vector<1x16x16xf32> to vector<16x16xf32>
    %86 = vector.shape_cast %83 : vector<16x16xf32> to vector<1x16x16xf32>
    tpu.vector_store %arg8[%c3, %c0_46, %c0_47], %86 {strides = array<i32>} : memref<4x16x16xf32, #tpu.memory_space<vmem>>, vector<1x16x16xf32>,
    return
  }
  func.func @transform_0(%arg0: i32) -> (i32, i32, i32) {
    %c0_i32 = arith.constant 0 : i32
    %c0_i32_0 = arith.constant 0 : i32
    %c0_i32_1 = arith.constant 0 : i32
    return %arg0, %c0_i32, %c0_i32_0 : i32, i32, i32
  }
  func.func @transform_1(%arg0: i32) -> (i32, i32) {
    %c0_i32 = arith.constant 0 : i32
    %c0_i32_0 = arith.constant 0 : i32
    %c0_i32_1 = arith.constant 0 : i32
    return %c0_i32, %c0_i32_0 : i32, i32
  }
  func.func @transform_2(%arg0: i32) -> (i32, i32) {
    %c0_i32 = arith.constant 0 : i32
    %c0_i32_0 = arith.constant 0 : i32
    %c0_i32_1 = arith.constant 0 : i32
    return %c0_i32, %c0_i32_0 : i32, i32
  }
  func.func @transform_3(%arg0: i32) -> (i32, i32) {
    %c0_i32 = arith.constant 0 : i32
    %c0_i32_0 = arith.constant 0 : i32
    %c0_i32_1 = arith.constant 0 : i32
    return %c0_i32, %c0_i32_0 : i32, i32
  }
  func.func @transform_4(%arg0: i32) -> (i32, i32) {
    %c0_i32 = arith.constant 0 : i32
    %c0_i32_0 = arith.constant 0 : i32
    %c0_i32_1 = arith.constant 0 : i32
    return %c0_i32, %c0_i32_0 : i32, i32
  }
  func.func @transform_5(%arg0: i32) -> (i32, i32) {
    %c0_i32 = arith.constant 0 : i32
    %c0_i32_0 = arith.constant 0 : i32
    %c0_i32_1 = arith.constant 0 : i32
    return %c0_i32, %c0_i32_0 : i32, i32
  }
  func.func @transform_6(%arg0: i32) -> (i32, i32) {
    %c0_i32 = arith.constant 0 : i32
    %c0_i32_0 = arith.constant 0 : i32
    %c0_i32_1 = arith.constant 0 : i32
    return %c0_i32, %c0_i32_0 : i32, i32
  }
  func.func @transform_7(%arg0: i32) -> (i32, i32, i32) {
    %c0_i32 = arith.constant 0 : i32
    %c0_i32_0 = arith.constant 0 : i32
    %c0_i32_1 = arith.constant 0 : i32
    return %arg0, %c0_i32, %c0_i32_0 : i32, i32, i32
  }
}

module attributes {stable_mosaic.version = 11 : i64} {
  func.func @_fdffn_kernel(%arg0: i32, %arg1: memref<4x16x16xf32, #tpu.memory_space<vmem>>, %arg2: memref<16x128xbf16, #tpu.memory_space<vmem>>, %arg3: memref<128x16xbf16, #tpu.memory_space<vmem>>, %arg4: memref<16x16xf32, #tpu.memory_space<vmem>>, %arg5: memref<16x16xf32, #tpu.memory_space<vmem>>, %arg6: memref<8x128xf32, #tpu.memory_space<vmem>>, %arg7: memref<1x16xf32, #tpu.memory_space<vmem>>, %arg8: memref<4x16x16xf32, #tpu.memory_space<vmem>>, %arg9: memref<16x512xf32, #tpu.memory_space<vmem>>) attributes {dimension_semantics = [#tpu.dimension_semantics<parallel>], iteration_bounds = array<i64: 2>, scalar_prefetch = 0 : i64, scratch_operands = 1 : i64, tpu.core_type = #tpu.core_type<tc>, window_params = [{transform_indices = @transform_0, window_bounds = array<i64: 4, 16, 16>}, {pipeline_mode = #tpu.pipeline_mode<synchronous>, transform_indices = @transform_1, window_bounds = array<i64: 16, 128>}, {pipeline_mode = #tpu.pipeline_mode<synchronous>, transform_indices = @transform_2, window_bounds = array<i64: 128, 16>}, {pipeline_mode = #tpu.pipeline_mode<synchronous>, transform_indices = @transform_3, window_bounds = array<i64: 16, 16>}, {pipeline_mode = #tpu.pipeline_mode<synchronous>, transform_indices = @transform_4, window_bounds = array<i64: 16, 16>}, {pipeline_mode = #tpu.pipeline_mode<synchronous>, transform_indices = @transform_5, window_bounds = array<i64: 8, 128>}, {pipeline_mode = #tpu.pipeline_mode<synchronous>, transform_indices = @transform_6, window_bounds = array<i64: 1, 16>}, {transform_indices = @transform_7, window_bounds = array<i64: 4, 16, 16>}]} {
    %c0 = arith.constant 0 : index
    %c0_0 = arith.constant 0 : index
    %c0_1 = arith.constant 0 : index
    %0 = vector.load %arg1[%c0, %c0_0, %c0_1] : memref<4x16x16xf32, #tpu.memory_space<vmem>>, vector<4x16x16xf32>
    %1 = vector.shape_cast %0 : vector<4x16x16xf32> to vector<64x16xf32>
    %2 = arith.truncf %1 : vector<64x16xf32> to vector<64x16xbf16>
    %c0_2 = arith.constant 0 : index
    %c0_3 = arith.constant 0 : index
    %3 = vector.load %arg2[%c0_2, %c0_3] : memref<16x128xbf16, #tpu.memory_space<vmem>>, vector<16x128xbf16>
    %cst = arith.constant dense<0.000000e+00> : vector<64x128xf32>
    %4 = tpu.matmul %2, %3, %cst {dimension_numbers = #tpu.dot_dimension_numbers<[1], [0], [0], [1], [0, 0, 1, 1], [], []>} : vector<64x16xbf16>, vector<16x128xbf16>, vector<64x128xf32> -> vector<64x128xf32>
    %c4 = arith.constant 4 : index
    %c0_4 = arith.constant 0 : index
    %5 = vector.load %arg6[%c4, %c0_4] : memref<8x128xf32, #tpu.memory_space<vmem>>, vector<1x128xf32>
    %6 = vector.broadcast %5 : vector<1x128xf32> to vector<64x128xf32>
    %7 = arith.addf %4, %6 : vector<64x128xf32>
    %cst_5 = arith.constant 0.000000e+00 : f32
    %8 = vector.broadcast %cst_5 : f32 to vector<64x128xf32>
    %9 = arith.maximumf %7, %8 : vector<64x128xf32>
    %10 = vector.extract_strided_slice %9 {offsets = [0, 0], sizes = [16, 128], strides = [1, 1]} : vector<64x128xf32> to vector<16x128xf32>
    %c0_6 = arith.constant 0 : index
    %c0_7 = arith.constant 0 : index
    %11 = vector.load %arg9[%c0_6, %c0_7] : memref<16x512xf32, #tpu.memory_space<vmem>>, vector<16x128xf32>
    tpu.vector_store %arg9[%c0_6, %c0_7], %10 {strides = array<i32>} : memref<16x512xf32, #tpu.memory_space<vmem>>, vector<16x128xf32>,
    %12 = vector.extract_strided_slice %9 {offsets = [16, 0], sizes = [16, 128], strides = [1, 1]} : vector<64x128xf32> to vector<16x128xf32>
    %c0_8 = arith.constant 0 : index
    %c128 = arith.constant 128 : index
    %13 = vector.load %arg9[%c0_8, %c128] : memref<16x512xf32, #tpu.memory_space<vmem>>, vector<16x128xf32>
    tpu.vector_store %arg9[%c0_8, %c128], %12 {strides = array<i32>} : memref<16x512xf32, #tpu.memory_space<vmem>>, vector<16x128xf32>,
    %14 = vector.extract_strided_slice %9 {offsets = [32, 0], sizes = [16, 128], strides = [1, 1]} : vector<64x128xf32> to vector<16x128xf32>
    %c0_9 = arith.constant 0 : index
    %c256 = arith.constant 256 : index
    %15 = vector.load %arg9[%c0_9, %c256] : memref<16x512xf32, #tpu.memory_space<vmem>>, vector<16x128xf32>
    tpu.vector_store %arg9[%c0_9, %c256], %14 {strides = array<i32>} : memref<16x512xf32, #tpu.memory_space<vmem>>, vector<16x128xf32>,
    %16 = vector.extract_strided_slice %9 {offsets = [48, 0], sizes = [16, 128], strides = [1, 1]} : vector<64x128xf32> to vector<16x128xf32>
    %c0_10 = arith.constant 0 : index
    %c384 = arith.constant 384 : index
    %17 = vector.load %arg9[%c0_10, %c384] : memref<16x512xf32, #tpu.memory_space<vmem>>, vector<16x128xf32>
    tpu.vector_store %arg9[%c0_10, %c384], %16 {strides = array<i32>} : memref<16x512xf32, #tpu.memory_space<vmem>>, vector<16x128xf32>,
    %c0_11 = arith.constant 0 : index
    %c0_12 = arith.constant 0 : index
    %18 = vector.load %arg4[%c0_11, %c0_12] : memref<16x16xf32, #tpu.memory_space<vmem>>, vector<16x16xf32>
    %c0_13 = arith.constant 0 : index
    %c0_14 = arith.constant 0 : index
    %19 = vector.load %arg5[%c0_13, %c0_14] : memref<16x16xf32, #tpu.memory_space<vmem>>, vector<16x16xf32>
    %c0_15 = arith.constant 0 : index
    %c0_16 = arith.constant 0 : index
    %20 = vector.load %arg9[%c0_15, %c0_16] : memref<16x512xf32, #tpu.memory_space<vmem>>, vector<16x512xf32>
    %cst_17 = arith.constant dense<0.000000e+00> : vector<16x512xf32>
    %21 = tpu.matmul %18, %20, %cst_17 {dimension_numbers = #tpu.dot_dimension_numbers<[1], [0], [0], [1], [0, 0, 1, 1], [], []>} : vector<16x16xf32>, vector<16x512xf32>, vector<16x512xf32> -> vector<16x512xf32>
    %cst_18 = arith.constant dense<0.000000e+00> : vector<16x512xf32>
    %22 = tpu.matmul %19, %20, %cst_18 {dimension_numbers = #tpu.dot_dimension_numbers<[1], [0], [0], [1], [0, 0, 1, 1], [], []>} : vector<16x16xf32>, vector<16x512xf32>, vector<16x512xf32> -> vector<16x512xf32>
    %c0_19 = arith.constant 0 : index
    %c0_20 = arith.constant 0 : index
    %23 = vector.load %arg6[%c0_19, %c0_20] : memref<8x128xf32, #tpu.memory_space<vmem>>, vector<8x128xf32>
    %24 = tpu.concatenate %23, %23, %23, %23 in 1 : vector<8x128xf32>, vector<8x128xf32>, vector<8x128xf32>, vector<8x128xf32> -> vector<8x512xf32>
    %25 = vector.extract_strided_slice %24 {offsets = [0, 0], sizes = [1, 512], strides = [1, 1]} : vector<8x512xf32> to vector<1x512xf32>
    %26 = vector.extract_strided_slice %24 {offsets = [1, 0], sizes = [1, 512], strides = [1, 1]} : vector<8x512xf32> to vector<1x512xf32>
    %27 = vector.extract_strided_slice %24 {offsets = [2, 0], sizes = [1, 512], strides = [1, 1]} : vector<8x512xf32> to vector<1x512xf32>
    %28 = vector.extract_strided_slice %24 {offsets = [3, 0], sizes = [1, 512], strides = [1, 1]} : vector<8x512xf32> to vector<1x512xf32>
    %29 = vector.broadcast %25 : vector<1x512xf32> to vector<16x512xf32>
    %30 = arith.mulf %21, %29 : vector<16x512xf32>
    %31 = vector.broadcast %26 : vector<1x512xf32> to vector<16x512xf32>
    %32 = arith.mulf %22, %31 : vector<16x512xf32>
    %33 = arith.subf %30, %32 : vector<16x512xf32>
    %34 = vector.broadcast %27 : vector<1x512xf32> to vector<16x512xf32>
    %35 = arith.addf %33, %34 : vector<16x512xf32>
    %cst_21 = arith.constant 0.000000e+00 : f32
    %36 = vector.broadcast %cst_21 : f32 to vector<16x512xf32>
    %37 = arith.maximumf %35, %36 : vector<16x512xf32>
    %38 = vector.broadcast %25 : vector<1x512xf32> to vector<16x512xf32>
    %39 = arith.mulf %22, %38 : vector<16x512xf32>
    %40 = vector.broadcast %26 : vector<1x512xf32> to vector<16x512xf32>
    %41 = arith.mulf %21, %40 : vector<16x512xf32>
    %42 = arith.addf %39, %41 : vector<16x512xf32>
    %43 = vector.broadcast %28 : vector<1x512xf32> to vector<16x512xf32>
    %44 = arith.addf %42, %43 : vector<16x512xf32>
    %cst_22 = arith.constant 0.000000e+00 : f32
    %45 = vector.broadcast %cst_22 : f32 to vector<16x512xf32>
    %46 = arith.maximumf %44, %45 : vector<16x512xf32>
    %cst_23 = arith.constant dense<0.000000e+00> : vector<16x512xf32>
    %47 = tpu.matmul %18, %37, %cst_23 {dimension_numbers = #tpu.dot_dimension_numbers<[1], [0], [0], [1], [0, 0, 1, 1], [], []>} : vector<16x16xf32>, vector<16x512xf32>, vector<16x512xf32> -> vector<16x512xf32>
    %cst_24 = arith.constant dense<0.000000e+00> : vector<16x512xf32>
    %48 = tpu.matmul %19, %46, %cst_24 {dimension_numbers = #tpu.dot_dimension_numbers<[1], [0], [0], [1], [0, 0, 1, 1], [], []>} : vector<16x16xf32>, vector<16x512xf32>, vector<16x512xf32> -> vector<16x512xf32>
    %49 = arith.addf %47, %48 : vector<16x512xf32>
    %c0_25 = arith.constant 0 : index
    %c0_26 = arith.constant 0 : index
    %50 = vector.load %arg7[%c0_25, %c0_26] : memref<1x16xf32, #tpu.memory_space<vmem>>, vector<1x16xf32>
    %51 = vector.extract_strided_slice %49 {offsets = [0, 0], sizes = [16, 128], strides = [1, 1]} : vector<16x512xf32> to vector<16x128xf32>
    %52 = arith.truncf %51 : vector<16x128xf32> to vector<16x128xbf16>
    %c0_27 = arith.constant 0 : index
    %c0_28 = arith.constant 0 : index
    %53 = vector.load %arg3[%c0_27, %c0_28] : memref<128x16xbf16, #tpu.memory_space<vmem>>, vector<128x16xbf16>
    %cst_29 = arith.constant dense<0.000000e+00> : vector<16x16xf32>
    %54 = tpu.matmul %52, %53, %cst_29 {dimension_numbers = #tpu.dot_dimension_numbers<[1], [0], [0], [1], [0, 0, 1, 1], [], []>} : vector<16x128xbf16>, vector<128x16xbf16>, vector<16x16xf32> -> vector<16x16xf32>
    %55 = vector.broadcast %50 : vector<1x16xf32> to vector<16x16xf32>
    %56 = arith.addf %54, %55 : vector<16x16xf32>
    %c0_30 = arith.constant 0 : index
    %c0_31 = arith.constant 0 : index
    %c0_32 = arith.constant 0 : index
    %57 = vector.load %arg8[%c0_30, %c0_31, %c0_32] : memref<4x16x16xf32, #tpu.memory_space<vmem>>, vector<1x16x16xf32>
    %58 = vector.shape_cast %57 : vector<1x16x16xf32> to vector<16x16xf32>
    %59 = vector.shape_cast %56 : vector<16x16xf32> to vector<1x16x16xf32>
    tpu.vector_store %arg8[%c0_30, %c0_31, %c0_32], %59 {strides = array<i32>} : memref<4x16x16xf32, #tpu.memory_space<vmem>>, vector<1x16x16xf32>,
    %60 = vector.extract_strided_slice %49 {offsets = [0, 128], sizes = [16, 128], strides = [1, 1]} : vector<16x512xf32> to vector<16x128xf32>
    %61 = arith.truncf %60 : vector<16x128xf32> to vector<16x128xbf16>
    %c0_33 = arith.constant 0 : index
    %c0_34 = arith.constant 0 : index
    %62 = vector.load %arg3[%c0_33, %c0_34] : memref<128x16xbf16, #tpu.memory_space<vmem>>, vector<128x16xbf16>
    %cst_35 = arith.constant dense<0.000000e+00> : vector<16x16xf32>
    %63 = tpu.matmul %61, %62, %cst_35 {dimension_numbers = #tpu.dot_dimension_numbers<[1], [0], [0], [1], [0, 0, 1, 1], [], []>} : vector<16x128xbf16>, vector<128x16xbf16>, vector<16x16xf32> -> vector<16x16xf32>
    %64 = vector.broadcast %50 : vector<1x16xf32> to vector<16x16xf32>
    %65 = arith.addf %63, %64 : vector<16x16xf32>
    %c1 = arith.constant 1 : index
    %c0_36 = arith.constant 0 : index
    %c0_37 = arith.constant 0 : index
    %66 = vector.load %arg8[%c1, %c0_36, %c0_37] : memref<4x16x16xf32, #tpu.memory_space<vmem>>, vector<1x16x16xf32>
    %67 = vector.shape_cast %66 : vector<1x16x16xf32> to vector<16x16xf32>
    %68 = vector.shape_cast %65 : vector<16x16xf32> to vector<1x16x16xf32>
    tpu.vector_store %arg8[%c1, %c0_36, %c0_37], %68 {strides = array<i32>} : memref<4x16x16xf32, #tpu.memory_space<vmem>>, vector<1x16x16xf32>,
    %69 = vector.extract_strided_slice %49 {offsets = [0, 256], sizes = [16, 128], strides = [1, 1]} : vector<16x512xf32> to vector<16x128xf32>
    %70 = arith.truncf %69 : vector<16x128xf32> to vector<16x128xbf16>
    %c0_38 = arith.constant 0 : index
    %c0_39 = arith.constant 0 : index
    %71 = vector.load %arg3[%c0_38, %c0_39] : memref<128x16xbf16, #tpu.memory_space<vmem>>, vector<128x16xbf16>
    %cst_40 = arith.constant dense<0.000000e+00> : vector<16x16xf32>
    %72 = tpu.matmul %70, %71, %cst_40 {dimension_numbers = #tpu.dot_dimension_numbers<[1], [0], [0], [1], [0, 0, 1, 1], [], []>} : vector<16x128xbf16>, vector<128x16xbf16>, vector<16x16xf32> -> vector<16x16xf32>
    %73 = vector.broadcast %50 : vector<1x16xf32> to vector<16x16xf32>
    %74 = arith.addf %72, %73 : vector<16x16xf32>
    %c2 = arith.constant 2 : index
    %c0_41 = arith.constant 0 : index
    %c0_42 = arith.constant 0 : index
    %75 = vector.load %arg8[%c2, %c0_41, %c0_42] : memref<4x16x16xf32, #tpu.memory_space<vmem>>, vector<1x16x16xf32>
    %76 = vector.shape_cast %75 : vector<1x16x16xf32> to vector<16x16xf32>
    %77 = vector.shape_cast %74 : vector<16x16xf32> to vector<1x16x16xf32>
    tpu.vector_store %arg8[%c2, %c0_41, %c0_42], %77 {strides = array<i32>} : memref<4x16x16xf32, #tpu.memory_space<vmem>>, vector<1x16x16xf32>,
    %78 = vector.extract_strided_slice %49 {offsets = [0, 384], sizes = [16, 128], strides = [1, 1]} : vector<16x512xf32> to vector<16x128xf32>
    %79 = arith.truncf %78 : vector<16x128xf32> to vector<16x128xbf16>
    %c0_43 = arith.constant 0 : index
    %c0_44 = arith.constant 0 : index
    %80 = vector.load %arg3[%c0_43, %c0_44] : memref<128x16xbf16, #tpu.memory_space<vmem>>, vector<128x16xbf16>
    %cst_45 = arith.constant dense<0.000000e+00> : vector<16x16xf32>
    %81 = tpu.matmul %79, %80, %cst_45 {dimension_numbers = #tpu.dot_dimension_numbers<[1], [0], [0], [1], [0, 0, 1, 1], [], []>} : vector<16x128xbf16>, vector<128x16xbf16>, vector<16x16xf32> -> vector<16x16xf32>
    %82 = vector.broadcast %50 : vector<1x16xf32> to vector<16x16xf32>
    %83 = arith.addf %81, %82 : vector<16x16xf32>
    %c3 = arith.constant 3 : index
    %c0_46 = arith.constant 0 : index
    %c0_47 = arith.constant 0 : index
    %84 = vector.load %arg8[%c3, %c0_46, %c0_47] : memref<4x16x16xf32, #tpu.memory_space<vmem>>, vector<1x16x16xf32>
    %85 = vector.shape_cast %84 : vector<1x16x16xf32> to vector<16x16xf32>
    %86 = vector.shape_cast %83 : vector<16x16xf32> to vector<1x16x16xf32>
    tpu.vector_store %arg8[%c3, %c0_46, %c0_47], %86 {strides = array<i32>} : memref<4x16x16xf32, #tpu.memory_space<vmem>>, vector<1x16x16xf32>,
    return
  }
  func.func @transform_0(%arg0: i32) -> (i32, i32, i32) {
    %c0_i32 = arith.constant 0 : i32
    %c0_i32_0 = arith.constant 0 : i32
    %c0_i32_1 = arith.constant 0 : i32
    return %arg0, %c0_i32, %c0_i32_0 : i32, i32, i32
  }
  func.func @transform_1(%arg0: i32) -> (i32, i32) {
    %c0_i32 = arith.constant 0 : i32
    %c0_i32_0 = arith.constant 0 : i32
    %c0_i32_1 = arith.constant 0 : i32
    return %c0_i32, %c0_i32_0 : i32, i32
  }
  func.func @transform_2(%arg0: i32) -> (i32, i32) {
    %c0_i32 = arith.constant 0 : i32
    %c0_i32_0 = arith.constant 0 : i32
    %c0_i32_1 = arith.constant 0 : i32
    return %c0_i32, %c0_i32_0 : i32, i32
  }
  func.func @transform_3(%arg0: i32) -> (i32, i32) {
    %c0_i32 = arith.constant 0 : i32
    %c0_i32_0 = arith.constant 0 : i32
    %c0_i32_1 = arith.constant 0 : i32
    return %c0_i32, %c0_i32_0 : i32, i32
  }
  func.func @transform_4(%arg0: i32) -> (i32, i32) {
    %c0_i32 = arith.constant 0 : i32
    %c0_i32_0 = arith.constant 0 : i32
    %c0_i32_1 = arith.constant 0 : i32
    return %c0_i32, %c0_i32_0 : i32, i32
  }
  func.func @transform_5(%arg0: i32) -> (i32, i32) {
    %c0_i32 = arith.constant 0 : i32
    %c0_i32_0 = arith.constant 0 : i32
    %c0_i32_1 = arith.constant 0 : i32
    return %c0_i32, %c0_i32_0 : i32, i32
  }
  func.func @transform_6(%arg0: i32) -> (i32, i32) {
    %c0_i32 = arith.constant 0 : i32
    %c0_i32_0 = arith.constant 0 : i32
    %c0_i32_1 = arith.constant 0 : i32
    return %c0_i32, %c0_i32_0 : i32, i32
  }
  func.func @transform_7(%arg0: i32) -> (i32, i32, i32) {
    %c0_i32 = arith.constant 0 : i32
    %c0_i32_0 = arith.constant 0 : i32
    %c0_i32_1 = arith.constant 0 : i32
    return %arg0, %c0_i32, %c0_i32_0 : i32, i32, i32
  }
}

</mosaic_0001>

<llo_original>
// kernel: tpu_custom_call.1
$region0: #{tpu_custom_call.1}
  #allocation0 [shape = 'u32[]', space=smem, size = 0x4, offset = 0x4, fixed_abs, tag = 'smem constant byte address 0x4 - core index']
  #allocation1 [shape = 'u32[144,128]{1,0:T(1,128)}', space=vmem, size = 0x12000, scoped, tag = 'internal scratch']
  #allocation2 [shape = 'f32[16,512]{1,0:T(8,128)}', space=vmem, size = 0x8000, scoped, tag = 'scratch operand']
  %s0 = inlined_call_operand.hbm [shape: f32[8,16,16], index: 0, kind: input, shape index: {}]
  %s1 = inlined_call_operand.vmem [shape: bf16[16,128], index: 1, kind: input, shape index: {}]
  %s2 = inlined_call_operand.vmem [shape: bf16[128,16], index: 2, kind: input, shape index: {}]
  %s3 = inlined_call_operand.vmem [shape: f32[16,16], index: 3, kind: input, shape index: {}]
  %s4 = inlined_call_operand.vmem [shape: f32[16,16], index: 4, kind: input, shape index: {}]
  %s5 = inlined_call_operand.vmem [shape: f32[8,128], index: 5, kind: input, shape index: {}]
  %s6 = inlined_call_operand.vmem [shape: f32[1,16], index: 6, kind: input, shape index: {}]
  %s7 = inlined_call_operand.hbm [shape: f32[8,16,16], index: 7, kind: output, shape index: {}]
  %s8 = sld [smem:[#allocation0]]
  $region65: #{tpu_custom_call.1} parent=0
    _
  %s10 = ssub.s32 1, %s8
  %s11 = scalar_select 0, %s10, %s8
  $region1: #{tpu_custom_call.1} parent=0
    #allocation3 [shape = 'u8[65536]{0}', space=vmem, size = 0x10000, scoped, tag = 'input window, operand 0']
    #allocation4 [shape = 's32[2]{0}', space=sflag, size = 0x8, scoped, tag = 'scoped memory for tpu_custom_call.1']
    #allocation5 [shape = 's32[2]{0}', space=sflag, size = 0x8, scoped, tag = 'scoped memory for tpu_custom_call.1']
    #allocation6 [shape = 'u8[65536]{0}', space=vmem, size = 0x10000, scoped, tag = 'output window, operand 0']
    %12 = vsyncpa [#allocation4], 0
    %s13 = scalar_lea.sflag [#allocation4], 1
    %14 = vsyncpa %s13, 0
    %15 = vsyncpa [#allocation5], 0
    %s16 = scalar_lea.sflag [#allocation5], 1
    %17 = vsyncpa %s16, 0
    loop: start=0, step=1, limit=4
    $region2: #{tpu_custom_call.1} parent=1 // loop_pre_header
      _
    $region3: #{tpu_custom_call.1} parent=1 // loop_header
      %s19 = sphi 0, %s23
      %p20 = scmp.ge.s32.totalorder %s19, 4
      %s29 = sphi 0, %s31
      %s32 = sphi 0, %s29
      %s33 = sphi 0, %s32
      %s49 = sphi 0, %s33
      %s53 = sphi 0, %s53
      %s55 = sphi 0, %s53
      %s56 = sphi 0, %s55
      %s70 = sphi 0, %s56
      %s74 = sphi 0, %s74
      %s76 = sphi 0, %s74
      %s77 = sphi 0, %s76
      %s91 = sphi 0, %s77
      %s95 = sphi 0, %s95
      %s97 = sphi 0, %s95
      %s98 = sphi 0, %s97
      %s112 = sphi 0, %s98
      %s116 = sphi 0, %s116
      %s118 = sphi 0, %s116
      %s119 = sphi 0, %s118
      %s133 = sphi 0, %s119
      %s137 = sphi 0, %s137
      %s139 = sphi 0, %s137
      %s140 = sphi 0, %s139
      %s154 = sphi 0, %s140
      %s158 = sphi 0, %s158
      %s160 = sphi 0, %s158
      %s161 = sphi 0, %s160
      %s175 = sphi 0, %s161
      %s181 = sphi 0, %s183
      %s184 = sphi 0, %s181
      %s185 = sphi 0, %s184
      %s201 = sphi 0, %s185
    $region4: #{tpu_custom_call.1} parent=1 // loop_header_branch
      %22 = sbr.rel (%p20) target = $region8
    $region5: #{tpu_custom_call.1} parent=1 // loop_body
      %s24 = ssub.s32 %s19, 1
      %s25 = ssub.s32 %s19, 2
      %s26 = sadd.s32 %s19, 1
      %s27 = ssub.s32 %s19, %s26
      %p28 = scmp.eq.s32.totalorder %s27, 0
      %s30 = sadd.s32 %s29, 1
      %s31 = scalar_select %p28, %s29, %s30
      %p34 = pneg %p28
      %p35 = scmp.eq.s32.totalorder %s19, 1
      %p36 = por %p34, %p35
      %p37 = scmp.ne.s32.totalorder %s29, %s32
      %p38 = scmp.eq.s32.totalorder %s19, 0
      %p39 = por %p37, %p38
      %p40 = scmp.ne.s32.totalorder %s29, %s32
      %p41 = scmp.eq.s32.totalorder %s24, 1
      %p42 = por %p40, %p41
      %p43 = scmp.ne.s32.totalorder %s32, %s33
      %p44 = scmp.eq.s32.totalorder %s24, 0
      %p45 = por %p43, %p44
      %p46 = scmp.ne.s32.totalorder %s32, %s33
      %p47 = scmp.eq.s32.totalorder %s25, 1
      %p48 = por %p46, %p47
      %p50 = scmp.ne.s32.totalorder %s33, %s49
      %p51 = scmp.eq.s32.totalorder %s25, 0
      %p52 = por %p50, %p51
      %s54 = sadd.s32 %s53, 1
      %p57 = scmp.eq.s32.totalorder %s19, 1
      %p58 = scmp.ne.s32.totalorder %s53, %s55
      %p59 = scmp.eq.s32.totalorder %s19, 0
      %p60 = por %p58, %p59
      %p61 = scmp.ne.s32.totalorder %s53, %s55
      %p62 = scmp.eq.s32.totalorder %s24, 1
      %p63 = por %p61, %p62
      %p64 = scmp.ne.s32.totalorder %s55, %s56
      %p65 = scmp.eq.s32.totalorder %s24, 0
      %p66 = por %p64, %p65
      %p67 = scmp.ne.s32.totalorder %s55, %s56
      %p68 = scmp.eq.s32.totalorder %s25, 1
      %p69 = por %p67, %p68
      %p71 = scmp.ne.s32.totalorder %s56, %s70
      %p72 = scmp.eq.s32.totalorder %s25, 0
      %p73 = por %p71, %p72
      %s75 = sadd.s32 %s74, 1
      %p78 = scmp.eq.s32.totalorder %s19, 1
      %p79 = scmp.ne.s32.totalorder %s74, %s76
      %p80 = scmp.eq.s32.totalorder %s19, 0
      %p81 = por %p79, %p80
      %p82 = scmp.ne.s32.totalorder %s74, %s76
      %p83 = scmp.eq.s32.totalorder %s24, 1
      %p84 = por %p82, %p83
      %p85 = scmp.ne.s32.totalorder %s76, %s77
      %p86 = scmp.eq.s32.totalorder %s24, 0
      %p87 = por %p85, %p86
      %p88 = scmp.ne.s32.totalorder %s76, %s77
      %p89 = scmp.eq.s32.totalorder %s25, 1
      %p90 = por %p88, %p89
      %p92 = scmp.ne.s32.totalorder %s77, %s91
      %p93 = scmp.eq.s32.totalorder %s25, 0
      %p94 = por %p92, %p93
      %s96 = sadd.s32 %s95, 1
      %p99 = scmp.eq.s32.totalorder %s19, 1
      %p100 = scmp.ne.s32.totalorder %s95, %s97
      %p101 = scmp.eq.s32.totalorder %s19, 0
      %p102 = por %p100, %p101
      %p103 = scmp.ne.s32.totalorder %s95, %s97
      %p104 = scmp.eq.s32.totalorder %s24, 1
      %p105 = por %p103, %p104
      %p106 = scmp.ne.s32.totalorder %s97, %s98
      %p107 = scmp.eq.s32.totalorder %s24, 0
      %p108 = por %p106, %p107
      %p109 = scmp.ne.s32.totalorder %s97, %s98
      %p110 = scmp.eq.s32.totalorder %s25, 1
      %p111 = por %p109, %p110
      %p113 = scmp.ne.s32.totalorder %s98, %s112
      %p114 = scmp.eq.s32.totalorder %s25, 0
      %p115 = por %p113, %p114
      %s117 = sadd.s32 %s116, 1
      %p120 = scmp.eq.s32.totalorder %s19, 1
      %p121 = scmp.ne.s32.totalorder %s116, %s118
      %p122 = scmp.eq.s32.totalorder %s19, 0
      %p123 = por %p121, %p122
      %p124 = scmp.ne.s32.totalorder %s116, %s118
      %p125 = scmp.eq.s32.totalorder %s24, 1
      %p126 = por %p124, %p125
      %p127 = scmp.ne.s32.totalorder %s118, %s119
      %p128 = scmp.eq.s32.totalorder %s24, 0
      %p129 = por %p127, %p128
      %p130 = scmp.ne.s32.totalorder %s118, %s119
      %p131 = scmp.eq.s32.totalorder %s25, 1
      %p132 = por %p130, %p131
      %p134 = scmp.ne.s32.totalorder %s119, %s133
      %p135 = scmp.eq.s32.totalorder %s25, 0
      %p136 = por %p134, %p135
      %s138 = sadd.s32 %s137, 1
      %p141 = scmp.eq.s32.totalorder %s19, 1
      %p142 = scmp.ne.s32.totalorder %s137, %s139
      %p143 = scmp.eq.s32.totalorder %s19, 0
      %p144 = por %p142, %p143
      %p145 = scmp.ne.s32.totalorder %s137, %s139
      %p146 = scmp.eq.s32.totalorder %s24, 1
      %p147 = por %p145, %p146
      %p148 = scmp.ne.s32.totalorder %s139, %s140
      %p149 = scmp.eq.s32.totalorder %s24, 0
      %p150 = por %p148, %p149
      %p151 = scmp.ne.s32.totalorder %s139, %s140
      %p152 = scmp.eq.s32.totalorder %s25, 1
      %p153 = por %p151, %p152
      %p155 = scmp.ne.s32.totalorder %s140, %s154
      %p156 = scmp.eq.s32.totalorder %s25, 0
      %p157 = por %p155, %p156
      %s159 = sadd.s32 %s158, 1
      %p162 = scmp.eq.s32.totalorder %s19, 1
      %p163 = scmp.ne.s32.totalorder %s158, %s160
      %p164 = scmp.eq.s32.totalorder %s19, 0
      %p165 = por %p163, %p164
      %p166 = scmp.ne.s32.totalorder %s158, %s160
      %p167 = scmp.eq.s32.totalorder %s24, 1
      %p168 = por %p166, %p167
      %p169 = scmp.ne.s32.totalorder %s160, %s161
      %p170 = scmp.eq.s32.totalorder %s24, 0
      %p171 = por %p169, %p170
      %p172 = scmp.ne.s32.totalorder %s160, %s161
      %p173 = scmp.eq.s32.totalorder %s25, 1
      %p174 = por %p172, %p173
      %p176 = scmp.ne.s32.totalorder %s161, %s175
      %p177 = scmp.eq.s32.totalorder %s25, 0
      %p178 = por %p176, %p177
      %s179 = ssub.s32 %s19, %s26
      %p180 = scmp.eq.s32.totalorder %s179, 0
      %s182 = sadd.s32 %s181, 1
      %s183 = scalar_select %p180, %s181, %s182
      %p186 = pneg %p180
      %p187 = scmp.eq.s32.totalorder %s19, 1
      %p188 = por %p186, %p187
      %p189 = scmp.ne.s32.totalorder %s181, %s184
      %p190 = scmp.eq.s32.totalorder %s19, 0
      %p191 = por %p189, %p190
      %p192 = scmp.ne.s32.totalorder %s181, %s184
      %p193 = scmp.eq.s32.totalorder %s24, 1
      %p194 = por %p192, %p193
      %p195 = scmp.ne.s32.totalorder %s184, %s185
      %p196 = scmp.eq.s32.totalorder %s24, 0
      %p197 = por %p195, %p196
      %p198 = scmp.ne.s32.totalorder %s184, %s185
      %p199 = scmp.eq.s32.totalorder %s25, 1
      %p200 = por %p198, %p199
      %p202 = scmp.ne.s32.totalorder %s185, %s201
      %p203 = scmp.eq.s32.totalorder %s25, 0
      %p204 = por %p202, %p203
      %p205 = scmp.le.s32.totalorder 1, %s19
      %p206 = scmp.lt.s32.totalorder %s19, 3
      %p207 = pnand %p205, %p206
      %p208 = pneg %p207
      // Predicated region
      $region9: #{tpu_custom_call.1} parent=5 // pred_check
        _
      $region10: #{tpu_custom_call.1} parent=5 // pred_check_branch
        %210 = sbr.rel (%p207) target = $region12
      $region11: #{tpu_custom_call.1} parent=5 // pred_region
        %s211 = ssub.s32 %s19, 1
        // Predicated region
        $region13: #{tpu_custom_call.1} parent=11 // pred_check
          %p212 = pneg %p66
        $region14: #{tpu_custom_call.1} parent=11 // pred_check_branch
          %214 = sbr.rel (%p212) target = $region16
        $region15: #{tpu_custom_call.1} parent=11 // pred_region
          _
        $region16: #{tpu_custom_call.1} parent=11 // pred_fallthru
          _
        // Predicated region
        $region17: #{tpu_custom_call.1} parent=11 // pred_check
          %p215 = pneg %p87
        $region18: #{tpu_custom_call.1} parent=11 // pred_check_branch
          %217 = sbr.rel (%p215) target = $region20
        $region19: #{tpu_custom_call.1} parent=11 // pred_region
          _
        $region20: #{tpu_custom_call.1} parent=11 // pred_fallthru
          _
        // Predicated region
        $region21: #{tpu_custom_call.1} parent=11 // pred_check
          %p218 = pneg %p108
        $region22: #{tpu_custom_call.1} parent=11 // pred_check_branch
          %220 = sbr.rel (%p218) target = $region24
        $region23: #{tpu_custom_call.1} parent=11 // pred_region
          _
        $region24: #{tpu_custom_call.1} parent=11 // pred_fallthru
          _
        // Predicated region
        $region25: #{tpu_custom_call.1} parent=11 // pred_check
          %p221 = pneg %p129
        $region26: #{tpu_custom_call.1} parent=11 // pred_check_branch
          %223 = sbr.rel (%p221) target = $region28
        $region27: #{tpu_custom_call.1} parent=11 // pred_region
          _
        $region28: #{tpu_custom_call.1} parent=11 // pred_fallthru
          _
        // Predicated region
        $region29: #{tpu_custom_call.1} parent=11 // pred_check
          %p224 = pneg %p150
        $region30: #{tpu_custom_call.1} parent=11 // pred_check_branch
          %226 = sbr.rel (%p224) target = $region32
        $region31: #{tpu_custom_call.1} parent=11 // pred_region
          _
        $region32: #{tpu_custom_call.1} parent=11 // pred_fallthru
          _
        // Predicated region
        $region33: #{tpu_custom_call.1} parent=11 // pred_check
          %p227 = pneg %p171
        $region34: #{tpu_custom_call.1} parent=11 // pred_check_branch
          %229 = sbr.rel (%p227) target = $region36
        $region35: #{tpu_custom_call.1} parent=11 // pred_region
          _
        $region36: #{tpu_custom_call.1} parent=11 // pred_fallthru
          _
      $region12: #{tpu_custom_call.1} parent=5 // pred_fallthru
        _
      %p230 = scmp.lt.s32.totalorder %s19, 2
      // Predicated region
      $region37: #{tpu_custom_call.1} parent=5 // pred_check
        %p231 = pneg %p230
      $region38: #{tpu_custom_call.1} parent=5 // pred_check_branch
        %233 = sbr.rel (%p231) target = $region40
      $region39: #{tpu_custom_call.1} parent=5 // pred_region
        // Predicated region
        $region41: #{tpu_custom_call.1} parent=39 // pred_check
          %p234 = pneg %p39
        $region42: #{tpu_custom_call.1} parent=39 // pred_check_branch
          %236 = sbr.rel (%p234) target = $region44
        $region43: #{tpu_custom_call.1} parent=39 // pred_region
          %s237 = sand.u32 %s29, 1
          %s238 = scalar_lea.sflag [#allocation4], %s237
          %s239 = sand.u32 %s29, 1
          %s240 = smul.addr %s239, 64
          %s241 = scalar_lea.vmem [#allocation3], %s240
          %s242 = smul.u32 4, %s19
          %s244 = ssub.s32 1024, 1024
          %245 = vsyncadd %s238, %s244
          %s246 = smul.addr %s242, 2
          %s247 = smul.addr %s246, 128
          %s248 = scalar_lea.hbm %s0, %s247
          %s249 = sshll.u32 %s241, 4
          %s250 = int_to_ptr.vmem [resolvable:$true] %s249
          %255 = dma.hbm_to_vmem [thread:$0]  %s248, 1024, %s250, %s238, 128, 128, 8
        $region44: #{tpu_custom_call.1} parent=39 // pred_fallthru
          _
      $region40: #{tpu_custom_call.1} parent=5 // pred_fallthru
        _
      %p256 = scmp.le.s32.totalorder 1, %s19
      %p257 = scmp.lt.s32.totalorder %s19, 3
      %p258 = pnand %p256, %p257
      %p259 = pneg %p258
      // Predicated region
      $region45: #{tpu_custom_call.1} parent=5 // pred_check
        _
      $region46: #{tpu_custom_call.1} parent=5 // pred_check_branch
        %261 = sbr.rel (%p258) target = $region48
      $region47: #{tpu_custom_call.1} parent=5 // pred_region
        %s262 = ssub.s32 %s19, 1
        %s263 = sand.u32 %s32, 1
        %s264 = scalar_lea.sflag [#allocation4], %s263
        %s265 = sand.u32 %s32, 1
        %s266 = smul.addr %s265, 64
        %s267 = scalar_lea.vmem [#allocation3], %s266
        // Predicated region
        $region49: #{tpu_custom_call.1} parent=47 // pred_check
          %p268 = pneg %p45
        $region50: #{tpu_custom_call.1} parent=47 // pred_check_branch
          %270 = sbr.rel (%p268) target = $region52
        $region51: #{tpu_custom_call.1} parent=47 // pred_region
          %271 = dma.done %s264, 1024
        $region52: #{tpu_custom_call.1} parent=47 // pred_fallthru
          _
        %s272 = sand.u32 %s32, 1
        %s273 = scalar_lea.sflag [#allocation4], %s272
        %s274 = sand.u32 %s32, 1
        %s275 = smul.addr %s274, 64
        %s276 = scalar_lea.vmem [#allocation3], %s275
        %p277 = pneg %p45
        %p278 = pneg %p42
        %p279 = pneg %p66
        %p280 = pneg %p63
        %p281 = pneg %p87
        %p282 = pneg %p84
        %p283 = pneg %p108
        %p284 = pneg %p105
        %p285 = pneg %p129
        %p286 = pneg %p126
        %p287 = pneg %p150
        %p288 = pneg %p147
        %p289 = pneg %p171
        %p290 = pneg %p168
        %p291 = pneg %p197
        %p292 = pneg %p194
        %s293 = sand.u32 %s184, 1
        %s294 = scalar_lea.sflag [#allocation5], %s293
        %s295 = sand.u32 %s184, 1
        %s296 = smul.addr %s295, 64
        %s297 = scalar_lea.vmem [#allocation6], %s296
        %s298 = smul.u32 4, %s24
        %s299 = smul.u32 4, %s24
        %v301 = vld [vmem:[%s267] sm:$0xff]
        %v302 = vld [vmem:[%s267 + $0x8] sm:$0xff]
        %v303 = vld [vmem:[%s267 + $0x10] sm:$0xff]
        %v304 = vld [vmem:[%s267 + $0x18] sm:$0xff]
        %v305 = vld [vmem:[%s267 + $0x20] sm:$0xff]
        %v306 = vld [vmem:[%s267 + $0x28] sm:$0xff]
        %v307 = vld [vmem:[%s267 + $0x30] sm:$0xff]
        %v308 = vld [vmem:[%s267 + $0x38] sm:$0xff]
        %v309 = vpack.c.bf16 %v302, %v301
        %v310 = vpack.c.bf16 %v304, %v303
        %v311 = vpack.c.bf16 %v306, %v305
        %v312 = vpack.c.bf16 %v308, %v307
        %v313 = vld [vmem:[%s1] sm:$0xf]
        %v314 = vld [vmem:[%s1 + $0x4] sm:$0xf]
        %v315 = vld [vmem:[%s5 + $0x4] sm:$0x1]
        %v316 = vlaneseq
        %v317 = vshrl.u32 %v316, 7
        %v318 = vsub.s32 0, %v317
        %v319 = vrot.slane %v315, %v318
        %v322 = vunpack.c.l.b16 %v313
        %v323 = vunpack.c.l.b16 %v314
        %v324 = vpack.c.b16 %v323, %v322
        %vm326 = vcmask 130048
        %v328 = vsel %vm326, %v309, 0
        %v331 = vsel %vm326, %v310, 0
        %v334 = vsel %vm326, %v311, 0
        %v337 = vsel %vm326, %v312, 0
        %339 = vmatprep.subr.bf16.mxu0 0
        %340 = vmatpush1.bf16.msra.mxu0 0
        %341 = vmatprep.subr.bf16.mxu0 0
        %342 = vmatpush1.bf16.msra.mxu0 0
        %343 = vmatprep.subr.bf16.mxu0 0
        %344 = vmatpush1.bf16.msra.mxu0 0
        %345 = vmatprep.subr.bf16.mxu0 0
        %346 = vmatpush1.bf16.msra.mxu0 0
        %347 = vmatprep.subr.bf16.mxu0 0
        %348 = vmatpush1.bf16.msra.mxu0 0
        %349 = vmatprep.subr.bf16.mxu0 0
        %350 = vmatpush1.bf16.msra.mxu0 0
        %351 = vmatprep.subr.bf16.mxu0 0
        %352 = vmatpush1.bf16.msra.mxu0 0
        %353 = vmatprep.subr.bf16.mxu0 0
        %354 = vmatpush1.bf16.msra.mxu0 %v324
        %355 = vmatprep.subr.bf16.mxu0 0
        %356 = vmatpush2.bf16.msra.mxu0 0
        %357 = vmatprep.subr.bf16.mxu0 0
        %358 = vmatpush2.bf16.msra.mxu0 0
        %359 = vmatprep.subr.bf16.mxu0 0
        %360 = vmatpush2.bf16.msra.mxu0 0
        %361 = vmatprep.subr.bf16.mxu0 0
        %362 = vmatpush2.bf16.msra.mxu0 0
        %363 = vmatprep.subr.bf16.mxu0 0
        %364 = vmatpush2.bf16.msra.mxu0 0
        %365 = vmatprep.subr.bf16.mxu0 0
        %366 = vmatpush2.bf16.msra.mxu0 0
        %367 = vmatprep.subr.bf16.mxu0 0
        %368 = vmatpush2.bf16.msra.mxu0 0
        %369 = vmatprep.subr.bf16.mxu0 0
        %370 = vmatpush2.bf16.msra.mxu0 0
        %371 = vmatprep.mubr.bf16.mxu0 0
        %372 = vmatmul.mubr.bf16.gmra.mxu0 %v328
        %v373 = vpop.f32.mrf.mxu0
        %v374 = vadd.f32 %v319, %v373
        %v375 = vpop.f32.mrf.mxu0
        %v376 = vpop.f32.mrf.mxu0
        %v377 = vadd.f32 %v319, %v376
        %v378 = vpop.f32.mrf.mxu0
        %379 = vmatprep.mubr.bf16.mxu0 0
        %380 = vmatmul.mubr.bf16.gmra.mxu0 %v331
        %v381 = vpop.f32.mrf.mxu0
        %v382 = vadd.f32 %v319, %v381
        %v383 = vpop.f32.mrf.mxu0
        %v384 = vpop.f32.mrf.mxu0
        %v385 = vadd.f32 %v319, %v384
        %v386 = vpop.f32.mrf.mxu0
        %387 = vmatprep.mubr.bf16.mxu0 0
        %388 = vmatmul.mubr.bf16.gmra.mxu0 %v334
        %v389 = vpop.f32.mrf.mxu0
        %v390 = vadd.f32 %v319, %v389
        %v391 = vpop.f32.mrf.mxu0
        %v392 = vpop.f32.mrf.mxu0
        %v393 = vadd.f32 %v319, %v392
        %v394 = vpop.f32.mrf.mxu0
        %395 = vmatprep.mubr.bf16.mxu0 0
        %396 = vmatmul.mubr.bf16.gmra.mxu0 %v337
        %v397 = vpop.f32.mrf.mxu0
        %v398 = vadd.f32 %v319, %v397
        %v399 = vpop.f32.mrf.mxu0
        %v400 = vpop.f32.mrf.mxu0
        %v401 = vadd.f32 %v319, %v400
        %v402 = vpop.f32.mrf.mxu0
        %403 = vdwg.mxu0
        %v404 = vmax.f32 %v374, 0.0
        %v405 = vmax.f32 %v377, 0.0
        %v406 = vmax.f32 %v382, 0.0
        %v407 = vmax.f32 %v385, 0.0
        %v408 = vmax.f32 %v390, 0.0
        %v409 = vmax.f32 %v393, 0.0
        %v410 = vmax.f32 %v398, 0.0
        %v411 = vmax.f32 %v401, 0.0
        %412 = vst [vmem:[#allocation2] sm:$0xff] %v404
        %413 = vst [vmem:[#allocation2 + $0x20] sm:$0xff] %v405
        %414 = vst [vmem:[#allocation2 + $0x8] sm:$0xff] %v406
        %415 = vst [vmem:[#allocation2 + $0x28] sm:$0xff] %v407
        %416 = vst [vmem:[#allocation2 + $0x10] sm:$0xff] %v408
        %417 = vst [vmem:[#allocation2 + $0x30] sm:$0xff] %v409
        %418 = vst [vmem:[#allocation2 + $0x18] sm:$0xff] %v410
        %419 = vst [vmem:[#allocation2 + $0x38] sm:$0xff] %v411
        %v420 = vld [vmem:[%s3] sm:$0xff]
        %v421 = vld [vmem:[%s3 + $0x8] sm:$0xff]
        %v422 = vld [vmem:[%s4] sm:$0xff]
        %v423 = vld [vmem:[%s4 + $0x8] sm:$0xff]
        %v424 = vld [vmem:[#allocation2] sm:$0xff]
        %v425 = vld [vmem:[#allocation2 + $0x8] sm:$0xff]
        %v426 = vld [vmem:[#allocation2 + $0x10] sm:$0xff]
        %v427 = vld [vmem:[#allocation2 + $0x18] sm:$0xff]
        %v428 = vld [vmem:[#allocation2 + $0x20] sm:$0xff]
        %v429 = vld [vmem:[#allocation2 + $0x28] sm:$0xff]
        %v430 = vld [vmem:[#allocation2 + $0x30] sm:$0xff]
        %v431 = vld [vmem:[#allocation2 + $0x38] sm:$0xff]
        %v433 = vsel %vm326, %v420, 0
        %v436 = vsel %vm326, %v421, 0
        %438 = vmatprep.subr.mxu0 0.0
        %439 = vmatpush1.msra.mxu0 0.0
        %440 = vmatprep.subr.mxu0 0.0
        %441 = vmatpush1.msra.mxu0 0.0
        %442 = vmatprep.subr.mxu0 0.0
        %443 = vmatpush1.msra.mxu0 0.0
        %444 = vmatprep.subr.mxu0 0.0
        %445 = vmatpush1.msra.mxu0 0.0
        %446 = vmatprep.subr.mxu0 0.0
        %447 = vmatpush1.msra.mxu0 0.0
        %448 = vmatprep.subr.mxu0 0.0
        %449 = vmatpush1.msra.mxu0 0.0
        %450 = vmatprep.subr.mxu0 0.0
        %451 = vmatpush1.msra.mxu0 0.0
        %452 = vmatprep.subr.mxu0 0.0
        %453 = vmatpush1.msra.mxu0 0.0
        %454 = vmatprep.subr.mxu0 0.0
        %455 = vmatpush1.msra.mxu0 0.0
        %456 = vmatprep.subr.mxu0 0.0
        %457 = vmatpush1.msra.mxu0 0.0
        %458 = vmatprep.subr.mxu0 0.0
        %459 = vmatpush1.msra.mxu0 0.0
        %460 = vmatprep.subr.mxu0 0.0
        %461 = vmatpush1.msra.mxu0 0.0
        %462 = vmatprep.subr.mxu0 0.0
        %463 = vmatpush1.msra.mxu0 0.0
        %464 = vmatprep.subr.mxu0 0.0
        %465 = vmatpush1.msra.mxu0 0.0
        %466 = vmatprep.subr.mxu0 %v429
        %467 = vmatpush1.msra.mxu0 %v428
        %468 = vmatprep.subr.mxu0 %v425
        %469 = vmatpush1.msra.mxu0 %v424
        %470 = vmatprep.subr.mxu0 0.0
        %471 = vmatpush2.msra.mxu0 0.0
        %472 = vmatprep.subr.mxu0 0.0
        %473 = vmatpush2.msra.mxu0 0.0
        %474 = vmatprep.subr.mxu0 0.0
        %475 = vmatpush2.msra.mxu0 0.0
        %476 = vmatprep.subr.mxu0 0.0
        %477 = vmatpush2.msra.mxu0 0.0
        %478 = vmatprep.subr.mxu0 0.0
        %479 = vmatpush2.msra.mxu0 0.0
        %480 = vmatprep.subr.mxu0 0.0
        %481 = vmatpush2.msra.mxu0 0.0
        %482 = vmatprep.subr.mxu0 0.0
        %483 = vmatpush2.msra.mxu0 0.0
        %484 = vmatprep.subr.mxu0 0.0
        %485 = vmatpush2.msra.mxu0 0.0
        %486 = vmatprep.subr.mxu0 0.0
        %487 = vmatpush2.msra.mxu0 0.0
        %488 = vmatprep.subr.mxu0 0.0
        %489 = vmatpush2.msra.mxu0 0.0
        %490 = vmatprep.subr.mxu0 0.0
        %491 = vmatpush2.msra.mxu0 0.0
        %492 = vmatprep.subr.mxu0 0.0
        %493 = vmatpush2.msra.mxu0 0.0
        %494 = vmatprep.subr.mxu0 0.0
        %495 = vmatpush2.msra.mxu0 0.0
        %496 = vmatprep.subr.mxu0 0.0
        %497 = vmatpush2.msra.mxu0 0.0
        %498 = vmatprep.subr.mxu0 0.0
        %499 = vmatpush2.msra.mxu0 0.0
        %500 = vmatprep.subr.mxu0 0.0
        %501 = vmatpush2.msra.mxu0 0.0
        %502 = vmatprep.mubr.f32.mxu0 0.0
        %503 = vmatmul.mubr.f32.gmra.mxu0 %v433
        %v504 = vpop.f32.mrf.mxu0
        %v505 = vadd.f32 0.0, %v504
        %v506 = vpop.f32.mrf.mxu0
        %v507 = vadd.f32 0.0, %v506
        %508 = vmatprep.mubr.f32.mxu0 0.0
        %509 = vmatmul.mubr.f32.gmra.mxu0 %v436
        %v510 = vpop.f32.mrf.mxu0
        %v511 = vadd.f32 0.0, %v510
        %v512 = vpop.f32.mrf.mxu0
        %v513 = vadd.f32 0.0, %v512
        %514 = vdwg.mxu0
        %515 = vmatprep.subr.mxu0 0.0
        %516 = vmatpush1.msra.mxu0 0.0
        %517 = vmatprep.subr.mxu0 0.0
        %518 = vmatpush1.msra.mxu0 0.0
        %519 = vmatprep.subr.mxu0 0.0
        %520 = vmatpush1.msra.mxu0 0.0
        %521 = vmatprep.subr.mxu0 0.0
        %522 = vmatpush1.msra.mxu0 0.0
        %523 = vmatprep.subr.mxu0 0.0
        %524 = vmatpush1.msra.mxu0 0.0
        %525 = vmatprep.subr.mxu0 0.0
        %526 = vmatpush1.msra.mxu0 0.0
        %527 = vmatprep.subr.mxu0 0.0
        %528 = vmatpush1.msra.mxu0 0.0
        %529 = vmatprep.subr.mxu0 0.0
        %530 = vmatpush1.msra.mxu0 0.0
        %531 = vmatprep.subr.mxu0 0.0
        %532 = vmatpush1.msra.mxu0 0.0
        %533 = vmatprep.subr.mxu0 0.0
        %534 = vmatpush1.msra.mxu0 0.0
        %535 = vmatprep.subr.mxu0 0.0
        %536 = vmatpush1.msra.mxu0 0.0
        %537 = vmatprep.subr.mxu0 0.0
        %538 = vmatpush1.msra.mxu0 0.0
        %539 = vmatprep.subr.mxu0 0.0
        %540 = vmatpush1.msra.mxu0 0.0
        %541 = vmatprep.subr.mxu0 0.0
        %542 = vmatpush1.msra.mxu0 0.0
        %543 = vmatprep.subr.mxu0 %v431
        %544 = vmatpush1.msra.mxu0 %v430
        %545 = vmatprep.subr.mxu0 %v427
        %546 = vmatpush1.msra.mxu0 %v426
        %547 = vmatprep.subr.mxu0 0.0
        %548 = vmatpush2.msra.mxu0 0.0
        %549 = vmatprep.subr.mxu0 0.0
        %550 = vmatpush2.msra.mxu0 0.0
        %551 = vmatprep.subr.mxu0 0.0
        %552 = vmatpush2.msra.mxu0 0.0
        %553 = vmatprep.subr.mxu0 0.0
        %554 = vmatpush2.msra.mxu0 0.0
        %555 = vmatprep.subr.mxu0 0.0
        %556 = vmatpush2.msra.mxu0 0.0
        %557 = vmatprep.subr.mxu0 0.0
        %558 = vmatpush2.msra.mxu0 0.0
        %559 = vmatprep.subr.mxu0 0.0
        %560 = vmatpush2.msra.mxu0 0.0
        %561 = vmatprep.subr.mxu0 0.0
        %562 = vmatpush2.msra.mxu0 0.0
        %563 = vmatprep.subr.mxu0 0.0
        %564 = vmatpush2.msra.mxu0 0.0
        %565 = vmatprep.subr.mxu0 0.0
        %566 = vmatpush2.msra.mxu0 0.0
        %567 = vmatprep.subr.mxu0 0.0
        %568 = vmatpush2.msra.mxu0 0.0
        %569 = vmatprep.subr.mxu0 0.0
        %570 = vmatpush2.msra.mxu0 0.0
        %571 = vmatprep.subr.mxu0 0.0
        %572 = vmatpush2.msra.mxu0 0.0
        %573 = vmatprep.subr.mxu0 0.0
        %574 = vmatpush2.msra.mxu0 0.0
        %575 = vmatprep.subr.mxu0 0.0
        %576 = vmatpush2.msra.mxu0 0.0
        %577 = vmatprep.subr.mxu0 0.0
        %578 = vmatpush2.msra.mxu0 0.0
        %579 = vmatprep.mubr.f32.mxu0 0.0
        %580 = vmatmul.mubr.f32.gmra.mxu0 %v433
        %v581 = vpop.f32.mrf.mxu0
        %v582 = vadd.f32 0.0, %v581
        %v583 = vpop.f32.mrf.mxu0
        %v584 = vadd.f32 0.0, %v583
        %585 = vmatprep.mubr.f32.mxu0 0.0
        %586 = vmatmul.mubr.f32.gmra.mxu0 %v436
        %v587 = vpop.f32.mrf.mxu0
        %v588 = vadd.f32 0.0, %v587
        %v589 = vpop.f32.mrf.mxu0
        %v590 = vadd.f32 0.0, %v589
        %591 = vdwg.mxu0
        %v593 = vsel %vm326, %v422, 0
        %v596 = vsel %vm326, %v423, 0
        %598 = vmatprep.subr.mxu0 0.0
        %599 = vmatpush1.msra.mxu0 0.0
        %600 = vmatprep.subr.mxu0 0.0
        %601 = vmatpush1.msra.mxu0 0.0
        %602 = vmatprep.subr.mxu0 0.0
        %603 = vmatpush1.msra.mxu0 0.0
        %604 = vmatprep.subr.mxu0 0.0
        %605 = vmatpush1.msra.mxu0 0.0
        %606 = vmatprep.subr.mxu0 0.0
        %607 = vmatpush1.msra.mxu0 0.0
        %608 = vmatprep.subr.mxu0 0.0
        %609 = vmatpush1.msra.mxu0 0.0
        %610 = vmatprep.subr.mxu0 0.0
        %611 = vmatpush1.msra.mxu0 0.0
        %612 = vmatprep.subr.mxu0 0.0
        %613 = vmatpush1.msra.mxu0 0.0
        %614 = vmatprep.subr.mxu0 0.0
        %615 = vmatpush1.msra.mxu0 0.0
        %616 = vmatprep.subr.mxu0 0.0
        %617 = vmatpush1.msra.mxu0 0.0
        %618 = vmatprep.subr.mxu0 0.0
        %619 = vmatpush1.msra.mxu0 0.0
        %620 = vmatprep.subr.mxu0 0.0
        %621 = vmatpush1.msra.mxu0 0.0
        %622 = vmatprep.subr.mxu0 0.0
        %623 = vmatpush1.msra.mxu0 0.0
        %624 = vmatprep.subr.mxu0 0.0
        %625 = vmatpush1.msra.mxu0 0.0
        %626 = vmatprep.subr.mxu0 %v429
        %627 = vmatpush1.msra.mxu0 %v428
        %628 = vmatprep.subr.mxu0 %v425
        %629 = vmatpush1.msra.mxu0 %v424
        %630 = vmatprep.subr.mxu0 0.0
        %631 = vmatpush2.msra.mxu0 0.0
        %632 = vmatprep.subr.mxu0 0.0
        %633 = vmatpush2.msra.mxu0 0.0
        %634 = vmatprep.subr.mxu0 0.0
        %635 = vmatpush2.msra.mxu0 0.0
        %636 = vmatprep.subr.mxu0 0.0
        %637 = vmatpush2.msra.mxu0 0.0
        %638 = vmatprep.subr.mxu0 0.0
        %639 = vmatpush2.msra.mxu0 0.0
        %640 = vmatprep.subr.mxu0 0.0
        %641 = vmatpush2.msra.mxu0 0.0
        %642 = vmatprep.subr.mxu0 0.0
        %643 = vmatpush2.msra.mxu0 0.0
        %644 = vmatprep.subr.mxu0 0.0
        %645 = vmatpush2.msra.mxu0 0.0
        %646 = vmatprep.subr.mxu0 0.0
        %647 = vmatpush2.msra.mxu0 0.0
        %648 = vmatprep.subr.mxu0 0.0
        %649 = vmatpush2.msra.mxu0 0.0
        %650 = vmatprep.subr.mxu0 0.0
        %651 = vmatpush2.msra.mxu0 0.0
        %652 = vmatprep.subr.mxu0 0.0
        %653 = vmatpush2.msra.mxu0 0.0
        %654 = vmatprep.subr.mxu0 0.0
        %655 = vmatpush2.msra.mxu0 0.0
        %656 = vmatprep.subr.mxu0 0.0
        %657 = vmatpush2.msra.mxu0 0.0
        %658 = vmatprep.subr.mxu0 0.0
        %659 = vmatpush2.msra.mxu0 0.0
        %660 = vmatprep.subr.mxu0 0.0
        %661 = vmatpush2.msra.mxu0 0.0
        %662 = vmatprep.mubr.f32.mxu0 0.0
        %663 = vmatmul.mubr.f32.gmra.mxu0 %v593
        %v664 = vpop.f32.mrf.mxu0
        %v665 = vadd.f32 0.0, %v664
        %v666 = vpop.f32.mrf.mxu0
        %v667 = vadd.f32 0.0, %v666
        %668 = vmatprep.mubr.f32.mxu0 0.0
        %669 = vmatmul.mubr.f32.gmra.mxu0 %v596
        %v670 = vpop.f32.mrf.mxu0
        %v671 = vadd.f32 0.0, %v670
        %v672 = vpop.f32.mrf.mxu0
        %v673 = vadd.f32 0.0, %v672
        %674 = vdwg.mxu0
        %675 = vmatprep.subr.mxu0 0.0
        %676 = vmatpush1.msra.mxu0 0.0
        %677 = vmatprep.subr.mxu0 0.0
        %678 = vmatpush1.msra.mxu0 0.0
        %679 = vmatprep.subr.mxu0 0.0
        %680 = vmatpush1.msra.mxu0 0.0
        %681 = vmatprep.subr.mxu0 0.0
        %682 = vmatpush1.msra.mxu0 0.0
        %683 = vmatprep.subr.mxu0 0.0
        %684 = vmatpush1.msra.mxu0 0.0
        %685 = vmatprep.subr.mxu0 0.0
        %686 = vmatpush1.msra.mxu0 0.0
        %687 = vmatprep.subr.mxu0 0.0
        %688 = vmatpush1.msra.mxu0 0.0
        %689 = vmatprep.subr.mxu0 0.0
        %690 = vmatpush1.msra.mxu0 0.0
        %691 = vmatprep.subr.mxu0 0.0
        %692 = vmatpush1.msra.mxu0 0.0
        %693 = vmatprep.subr.mxu0 0.0
        %694 = vmatpush1.msra.mxu0 0.0
        %695 = vmatprep.subr.mxu0 0.0
        %696 = vmatpush1.msra.mxu0 0.0
        %697 = vmatprep.subr.mxu0 0.0
        %698 = vmatpush1.msra.mxu0 0.0
        %699 = vmatprep.subr.mxu0 0.0
        %700 = vmatpush1.msra.mxu0 0.0
        %701 = vmatprep.subr.mxu0 0.0
        %702 = vmatpush1.msra.mxu0 0.0
        %703 = vmatprep.subr.mxu0 %v431
        %704 = vmatpush1.msra.mxu0 %v430
        %705 = vmatprep.subr.mxu0 %v427
        %706 = vmatpush1.msra.mxu0 %v426
        %707 = vmatprep.subr.mxu0 0.0
        %708 = vmatpush2.msra.mxu0 0.0
        %709 = vmatprep.subr.mxu0 0.0
        %710 = vmatpush2.msra.mxu0 0.0
        %711 = vmatprep.subr.mxu0 0.0
        %712 = vmatpush2.msra.mxu0 0.0
        %713 = vmatprep.subr.mxu0 0.0
        %714 = vmatpush2.msra.mxu0 0.0
        %715 = vmatprep.subr.mxu0 0.0
        %716 = vmatpush2.msra.mxu0 0.0
        %717 = vmatprep.subr.mxu0 0.0
        %718 = vmatpush2.msra.mxu0 0.0
        %719 = vmatprep.subr.mxu0 0.0
        %720 = vmatpush2.msra.mxu0 0.0
        %721 = vmatprep.subr.mxu0 0.0
        %722 = vmatpush2.msra.mxu0 0.0
        %723 = vmatprep.subr.mxu0 0.0
        %724 = vmatpush2.msra.mxu0 0.0
        %725 = vmatprep.subr.mxu0 0.0
        %726 = vmatpush2.msra.mxu0 0.0
        %727 = vmatprep.subr.mxu0 0.0
        %728 = vmatpush2.msra.mxu0 0.0
        %729 = vmatprep.subr.mxu0 0.0
        %730 = vmatpush2.msra.mxu0 0.0
        %731 = vmatprep.subr.mxu0 0.0
        %732 = vmatpush2.msra.mxu0 0.0
        %733 = vmatprep.subr.mxu0 0.0
        %734 = vmatpush2.msra.mxu0 0.0
        %735 = vmatprep.subr.mxu0 0.0
        %736 = vmatpush2.msra.mxu0 0.0
        %737 = vmatprep.subr.mxu0 0.0
        %738 = vmatpush2.msra.mxu0 0.0
        %739 = vmatprep.mubr.f32.mxu0 0.0
        %740 = vmatmul.mubr.f32.gmra.mxu0 %v593
        %v741 = vpop.f32.mrf.mxu0
        %v742 = vadd.f32 0.0, %v741
        %v743 = vpop.f32.mrf.mxu0
        %v744 = vadd.f32 0.0, %v743
        %745 = vmatprep.mubr.f32.mxu0 0.0
        %746 = vmatmul.mubr.f32.gmra.mxu0 %v596
        %v747 = vpop.f32.mrf.mxu0
        %v748 = vadd.f32 0.0, %v747
        %v749 = vpop.f32.mrf.mxu0
        %v750 = vadd.f32 0.0, %v749
        %751 = vdwg.mxu0
        %v752 = vld [vmem:[%s5] sm:$0xff]
        %v753 = vlaneseq
        %v754 = vshrl.u32 %v753, 7
        %v755 = vsub.s32 0, %v754
        %v756 = vrot.slane %v752, %v755
        %v757 = vmul.f32 %v505, %v756
        %v758 = vmul.f32 %v507, %v756
        %v759 = vmul.f32 %v582, %v756
        %v760 = vmul.f32 %v584, %v756
        %v761 = vmul.f32 %v511, %v756
        %v762 = vmul.f32 %v513, %v756
        %v763 = vmul.f32 %v588, %v756
        %v764 = vmul.f32 %v590, %v756
        %v765 = vlaneseq
        %v766 = vshrl.u32 %v765, 7
        %v767 = vsub.s32 1, %v766
        %v768 = vrot.slane %v752, %v767
        %v769 = vmul.f32 %v665, %v768
        %v770 = vmul.f32 %v667, %v768
        %v771 = vmul.f32 %v742, %v768
        %v772 = vmul.f32 %v744, %v768
        %v773 = vmul.f32 %v671, %v768
        %v774 = vmul.f32 %v673, %v768
        %v775 = vmul.f32 %v748, %v768
        %v776 = vmul.f32 %v750, %v768
        %v777 = vsub.f32 %v757, %v769
        %v778 = vsub.f32 %v758, %v770
        %v779 = vsub.f32 %v759, %v771
        %v780 = vsub.f32 %v760, %v772
        %v781 = vsub.f32 %v761, %v773
        %v782 = vsub.f32 %v762, %v774
        %v783 = vsub.f32 %v763, %v775
        %v784 = vsub.f32 %v764, %v776
        %v785 = vlaneseq
        %v786 = vshrl.u32 %v785, 7
        %v787 = vsub.s32 2, %v786
        %v788 = vrot.slane %v752, %v787
        %v789 = vadd.f32 %v777, %v788
        %v790 = vadd.f32 %v778, %v788
        %v791 = vadd.f32 %v779, %v788
        %v792 = vadd.f32 %v780, %v788
        %v793 = vadd.f32 %v781, %v788
        %v794 = vadd.f32 %v782, %v788
        %v795 = vadd.f32 %v783, %v788
        %v796 = vadd.f32 %v784, %v788
        %v797 = vmax.f32 %v789, 0.0
        %v798 = vmax.f32 %v790, 0.0
        %v799 = vmax.f32 %v791, 0.0
        %v800 = vmax.f32 %v792, 0.0
        %v801 = vmax.f32 %v793, 0.0
        %v802 = vmax.f32 %v794, 0.0
        %v803 = vmax.f32 %v795, 0.0
        %v804 = vmax.f32 %v796, 0.0
        %v805 = vmul.f32 %v665, %v756
        %v806 = vmul.f32 %v667, %v756
        %v807 = vmul.f32 %v742, %v756
        %v808 = vmul.f32 %v744, %v756
        %v809 = vmul.f32 %v671, %v756
        %v810 = vmul.f32 %v673, %v756
        %v811 = vmul.f32 %v748, %v756
        %v812 = vmul.f32 %v750, %v756
        %v813 = vmul.f32 %v505, %v768
        %v814 = vmul.f32 %v507, %v768
        %v815 = vmul.f32 %v582, %v768
        %v816 = vmul.f32 %v584, %v768
        %v817 = vmul.f32 %v511, %v768
        %v818 = vmul.f32 %v513, %v768
        %v819 = vmul.f32 %v588, %v768
        %v820 = vmul.f32 %v590, %v768
        %v821 = vadd.f32 %v805, %v813
        %v822 = vadd.f32 %v806, %v814
        %v823 = vadd.f32 %v807, %v815
        %v824 = vadd.f32 %v808, %v816
        %v825 = vadd.f32 %v809, %v817
        %v826 = vadd.f32 %v810, %v818
        %v827 = vadd.f32 %v811, %v819
        %v828 = vadd.f32 %v812, %v820
        %v829 = vlaneseq
        %v830 = vshrl.u32 %v829, 7
        %v831 = vsub.s32 3, %v830
        %v832 = vrot.slane %v752, %v831
        %v833 = vadd.f32 %v821, %v832
        %v834 = vadd.f32 %v822, %v832
        %v835 = vadd.f32 %v823, %v832
        %v836 = vadd.f32 %v824, %v832
        %v837 = vadd.f32 %v825, %v832
        %v838 = vadd.f32 %v826, %v832
        %v839 = vadd.f32 %v827, %v832
        %v840 = vadd.f32 %v828, %v832
        %v841 = vmax.f32 %v833, 0.0
        %v842 = vmax.f32 %v834, 0.0
        %v843 = vmax.f32 %v835, 0.0
        %v844 = vmax.f32 %v836, 0.0
        %v845 = vmax.f32 %v837, 0.0
        %v846 = vmax.f32 %v838, 0.0
        %v847 = vmax.f32 %v839, 0.0
        %v848 = vmax.f32 %v840, 0.0
        %849 = vmatprep.subr.mxu0 0.0
        %850 = vmatpush1.msra.mxu0 0.0
        %851 = vmatprep.subr.mxu0 0.0
        %852 = vmatpush1.msra.mxu0 0.0
        %853 = vmatprep.subr.mxu0 0.0
        %854 = vmatpush1.msra.mxu0 0.0
        %855 = vmatprep.subr.mxu0 0.0
        %856 = vmatpush1.msra.mxu0 0.0
        %857 = vmatprep.subr.mxu0 0.0
        %858 = vmatpush1.msra.mxu0 0.0
        %859 = vmatprep.subr.mxu0 0.0
        %860 = vmatpush1.msra.mxu0 0.0
        %861 = vmatprep.subr.mxu0 0.0
        %862 = vmatpush1.msra.mxu0 0.0
        %863 = vmatprep.subr.mxu0 0.0
        %864 = vmatpush1.msra.mxu0 0.0
        %865 = vmatprep.subr.mxu0 0.0
        %866 = vmatpush1.msra.mxu0 0.0
        %867 = vmatprep.subr.mxu0 0.0
        %868 = vmatpush1.msra.mxu0 0.0
        %869 = vmatprep.subr.mxu0 0.0
        %870 = vmatpush1.msra.mxu0 0.0
        %871 = vmatprep.subr.mxu0 0.0
        %872 = vmatpush1.msra.mxu0 0.0
        %873 = vmatprep.subr.mxu0 0.0
        %874 = vmatpush1.msra.mxu0 0.0
        %875 = vmatprep.subr.mxu0 0.0
        %876 = vmatpush1.msra.mxu0 0.0
        %877 = vmatprep.subr.mxu0 %v846
        %878 = vmatpush1.msra.mxu0 %v845
        %879 = vmatprep.subr.mxu0 %v842
        %880 = vmatpush1.msra.mxu0 %v841
        %881 = vmatprep.subr.mxu0 0.0
        %882 = vmatpush2.msra.mxu0 0.0
        %883 = vmatprep.subr.mxu0 0.0
        %884 = vmatpush2.msra.mxu0 0.0
        %885 = vmatprep.subr.mxu0 0.0
        %886 = vmatpush2.msra.mxu0 0.0
        %887 = vmatprep.subr.mxu0 0.0
        %888 = vmatpush2.msra.mxu0 0.0
        %889 = vmatprep.subr.mxu0 0.0
        %890 = vmatpush2.msra.mxu0 0.0
        %891 = vmatprep.subr.mxu0 0.0
        %892 = vmatpush2.msra.mxu0 0.0
        %893 = vmatprep.subr.mxu0 0.0
        %894 = vmatpush2.msra.mxu0 0.0
        %895 = vmatprep.subr.mxu0 0.0
        %896 = vmatpush2.msra.mxu0 0.0
        %897 = vmatprep.subr.mxu0 0.0
        %898 = vmatpush2.msra.mxu0 0.0
        %899 = vmatprep.subr.mxu0 0.0
        %900 = vmatpush2.msra.mxu0 0.0
        %901 = vmatprep.subr.mxu0 0.0
        %902 = vmatpush2.msra.mxu0 0.0
        %903 = vmatprep.subr.mxu0 0.0
        %904 = vmatpush2.msra.mxu0 0.0
        %905 = vmatprep.subr.mxu0 0.0
        %906 = vmatpush2.msra.mxu0 0.0
        %907 = vmatprep.subr.mxu0 0.0
        %908 = vmatpush2.msra.mxu0 0.0
        %909 = vmatprep.subr.mxu0 0.0
        %910 = vmatpush2.msra.mxu0 0.0
        %911 = vmatprep.subr.mxu0 0.0
        %912 = vmatpush2.msra.mxu0 0.0
        %913 = vmatprep.mubr.f32.mxu0 0.0
        %914 = vmatmul.mubr.f32.gmra.mxu0 %v593
        %v915 = vpop.f32.mrf.mxu0
        %v916 = vadd.f32 0.0, %v915
        %v917 = vpop.f32.mrf.mxu0
        %v918 = vadd.f32 0.0, %v917
        %919 = vmatprep.mubr.f32.mxu0 0.0
        %920 = vmatmul.mubr.f32.gmra.mxu0 %v596
        %v921 = vpop.f32.mrf.mxu0
        %v922 = vadd.f32 0.0, %v921
        %v923 = vpop.f32.mrf.mxu0
        %v924 = vadd.f32 0.0, %v923
        %925 = vdwg.mxu0
        %926 = vmatprep.subr.mxu0 0.0
        %927 = vmatpush1.msra.mxu0 0.0
        %928 = vmatprep.subr.mxu0 0.0
        %929 = vmatpush1.msra.mxu0 0.0
        %930 = vmatprep.subr.mxu0 0.0
        %931 = vmatpush1.msra.mxu0 0.0
        %932 = vmatprep.subr.mxu0 0.0
        %933 = vmatpush1.msra.mxu0 0.0
        %934 = vmatprep.subr.mxu0 0.0
        %935 = vmatpush1.msra.mxu0 0.0
        %936 = vmatprep.subr.mxu0 0.0
        %937 = vmatpush1.msra.mxu0 0.0
        %938 = vmatprep.subr.mxu0 0.0
        %939 = vmatpush1.msra.mxu0 0.0
        %940 = vmatprep.subr.mxu0 0.0
        %941 = vmatpush1.msra.mxu0 0.0
        %942 = vmatprep.subr.mxu0 0.0
        %943 = vmatpush1.msra.mxu0 0.0
        %944 = vmatprep.subr.mxu0 0.0
        %945 = vmatpush1.msra.mxu0 0.0
        %946 = vmatprep.subr.mxu0 0.0
        %947 = vmatpush1.msra.mxu0 0.0
        %948 = vmatprep.subr.mxu0 0.0
        %949 = vmatpush1.msra.mxu0 0.0
        %950 = vmatprep.subr.mxu0 0.0
        %951 = vmatpush1.msra.mxu0 0.0
        %952 = vmatprep.subr.mxu0 0.0
        %953 = vmatpush1.msra.mxu0 0.0
        %954 = vmatprep.subr.mxu0 %v848
        %955 = vmatpush1.msra.mxu0 %v847
        %956 = vmatprep.subr.mxu0 %v844
        %957 = vmatpush1.msra.mxu0 %v843
        %958 = vmatprep.subr.mxu0 0.0
        %959 = vmatpush2.msra.mxu0 0.0
        %960 = vmatprep.subr.mxu0 0.0
        %961 = vmatpush2.msra.mxu0 0.0
        %962 = vmatprep.subr.mxu0 0.0
        %963 = vmatpush2.msra.mxu0 0.0
        %964 = vmatprep.subr.mxu0 0.0
        %965 = vmatpush2.msra.mxu0 0.0
        %966 = vmatprep.subr.mxu0 0.0
        %967 = vmatpush2.msra.mxu0 0.0
        %968 = vmatprep.subr.mxu0 0.0
        %969 = vmatpush2.msra.mxu0 0.0
        %970 = vmatprep.subr.mxu0 0.0
        %971 = vmatpush2.msra.mxu0 0.0
        %972 = vmatprep.subr.mxu0 0.0
        %973 = vmatpush2.msra.mxu0 0.0
        %974 = vmatprep.subr.mxu0 0.0
        %975 = vmatpush2.msra.mxu0 0.0
        %976 = vmatprep.subr.mxu0 0.0
        %977 = vmatpush2.msra.mxu0 0.0
        %978 = vmatprep.subr.mxu0 0.0
        %979 = vmatpush2.msra.mxu0 0.0
        %980 = vmatprep.subr.mxu0 0.0
        %981 = vmatpush2.msra.mxu0 0.0
        %982 = vmatprep.subr.mxu0 0.0
        %983 = vmatpush2.msra.mxu0 0.0
        %984 = vmatprep.subr.mxu0 0.0
        %985 = vmatpush2.msra.mxu0 0.0
        %986 = vmatprep.subr.mxu0 0.0
        %987 = vmatpush2.msra.mxu0 0.0
        %988 = vmatprep.subr.mxu0 0.0
        %989 = vmatpush2.msra.mxu0 0.0
        %990 = vmatprep.mubr.f32.mxu0 0.0
        %991 = vmatmul.mubr.f32.gmra.mxu0 %v593
        %v992 = vpop.f32.mrf.mxu0
        %v993 = vadd.f32 0.0, %v992
        %v994 = vpop.f32.mrf.mxu0
        %v995 = vadd.f32 0.0, %v994
        %996 = vmatprep.mubr.f32.mxu0 0.0
        %997 = vmatmul.mubr.f32.gmra.mxu0 %v596
        %v998 = vpop.f32.mrf.mxu0
        %v999 = vadd.f32 0.0, %v998
        %v1000 = vpop.f32.mrf.mxu0
        %v1001 = vadd.f32 0.0, %v1000
        %1002 = vdwg.mxu0
        %1003 = vmatprep.subr.mxu0 0.0
        %1004 = vmatpush1.msra.mxu0 0.0
        %1005 = vmatprep.subr.mxu0 0.0
        %1006 = vmatpush1.msra.mxu0 0.0
        %1007 = vmatprep.subr.mxu0 0.0
        %1008 = vmatpush1.msra.mxu0 0.0
        %1009 = vmatprep.subr.mxu0 0.0
        %1010 = vmatpush1.msra.mxu0 0.0
        %1011 = vmatprep.subr.mxu0 0.0
        %1012 = vmatpush1.msra.mxu0 0.0
        %1013 = vmatprep.subr.mxu0 0.0
        %1014 = vmatpush1.msra.mxu0 0.0
        %1015 = vmatprep.subr.mxu0 0.0
        %1016 = vmatpush1.msra.mxu0 0.0
        %1017 = vmatprep.subr.mxu0 0.0
        %1018 = vmatpush1.msra.mxu0 0.0
        %1019 = vmatprep.subr.mxu0 0.0
        %1020 = vmatpush1.msra.mxu0 0.0
        %1021 = vmatprep.subr.mxu0 0.0
        %1022 = vmatpush1.msra.mxu0 0.0
        %1023 = vmatprep.subr.mxu0 0.0
        %1024 = vmatpush1.msra.mxu0 0.0
        %1025 = vmatprep.subr.mxu0 0.0
        %1026 = vmatpush1.msra.mxu0 0.0
        %1027 = vmatprep.subr.mxu0 0.0
        %1028 = vmatpush1.msra.mxu0 0.0
        %1029 = vmatprep.subr.mxu0 0.0
        %1030 = vmatpush1.msra.mxu0 0.0
        %1031 = vmatprep.subr.mxu0 %v802
        %1032 = vmatpush1.msra.mxu0 %v801
        %1033 = vmatprep.subr.mxu0 %v798
        %1034 = vmatpush1.msra.mxu0 %v797
        %1035 = vmatprep.subr.mxu0 0.0
        %1036 = vmatpush2.msra.mxu0 0.0
        %1037 = vmatprep.subr.mxu0 0.0
        %1038 = vmatpush2.msra.mxu0 0.0
        %1039 = vmatprep.subr.mxu0 0.0
        %1040 = vmatpush2.msra.mxu0 0.0
        %1041 = vmatprep.subr.mxu0 0.0
        %1042 = vmatpush2.msra.mxu0 0.0
        %1043 = vmatprep.subr.mxu0 0.0
        %1044 = vmatpush2.msra.mxu0 0.0
        %1045 = vmatprep.subr.mxu0 0.0
        %1046 = vmatpush2.msra.mxu0 0.0
        %1047 = vmatprep.subr.mxu0 0.0
        %1048 = vmatpush2.msra.mxu0 0.0
        %1049 = vmatprep.subr.mxu0 0.0
        %1050 = vmatpush2.msra.mxu0 0.0
        %1051 = vmatprep.subr.mxu0 0.0
        %1052 = vmatpush2.msra.mxu0 0.0
        %1053 = vmatprep.subr.mxu0 0.0
        %1054 = vmatpush2.msra.mxu0 0.0
        %1055 = vmatprep.subr.mxu0 0.0
        %1056 = vmatpush2.msra.mxu0 0.0
        %1057 = vmatprep.subr.mxu0 0.0
        %1058 = vmatpush2.msra.mxu0 0.0
        %1059 = vmatprep.subr.mxu0 0.0
        %1060 = vmatpush2.msra.mxu0 0.0
        %1061 = vmatprep.subr.mxu0 0.0
        %1062 = vmatpush2.msra.mxu0 0.0
        %1063 = vmatprep.subr.mxu0 0.0
        %1064 = vmatpush2.msra.mxu0 0.0
        %1065 = vmatprep.subr.mxu0 0.0
        %1066 = vmatpush2.msra.mxu0 0.0
        %1067 = vmatprep.mubr.f32.mxu0 0.0
        %1068 = vmatmul.mubr.f32.gmra.mxu0 %v433
        %v1069 = vpop.f32.mrf.mxu0
        %v1070 = vadd.f32 %v916, %v1069
        %v1071 = vpop.f32.mrf.mxu0
        %v1072 = vadd.f32 %v918, %v1071
        %1073 = vmatprep.mubr.f32.mxu0 0.0
        %1074 = vmatmul.mubr.f32.gmra.mxu0 %v436
        %v1075 = vpop.f32.mrf.mxu0
        %v1076 = vadd.f32 %v922, %v1075
        %v1077 = vpop.f32.mrf.mxu0
        %v1078 = vadd.f32 %v924, %v1077
        %1079 = vdwg.mxu0
        %1080 = vmatprep.subr.mxu0 0.0
        %1081 = vmatpush1.msra.mxu0 0.0
        %1082 = vmatprep.subr.mxu0 0.0
        %1083 = vmatpush1.msra.mxu0 0.0
        %1084 = vmatprep.subr.mxu0 0.0
        %1085 = vmatpush1.msra.mxu0 0.0
        %1086 = vmatprep.subr.mxu0 0.0
        %1087 = vmatpush1.msra.mxu0 0.0
        %1088 = vmatprep.subr.mxu0 0.0
        %1089 = vmatpush1.msra.mxu0 0.0
        %1090 = vmatprep.subr.mxu0 0.0
        %1091 = vmatpush1.msra.mxu0 0.0
        %1092 = vmatprep.subr.mxu0 0.0
        %1093 = vmatpush1.msra.mxu0 0.0
        %1094 = vmatprep.subr.mxu0 0.0
        %1095 = vmatpush1.msra.mxu0 0.0
        %1096 = vmatprep.subr.mxu0 0.0
        %1097 = vmatpush1.msra.mxu0 0.0
        %1098 = vmatprep.subr.mxu0 0.0
        %1099 = vmatpush1.msra.mxu0 0.0
        %1100 = vmatprep.subr.mxu0 0.0
        %1101 = vmatpush1.msra.mxu0 0.0
        %1102 = vmatprep.subr.mxu0 0.0
        %1103 = vmatpush1.msra.mxu0 0.0
        %1104 = vmatprep.subr.mxu0 0.0
        %1105 = vmatpush1.msra.mxu0 0.0
        %1106 = vmatprep.subr.mxu0 0.0
        %1107 = vmatpush1.msra.mxu0 0.0
        %1108 = vmatprep.subr.mxu0 %v804
        %1109 = vmatpush1.msra.mxu0 %v803
        %1110 = vmatprep.subr.mxu0 %v800
        %1111 = vmatpush1.msra.mxu0 %v799
        %1112 = vmatprep.subr.mxu0 0.0
        %1113 = vmatpush2.msra.mxu0 0.0
        %1114 = vmatprep.subr.mxu0 0.0
        %1115 = vmatpush2.msra.mxu0 0.0
        %1116 = vmatprep.subr.mxu0 0.0
        %1117 = vmatpush2.msra.mxu0 0.0
        %1118 = vmatprep.subr.mxu0 0.0
        %1119 = vmatpush2.msra.mxu0 0.0
        %1120 = vmatprep.subr.mxu0 0.0
        %1121 = vmatpush2.msra.mxu0 0.0
        %1122 = vmatprep.subr.mxu0 0.0
        %1123 = vmatpush2.msra.mxu0 0.0
        %1124 = vmatprep.subr.mxu0 0.0
        %1125 = vmatpush2.msra.mxu0 0.0
        %1126 = vmatprep.subr.mxu0 0.0
        %1127 = vmatpush2.msra.mxu0 0.0
        %1128 = vmatprep.subr.mxu0 0.0
        %1129 = vmatpush2.msra.mxu0 0.0
        %1130 = vmatprep.subr.mxu0 0.0
        %1131 = vmatpush2.msra.mxu0 0.0
        %1132 = vmatprep.subr.mxu0 0.0
        %1133 = vmatpush2.msra.mxu0 0.0
        %1134 = vmatprep.subr.mxu0 0.0
        %1135 = vmatpush2.msra.mxu0 0.0
        %1136 = vmatprep.subr.mxu0 0.0
        %1137 = vmatpush2.msra.mxu0 0.0
        %1138 = vmatprep.subr.mxu0 0.0
        %1139 = vmatpush2.msra.mxu0 0.0
        %1140 = vmatprep.subr.mxu0 0.0
        %1141 = vmatpush2.msra.mxu0 0.0
        %1142 = vmatprep.subr.mxu0 0.0
        %1143 = vmatpush2.msra.mxu0 0.0
        %1144 = vmatprep.mubr.f32.mxu0 0.0
        %1145 = vmatmul.mubr.f32.gmra.mxu0 %v433
        %v1146 = vpop.f32.mrf.mxu0
        %v1147 = vadd.f32 %v993, %v1146
        %v1148 = vpop.f32.mrf.mxu0
        %v1149 = vadd.f32 %v995, %v1148
        %1150 = vmatprep.mubr.f32.mxu0 0.0
        %1151 = vmatmul.mubr.f32.gmra.mxu0 %v436
        %v1152 = vpop.f32.mrf.mxu0
        %v1153 = vadd.f32 %v999, %v1152
        %v1154 = vpop.f32.mrf.mxu0
        %v1155 = vadd.f32 %v1001, %v1154
        %1156 = vdwg.mxu0
        %v1157 = vld [vmem:[%s6] sm:$0x1]
        %v1158 = vpack.c.bf16 %v1076, %v1070
        %v1159 = vld [vmem:[%s2] sm:$0xf]
        %v1160 = vld [vmem:[%s2 + $0x4] sm:$0xf]
        %v1161 = vld [vmem:[%s2 + $0x8] sm:$0xf]
        %v1162 = vld [vmem:[%s2 + $0xc] sm:$0xf]
        %v1163 = vld [vmem:[%s2 + $0x10] sm:$0xf]
        %v1164 = vld [vmem:[%s2 + $0x14] sm:$0xf]
        %v1165 = vld [vmem:[%s2 + $0x18] sm:$0xf]
        %v1166 = vld [vmem:[%s2 + $0x1c] sm:$0xf]
        %v1167 = vld [vmem:[%s2 + $0x20] sm:$0xf]
        %v1168 = vld [vmem:[%s2 + $0x24] sm:$0xf]
        %v1169 = vld [vmem:[%s2 + $0x28] sm:$0xf]
        %v1170 = vld [vmem:[%s2 + $0x2c] sm:$0xf]
        %v1171 = vld [vmem:[%s2 + $0x30] sm:$0xf]
        %v1172 = vld [vmem:[%s2 + $0x34] sm:$0xf]
        %v1173 = vld [vmem:[%s2 + $0x38] sm:$0xf]
        %v1174 = vld [vmem:[%s2 + $0x3c] sm:$0xf]
        %v1176 = vlaneseq
        %v1177 = vshrl.u32 %v1176, 7
        %v1178 = vsub.s32 0, %v1177
        %v1179 = vrot.slane %v1157, %v1178
        %v1197 = vunpack.c.l.b16 %v1159
        %v1198 = vunpack.c.l.b16 %v1160
        %v1199 = vunpack.c.l.b16 %v1161
        %v1200 = vunpack.c.l.b16 %v1162
        %v1201 = vunpack.c.l.b16 %v1163
        %v1202 = vunpack.c.l.b16 %v1164
        %v1203 = vunpack.c.l.b16 %v1165
        %v1204 = vunpack.c.l.b16 %v1166
        %v1205 = vunpack.c.l.b16 %v1167
        %v1206 = vunpack.c.l.b16 %v1168
        %v1207 = vunpack.c.l.b16 %v1169
        %v1208 = vunpack.c.l.b16 %v1170
        %v1209 = vunpack.c.l.b16 %v1171
        %v1210 = vunpack.c.l.b16 %v1172
        %v1211 = vunpack.c.l.b16 %v1173
        %v1212 = vunpack.c.l.b16 %v1174
        %v1213 = vpack.c.b16 %v1198, %v1197
        %v1214 = vpack.c.b16 %v1200, %v1199
        %v1215 = vpack.c.b16 %v1202, %v1201
        %v1216 = vpack.c.b16 %v1204, %v1203
        %v1217 = vpack.c.b16 %v1206, %v1205
        %v1218 = vpack.c.b16 %v1208, %v1207
        %v1219 = vpack.c.b16 %v1210, %v1209
        %v1220 = vpack.c.b16 %v1212, %v1211
        %1229 = vmatprep.subr.bf16.mxu0 0
        %1230 = vmatpush1.bf16.msra.mxu0 %v1220
        %1231 = vmatprep.subr.bf16.mxu0 0
        %1232 = vmatpush1.bf16.msra.mxu0 %v1219
        %1233 = vmatprep.subr.bf16.mxu0 0
        %1234 = vmatpush1.bf16.msra.mxu0 %v1218
        %1235 = vmatprep.subr.bf16.mxu0 0
        %1236 = vmatpush1.bf16.msra.mxu0 %v1217
        %1237 = vmatprep.subr.bf16.mxu0 0
        %1238 = vmatpush1.bf16.msra.mxu0 %v1216
        %1239 = vmatprep.subr.bf16.mxu0 0
        %1240 = vmatpush1.bf16.msra.mxu0 %v1215
        %1241 = vmatprep.subr.bf16.mxu0 0
        %1242 = vmatpush1.bf16.msra.mxu0 %v1214
        %1243 = vmatprep.subr.bf16.mxu0 0
        %1244 = vmatpush1.bf16.msra.mxu0 %v1213
        %1245 = vmatprep.subr.bf16.mxu0 0
        %1246 = vmatpush2.bf16.msra.mxu0 0
        %1247 = vmatprep.subr.bf16.mxu0 0
        %1248 = vmatpush2.bf16.msra.mxu0 0
        %1249 = vmatprep.subr.bf16.mxu0 0
        %1250 = vmatpush2.bf16.msra.mxu0 0
        %1251 = vmatprep.subr.bf16.mxu0 0
        %1252 = vmatpush2.bf16.msra.mxu0 0
        %1253 = vmatprep.subr.bf16.mxu0 0
        %1254 = vmatpush2.bf16.msra.mxu0 0
        %1255 = vmatprep.subr.bf16.mxu0 0
        %1256 = vmatpush2.bf16.msra.mxu0 0
        %1257 = vmatprep.subr.bf16.mxu0 0
        %1258 = vmatpush2.bf16.msra.mxu0 0
        %1259 = vmatprep.subr.bf16.mxu0 0
        %1260 = vmatpush2.bf16.msra.mxu0 0
        %1261 = vmatprep.mubr.bf16.mxu0 0
        %1262 = vmatmul.mubr.bf16.gmra.mxu0 %v1158
        %v1263 = vpop.f32.mrf.mxu0
        %v1264 = vadd.f32 %v1179, %v1263
        %v1265 = vpop.f32.mrf.mxu0
        %v1266 = vpop.f32.mrf.mxu0
        %v1267 = vadd.f32 %v1179, %v1266
        %v1268 = vpop.f32.mrf.mxu0
        %1269 = vdwg.mxu0
        %1270 = vst.msk [vmem:[%s297] sm:$0xff] %vm326, %v1264
        %1271 = vst.msk [vmem:[%s297 + $0x8] sm:$0xff] %vm326, %v1267
        %v1272 = vpack.c.bf16 %v1078, %v1072
        %v1273 = vld [vmem:[%s2] sm:$0xf]
        %v1274 = vld [vmem:[%s2 + $0x4] sm:$0xf]
        %v1275 = vld [vmem:[%s2 + $0x8] sm:$0xf]
        %v1276 = vld [vmem:[%s2 + $0xc] sm:$0xf]
        %v1277 = vld [vmem:[%s2 + $0x10] sm:$0xf]
        %v1278 = vld [vmem:[%s2 + $0x14] sm:$0xf]
        %v1279 = vld [vmem:[%s2 + $0x18] sm:$0xf]
        %v1280 = vld [vmem:[%s2 + $0x1c] sm:$0xf]
        %v1281 = vld [vmem:[%s2 + $0x20] sm:$0xf]
        %v1282 = vld [vmem:[%s2 + $0x24] sm:$0xf]
        %v1283 = vld [vmem:[%s2 + $0x28] sm:$0xf]
        %v1284 = vld [vmem:[%s2 + $0x2c] sm:$0xf]
        %v1285 = vld [vmem:[%s2 + $0x30] sm:$0xf]
        %v1286 = vld [vmem:[%s2 + $0x34] sm:$0xf]
        %v1287 = vld [vmem:[%s2 + $0x38] sm:$0xf]
        %v1288 = vld [vmem:[%s2 + $0x3c] sm:$0xf]
        %v1305 = vunpack.c.l.b16 %v1273
        %v1306 = vunpack.c.l.b16 %v1274
        %v1307 = vunpack.c.l.b16 %v1275
        %v1308 = vunpack.c.l.b16 %v1276
        %v1309 = vunpack.c.l.b16 %v1277
        %v1310 = vunpack.c.l.b16 %v1278
        %v1311 = vunpack.c.l.b16 %v1279
        %v1312 = vunpack.c.l.b16 %v1280
        %v1313 = vunpack.c.l.b16 %v1281
        %v1314 = vunpack.c.l.b16 %v1282
        %v1315 = vunpack.c.l.b16 %v1283
        %v1316 = vunpack.c.l.b16 %v1284
        %v1317 = vunpack.c.l.b16 %v1285
        %v1318 = vunpack.c.l.b16 %v1286
        %v1319 = vunpack.c.l.b16 %v1287
        %v1320 = vunpack.c.l.b16 %v1288
        %v1321 = vpack.c.b16 %v1306, %v1305
        %v1322 = vpack.c.b16 %v1308, %v1307
        %v1323 = vpack.c.b16 %v1310, %v1309
        %v1324 = vpack.c.b16 %v1312, %v1311
        %v1325 = vpack.c.b16 %v1314, %v1313
        %v1326 = vpack.c.b16 %v1316, %v1315
        %v1327 = vpack.c.b16 %v1318, %v1317
        %v1328 = vpack.c.b16 %v1320, %v1319
        %1337 = vmatprep.subr.bf16.mxu0 0
        %1338 = vmatpush1.bf16.msra.mxu0 %v1328
        %1339 = vmatprep.subr.bf16.mxu0 0
        %1340 = vmatpush1.bf16.msra.mxu0 %v1327
        %1341 = vmatprep.subr.bf16.mxu0 0
        %1342 = vmatpush1.bf16.msra.mxu0 %v1326
        %1343 = vmatprep.subr.bf16.mxu0 0
        %1344 = vmatpush1.bf16.msra.mxu0 %v1325
        %1345 = vmatprep.subr.bf16.mxu0 0
        %1346 = vmatpush1.bf16.msra.mxu0 %v1324
        %1347 = vmatprep.subr.bf16.mxu0 0
        %1348 = vmatpush1.bf16.msra.mxu0 %v1323
        %1349 = vmatprep.subr.bf16.mxu0 0
        %1350 = vmatpush1.bf16.msra.mxu0 %v1322
        %1351 = vmatprep.subr.bf16.mxu0 0
        %1352 = vmatpush1.bf16.msra.mxu0 %v1321
        %1353 = vmatprep.subr.bf16.mxu0 0
        %1354 = vmatpush2.bf16.msra.mxu0 0
        %1355 = vmatprep.subr.bf16.mxu0 0
        %1356 = vmatpush2.bf16.msra.mxu0 0
        %1357 = vmatprep.subr.bf16.mxu0 0
        %1358 = vmatpush2.bf16.msra.mxu0 0
        %1359 = vmatprep.subr.bf16.mxu0 0
        %1360 = vmatpush2.bf16.msra.mxu0 0
        %1361 = vmatprep.subr.bf16.mxu0 0
        %1362 = vmatpush2.bf16.msra.mxu0 0
        %1363 = vmatprep.subr.bf16.mxu0 0
        %1364 = vmatpush2.bf16.msra.mxu0 0
        %1365 = vmatprep.subr.bf16.mxu0 0
        %1366 = vmatpush2.bf16.msra.mxu0 0
        %1367 = vmatprep.subr.bf16.mxu0 0
        %1368 = vmatpush2.bf16.msra.mxu0 0
        %1369 = vmatprep.mubr.bf16.mxu0 0
        %1370 = vmatmul.mubr.bf16.gmra.mxu0 %v1272
        %v1371 = vpop.f32.mrf.mxu0
        %v1372 = vadd.f32 %v1179, %v1371
        %v1373 = vpop.f32.mrf.mxu0
        %v1374 = vpop.f32.mrf.mxu0
        %v1375 = vadd.f32 %v1179, %v1374
        %v1376 = vpop.f32.mrf.mxu0
        %1377 = vdwg.mxu0
        %s1378 = scalar_lea.vmem %s297, 16 [#allocation6]
        %1379 = vst.msk [vmem:[%s1378] sm:$0xff] %vm326, %v1372
        %1380 = vst.msk [vmem:[%s1378 + $0x8] sm:$0xff] %vm326, %v1375
        %v1381 = vpack.c.bf16 %v1153, %v1147
        %v1382 = vld [vmem:[%s2] sm:$0xf]
        %v1383 = vld [vmem:[%s2 + $0x4] sm:$0xf]
        %v1384 = vld [vmem:[%s2 + $0x8] sm:$0xf]
        %v1385 = vld [vmem:[%s2 + $0xc] sm:$0xf]
        %v1386 = vld [vmem:[%s2 + $0x10] sm:$0xf]
        %v1387 = vld [vmem:[%s2 + $0x14] sm:$0xf]
        %v1388 = vld [vmem:[%s2 + $0x18] sm:$0xf]
        %v1389 = vld [vmem:[%s2 + $0x1c] sm:$0xf]
        %v1390 = vld [vmem:[%s2 + $0x20] sm:$0xf]
        %v1391 = vld [vmem:[%s2 + $0x24] sm:$0xf]
        %v1392 = vld [vmem:[%s2 + $0x28] sm:$0xf]
        %v1393 = vld [vmem:[%s2 + $0x2c] sm:$0xf]
        %v1394 = vld [vmem:[%s2 + $0x30] sm:$0xf]
        %v1395 = vld [vmem:[%s2 + $0x34] sm:$0xf]
        %v1396 = vld [vmem:[%s2 + $0x38] sm:$0xf]
        %v1397 = vld [vmem:[%s2 + $0x3c] sm:$0xf]
        %v1414 = vunpack.c.l.b16 %v1382
        %v1415 = vunpack.c.l.b16 %v1383
        %v1416 = vunpack.c.l.b16 %v1384
        %v1417 = vunpack.c.l.b16 %v1385
        %v1418 = vunpack.c.l.b16 %v1386
        %v1419 = vunpack.c.l.b16 %v1387
        %v1420 = vunpack.c.l.b16 %v1388
        %v1421 = vunpack.c.l.b16 %v1389
        %v1422 = vunpack.c.l.b16 %v1390
        %v1423 = vunpack.c.l.b16 %v1391
        %v1424 = vunpack.c.l.b16 %v1392
        %v1425 = vunpack.c.l.b16 %v1393
        %v1426 = vunpack.c.l.b16 %v1394
        %v1427 = vunpack.c.l.b16 %v1395
        %v1428 = vunpack.c.l.b16 %v1396
        %v1429 = vunpack.c.l.b16 %v1397
        %v1430 = vpack.c.b16 %v1415, %v1414
        %v1431 = vpack.c.b16 %v1417, %v1416
        %v1432 = vpack.c.b16 %v1419, %v1418
        %v1433 = vpack.c.b16 %v1421, %v1420
        %v1434 = vpack.c.b16 %v1423, %v1422
        %v1435 = vpack.c.b16 %v1425, %v1424
        %v1436 = vpack.c.b16 %v1427, %v1426
        %v1437 = vpack.c.b16 %v1429, %v1428
        %1446 = vmatprep.subr.bf16.mxu0 0
        %1447 = vmatpush1.bf16.msra.mxu0 %v1437
        %1448 = vmatprep.subr.bf16.mxu0 0
        %1449 = vmatpush1.bf16.msra.mxu0 %v1436
        %1450 = vmatprep.subr.bf16.mxu0 0
        %1451 = vmatpush1.bf16.msra.mxu0 %v1435
        %1452 = vmatprep.subr.bf16.mxu0 0
        %1453 = vmatpush1.bf16.msra.mxu0 %v1434
        %1454 = vmatprep.subr.bf16.mxu0 0
        %1455 = vmatpush1.bf16.msra.mxu0 %v1433
        %1456 = vmatprep.subr.bf16.mxu0 0
        %1457 = vmatpush1.bf16.msra.mxu0 %v1432
        %1458 = vmatprep.subr.bf16.mxu0 0
        %1459 = vmatpush1.bf16.msra.mxu0 %v1431
        %1460 = vmatprep.subr.bf16.mxu0 0
        %1461 = vmatpush1.bf16.msra.mxu0 %v1430
        %1462 = vmatprep.subr.bf16.mxu0 0
        %1463 = vmatpush2.bf16.msra.mxu0 0
        %1464 = vmatprep.subr.bf16.mxu0 0
        %1465 = vmatpush2.bf16.msra.mxu0 0
        %1466 = vmatprep.subr.bf16.mxu0 0
        %1467 = vmatpush2.bf16.msra.mxu0 0
        %1468 = vmatprep.subr.bf16.mxu0 0
        %1469 = vmatpush2.bf16.msra.mxu0 0
        %1470 = vmatprep.subr.bf16.mxu0 0
        %1471 = vmatpush2.bf16.msra.mxu0 0
        %1472 = vmatprep.subr.bf16.mxu0 0
        %1473 = vmatpush2.bf16.msra.mxu0 0
        %1474 = vmatprep.subr.bf16.mxu0 0
        %1475 = vmatpush2.bf16.msra.mxu0 0
        %1476 = vmatprep.subr.bf16.mxu0 0
        %1477 = vmatpush2.bf16.msra.mxu0 0
        %1478 = vmatprep.mubr.bf16.mxu0 0
        %1479 = vmatmul.mubr.bf16.gmra.mxu0 %v1381
        %v1480 = vpop.f32.mrf.mxu0
        %v1481 = vadd.f32 %v1179, %v1480
        %v1482 = vpop.f32.mrf.mxu0
        %v1483 = vpop.f32.mrf.mxu0
        %v1484 = vadd.f32 %v1179, %v1483
        %v1485 = vpop.f32.mrf.mxu0
        %1486 = vdwg.mxu0
        %s1487 = scalar_lea.vmem %s297, 32 [#allocation6]
        %1488 = vst.msk [vmem:[%s1487] sm:$0xff] %vm326, %v1481
        %1489 = vst.msk [vmem:[%s1487 + $0x8] sm:$0xff] %vm326, %v1484
        %v1490 = vpack.c.bf16 %v1155, %v1149
        %v1491 = vld [vmem:[%s2] sm:$0xf]
        %v1492 = vld [vmem:[%s2 + $0x4] sm:$0xf]
        %v1493 = vld [vmem:[%s2 + $0x8] sm:$0xf]
        %v1494 = vld [vmem:[%s2 + $0xc] sm:$0xf]
        %v1495 = vld [vmem:[%s2 + $0x10] sm:$0xf]
        %v1496 = vld [vmem:[%s2 + $0x14] sm:$0xf]
        %v1497 = vld [vmem:[%s2 + $0x18] sm:$0xf]
        %v1498 = vld [vmem:[%s2 + $0x1c] sm:$0xf]
        %v1499 = vld [vmem:[%s2 + $0x20] sm:$0xf]
        %v1500 = vld [vmem:[%s2 + $0x24] sm:$0xf]
        %v1501 = vld [vmem:[%s2 + $0x28] sm:$0xf]
        %v1502 = vld [vmem:[%s2 + $0x2c] sm:$0xf]
        %v1503 = vld [vmem:[%s2 + $0x30] sm:$0xf]
        %v1504 = vld [vmem:[%s2 + $0x34] sm:$0xf]
        %v1505 = vld [vmem:[%s2 + $0x38] sm:$0xf]
        %v1506 = vld [vmem:[%s2 + $0x3c] sm:$0xf]
        %v1523 = vunpack.c.l.b16 %v1491
        %v1524 = vunpack.c.l.b16 %v1492
        %v1525 = vunpack.c.l.b16 %v1493
        %v1526 = vunpack.c.l.b16 %v1494
        %v1527 = vunpack.c.l.b16 %v1495
        %v1528 = vunpack.c.l.b16 %v1496
        %v1529 = vunpack.c.l.b16 %v1497
        %v1530 = vunpack.c.l.b16 %v1498
        %v1531 = vunpack.c.l.b16 %v1499
        %v1532 = vunpack.c.l.b16 %v1500
        %v1533 = vunpack.c.l.b16 %v1501
        %v1534 = vunpack.c.l.b16 %v1502
        %v1535 = vunpack.c.l.b16 %v1503
        %v1536 = vunpack.c.l.b16 %v1504
        %v1537 = vunpack.c.l.b16 %v1505
        %v1538 = vunpack.c.l.b16 %v1506
        %v1539 = vpack.c.b16 %v1524, %v1523
        %v1540 = vpack.c.b16 %v1526, %v1525
        %v1541 = vpack.c.b16 %v1528, %v1527
        %v1542 = vpack.c.b16 %v1530, %v1529
        %v1543 = vpack.c.b16 %v1532, %v1531
        %v1544 = vpack.c.b16 %v1534, %v1533
        %v1545 = vpack.c.b16 %v1536, %v1535
        %v1546 = vpack.c.b16 %v1538, %v1537
        %1555 = vmatprep.subr.bf16.mxu0 0
        %1556 = vmatpush1.bf16.msra.mxu0 %v1546
        %1557 = vmatprep.subr.bf16.mxu0 0
        %1558 = vmatpush1.bf16.msra.mxu0 %v1545
        %1559 = vmatprep.subr.bf16.mxu0 0
        %1560 = vmatpush1.bf16.msra.mxu0 %v1544
        %1561 = vmatprep.subr.bf16.mxu0 0
        %1562 = vmatpush1.bf16.msra.mxu0 %v1543
        %1563 = vmatprep.subr.bf16.mxu0 0
        %1564 = vmatpush1.bf16.msra.mxu0 %v1542
        %1565 = vmatprep.subr.bf16.mxu0 0
        %1566 = vmatpush1.bf16.msra.mxu0 %v1541
        %1567 = vmatprep.subr.bf16.mxu0 0
        %1568 = vmatpush1.bf16.msra.mxu0 %v1540
        %1569 = vmatprep.subr.bf16.mxu0 0
        %1570 = vmatpush1.bf16.msra.mxu0 %v1539
        %1571 = vmatprep.subr.bf16.mxu0 0
        %1572 = vmatpush2.bf16.msra.mxu0 0
        %1573 = vmatprep.subr.bf16.mxu0 0
        %1574 = vmatpush2.bf16.msra.mxu0 0
        %1575 = vmatprep.subr.bf16.mxu0 0
        %1576 = vmatpush2.bf16.msra.mxu0 0
        %1577 = vmatprep.subr.bf16.mxu0 0
        %1578 = vmatpush2.bf16.msra.mxu0 0
        %1579 = vmatprep.subr.bf16.mxu0 0
        %1580 = vmatpush2.bf16.msra.mxu0 0
        %1581 = vmatprep.subr.bf16.mxu0 0
        %1582 = vmatpush2.bf16.msra.mxu0 0
        %1583 = vmatprep.subr.bf16.mxu0 0
        %1584 = vmatpush2.bf16.msra.mxu0 0
        %1585 = vmatprep.subr.bf16.mxu0 0
        %1586 = vmatpush2.bf16.msra.mxu0 0
        %1587 = vmatprep.mubr.bf16.mxu0 0
        %1588 = vmatmul.mubr.bf16.gmra.mxu0 %v1490
        %v1589 = vpop.f32.mrf.mxu0
        %v1590 = vadd.f32 %v1179, %v1589
        %v1591 = vpop.f32.mrf.mxu0
        %v1592 = vpop.f32.mrf.mxu0
        %v1593 = vadd.f32 %v1179, %v1592
        %v1594 = vpop.f32.mrf.mxu0
        %1595 = vdwg.mxu0
        %s1596 = scalar_lea.vmem %s297, 48 [#allocation6]
        %1597 = vst.msk [vmem:[%s1596] sm:$0xff] %vm326, %v1590
        %1598 = vst.msk [vmem:[%s1596 + $0x8] sm:$0xff] %vm326, %v1593
        %s1599 = sand.u32 %s184, 1
        %s1600 = scalar_lea.sflag [#allocation5], %s1599
        %s1601 = sand.u32 %s184, 1
        %s1602 = smul.addr %s1601, 64
        %s1603 = scalar_lea.vmem [#allocation6], %s1602
        // Predicated region
        $region53: #{tpu_custom_call.1} parent=47 // pred_check
          %p1604 = pneg %p194
        $region54: #{tpu_custom_call.1} parent=47 // pred_check_branch
          %1606 = sbr.rel (%p1604) target = $region56
        $region55: #{tpu_custom_call.1} parent=47 // pred_region
          %s1607 = smul.u32 4, %s24
          %s1609 = ssub.s32 1024, 1024
          %1610 = vsyncadd %s1600, %s1609
          %s1611 = smul.addr %s1607, 2
          %s1612 = smul.addr %s1611, 128
          %s1613 = scalar_lea.hbm %s7, %s1612
          %s1614 = sshll.u32 %s1603, 4
          %s1615 = int_to_ptr.vmem [resolvable:$true] %s1614
          %1620 = dma.vmem_to_hbm [thread:$0]  %s1615, 1024, %s1613, %s1600, 128, 128, 8
        $region56: #{tpu_custom_call.1} parent=47 // pred_fallthru
          _
      $region48: #{tpu_custom_call.1} parent=5 // pred_fallthru
        _
      %p1621 = scmp.le.s32.totalorder 2, %s19
      // Predicated region
      $region57: #{tpu_custom_call.1} parent=5 // pred_check
        %p1622 = pneg %p1621
      $region58: #{tpu_custom_call.1} parent=5 // pred_check_branch
        %1624 = sbr.rel (%p1622) target = $region60
      $region59: #{tpu_custom_call.1} parent=5 // pred_region
        %s1625 = ssub.s32 %s19, 2
        // Predicated region
        $region61: #{tpu_custom_call.1} parent=59 // pred_check
          %p1626 = pneg %p200
        $region62: #{tpu_custom_call.1} parent=59 // pred_check_branch
          %1628 = sbr.rel (%p1626) target = $region64
        $region63: #{tpu_custom_call.1} parent=59 // pred_region
          %s1629 = sand.u32 %s185, 1
          %s1630 = scalar_lea.sflag [#allocation5], %s1629
          %s1631 = sand.u32 %s185, 1
          %s1632 = smul.addr %s1631, 64
          %s1633 = scalar_lea.vmem [#allocation6], %s1632
          %1634 = dma.done %s1630, 1024
        $region64: #{tpu_custom_call.1} parent=59 // pred_fallthru
          _
      $region60: #{tpu_custom_call.1} parent=5 // pred_fallthru
        _
    $region6: #{tpu_custom_call.1} parent=1 // loop_footer
      %s23 = sadd.s32 1, %s19
    $region7: #{tpu_custom_call.1} parent=1 // loop_footer_branch
      %18 = sbr.rel target = $region3
    $region8: #{tpu_custom_call.1} parent=1 // loop_exit
      _
    %1635 = vsyncpa [#allocation4], 1
    %s1636 = scalar_lea.sflag [#allocation4], 1
    %1637 = vsyncpa %s1636, 1
    %1638 = vsyncpa [#allocation5], 1
    %s1639 = scalar_lea.sflag [#allocation5], 1
    %1640 = vsyncpa %s1639, 1

// kernel: tpu_custom_call.1
$region0: #{tpu_custom_call.1}
  #allocation0 [shape = 'u32[]', space=smem, size = 0x4, offset = 0x4, fixed_abs, tag = 'smem constant byte address 0x4 - core index']
  #allocation1 [shape = 'u32[144,128]{1,0:T(1,128)}', space=vmem, size = 0x12000, scoped, tag = 'internal scratch']
  #allocation2 [shape = 'f32[16,512]{1,0:T(8,128)}', space=vmem, size = 0x8000, scoped, tag = 'scratch operand']
  %s0 = inlined_call_operand.hbm [shape: f32[8,16,16], index: 0, kind: input, shape index: {}]
  %s1 = inlined_call_operand.vmem [shape: bf16[16,128], index: 1, kind: input, shape index: {}]
  %s2 = inlined_call_operand.vmem [shape: bf16[128,16], index: 2, kind: input, shape index: {}]
  %s3 = inlined_call_operand.vmem [shape: f32[16,16], index: 3, kind: input, shape index: {}]
  %s4 = inlined_call_operand.vmem [shape: f32[16,16], index: 4, kind: input, shape index: {}]
  %s5 = inlined_call_operand.vmem [shape: f32[8,128], index: 5, kind: input, shape index: {}]
  %s6 = inlined_call_operand.vmem [shape: f32[1,16], index: 6, kind: input, shape index: {}]
  %s7 = inlined_call_operand.hbm [shape: f32[8,16,16], index: 7, kind: output, shape index: {}]
  %s8 = sld [smem:[#allocation0]]
  $region65: #{tpu_custom_call.1} parent=0
    _
  %s10 = ssub.s32 1, %s8
  %s11 = scalar_select 0, %s10, %s8
  $region1: #{tpu_custom_call.1} parent=0
    #allocation3 [shape = 'u8[65536]{0}', space=vmem, size = 0x10000, scoped, tag = 'input window, operand 0']
    #allocation4 [shape = 's32[2]{0}', space=sflag, size = 0x8, scoped, tag = 'scoped memory for tpu_custom_call.1']
    #allocation5 [shape = 's32[2]{0}', space=sflag, size = 0x8, scoped, tag = 'scoped memory for tpu_custom_call.1']
    #allocation6 [shape = 'u8[65536]{0}', space=vmem, size = 0x10000, scoped, tag = 'output window, operand 0']
    %12 = vsyncpa [#allocation4], 0
    %s13 = scalar_lea.sflag [#allocation4], 1
    %14 = vsyncpa %s13, 0
    %15 = vsyncpa [#allocation5], 0
    %s16 = scalar_lea.sflag [#allocation5], 1
    %17 = vsyncpa %s16, 0
    loop: start=0, step=1, limit=4
    $region2: #{tpu_custom_call.1} parent=1 // loop_pre_header
      _
    $region3: #{tpu_custom_call.1} parent=1 // loop_header
      %s19 = sphi 0, %s23
      %p20 = scmp.ge.s32.totalorder %s19, 4
      %s29 = sphi 0, %s31
      %s32 = sphi 0, %s29
      %s33 = sphi 0, %s32
      %s49 = sphi 0, %s33
      %s53 = sphi 0, %s53
      %s55 = sphi 0, %s53
      %s56 = sphi 0, %s55
      %s70 = sphi 0, %s56
      %s74 = sphi 0, %s74
      %s76 = sphi 0, %s74
      %s77 = sphi 0, %s76
      %s91 = sphi 0, %s77
      %s95 = sphi 0, %s95
      %s97 = sphi 0, %s95
      %s98 = sphi 0, %s97
      %s112 = sphi 0, %s98
      %s116 = sphi 0, %s116
      %s118 = sphi 0, %s116
      %s119 = sphi 0, %s118
      %s133 = sphi 0, %s119
      %s137 = sphi 0, %s137
      %s139 = sphi 0, %s137
      %s140 = sphi 0, %s139
      %s154 = sphi 0, %s140
      %s158 = sphi 0, %s158
      %s160 = sphi 0, %s158
      %s161 = sphi 0, %s160
      %s175 = sphi 0, %s161
      %s181 = sphi 0, %s183
      %s184 = sphi 0, %s181
      %s185 = sphi 0, %s184
      %s201 = sphi 0, %s185
    $region4: #{tpu_custom_call.1} parent=1 // loop_header_branch
      %22 = sbr.rel (%p20) target = $region8
    $region5: #{tpu_custom_call.1} parent=1 // loop_body
      %s24 = ssub.s32 %s19, 1
      %s25 = ssub.s32 %s19, 2
      %s26 = sadd.s32 %s19, 1
      %s27 = ssub.s32 %s19, %s26
      %p28 = scmp.eq.s32.totalorder %s27, 0
      %s30 = sadd.s32 %s29, 1
      %s31 = scalar_select %p28, %s29, %s30
      %p34 = pneg %p28
      %p35 = scmp.eq.s32.totalorder %s19, 1
      %p36 = por %p34, %p35
      %p37 = scmp.ne.s32.totalorder %s29, %s32
      %p38 = scmp.eq.s32.totalorder %s19, 0
      %p39 = por %p37, %p38
      %p40 = scmp.ne.s32.totalorder %s29, %s32
      %p41 = scmp.eq.s32.totalorder %s24, 1
      %p42 = por %p40, %p41
      %p43 = scmp.ne.s32.totalorder %s32, %s33
      %p44 = scmp.eq.s32.totalorder %s24, 0
      %p45 = por %p43, %p44
      %p46 = scmp.ne.s32.totalorder %s32, %s33
      %p47 = scmp.eq.s32.totalorder %s25, 1
      %p48 = por %p46, %p47
      %p50 = scmp.ne.s32.totalorder %s33, %s49
      %p51 = scmp.eq.s32.totalorder %s25, 0
      %p52 = por %p50, %p51
      %s54 = sadd.s32 %s53, 1
      %p57 = scmp.eq.s32.totalorder %s19, 1
      %p58 = scmp.ne.s32.totalorder %s53, %s55
      %p59 = scmp.eq.s32.totalorder %s19, 0
      %p60 = por %p58, %p59
      %p61 = scmp.ne.s32.totalorder %s53, %s55
      %p62 = scmp.eq.s32.totalorder %s24, 1
      %p63 = por %p61, %p62
      %p64 = scmp.ne.s32.totalorder %s55, %s56
      %p65 = scmp.eq.s32.totalorder %s24, 0
      %p66 = por %p64, %p65
      %p67 = scmp.ne.s32.totalorder %s55, %s56
      %p68 = scmp.eq.s32.totalorder %s25, 1
      %p69 = por %p67, %p68
      %p71 = scmp.ne.s32.totalorder %s56, %s70
      %p72 = scmp.eq.s32.totalorder %s25, 0
      %p73 = por %p71, %p72
      %s75 = sadd.s32 %s74, 1
      %p78 = scmp.eq.s32.totalorder %s19, 1
      %p79 = scmp.ne.s32.totalorder %s74, %s76
      %p80 = scmp.eq.s32.totalorder %s19, 0
      %p81 = por %p79, %p80
      %p82 = scmp.ne.s32.totalorder %s74, %s76
      %p83 = scmp.eq.s32.totalorder %s24, 1
      %p84 = por %p82, %p83
      %p85 = scmp.ne.s32.totalorder %s76, %s77
      %p86 = scmp.eq.s32.totalorder %s24, 0
      %p87 = por %p85, %p86
      %p88 = scmp.ne.s32.totalorder %s76, %s77
      %p89 = scmp.eq.s32.totalorder %s25, 1
      %p90 = por %p88, %p89
      %p92 = scmp.ne.s32.totalorder %s77, %s91
      %p93 = scmp.eq.s32.totalorder %s25, 0
      %p94 = por %p92, %p93
      %s96 = sadd.s32 %s95, 1
      %p99 = scmp.eq.s32.totalorder %s19, 1
      %p100 = scmp.ne.s32.totalorder %s95, %s97
      %p101 = scmp.eq.s32.totalorder %s19, 0
      %p102 = por %p100, %p101
      %p103 = scmp.ne.s32.totalorder %s95, %s97
      %p104 = scmp.eq.s32.totalorder %s24, 1
      %p105 = por %p103, %p104
      %p106 = scmp.ne.s32.totalorder %s97, %s98
      %p107 = scmp.eq.s32.totalorder %s24, 0
      %p108 = por %p106, %p107
      %p109 = scmp.ne.s32.totalorder %s97, %s98
      %p110 = scmp.eq.s32.totalorder %s25, 1
      %p111 = por %p109, %p110
      %p113 = scmp.ne.s32.totalorder %s98, %s112
      %p114 = scmp.eq.s32.totalorder %s25, 0
      %p115 = por %p113, %p114
      %s117 = sadd.s32 %s116, 1
      %p120 = scmp.eq.s32.totalorder %s19, 1
      %p121 = scmp.ne.s32.totalorder %s116, %s118
      %p122 = scmp.eq.s32.totalorder %s19, 0
      %p123 = por %p121, %p122
      %p124 = scmp.ne.s32.totalorder %s116, %s118
      %p125 = scmp.eq.s32.totalorder %s24, 1
      %p126 = por %p124, %p125
      %p127 = scmp.ne.s32.totalorder %s118, %s119
      %p128 = scmp.eq.s32.totalorder %s24, 0
      %p129 = por %p127, %p128
      %p130 = scmp.ne.s32.totalorder %s118, %s119
      %p131 = scmp.eq.s32.totalorder %s25, 1
      %p132 = por %p130, %p131
      %p134 = scmp.ne.s32.totalorder %s119, %s133
      %p135 = scmp.eq.s32.totalorder %s25, 0
      %p136 = por %p134, %p135
      %s138 = sadd.s32 %s137, 1
      %p141 = scmp.eq.s32.totalorder %s19, 1
      %p142 = scmp.ne.s32.totalorder %s137, %s139
      %p143 = scmp.eq.s32.totalorder %s19, 0
      %p144 = por %p142, %p143
      %p145 = scmp.ne.s32.totalorder %s137, %s139
      %p146 = scmp.eq.s32.totalorder %s24, 1
      %p147 = por %p145, %p146
      %p148 = scmp.ne.s32.totalorder %s139, %s140
      %p149 = scmp.eq.s32.totalorder %s24, 0
      %p150 = por %p148, %p149
      %p151 = scmp.ne.s32.totalorder %s139, %s140
      %p152 = scmp.eq.s32.totalorder %s25, 1
      %p153 = por %p151, %p152
      %p155 = scmp.ne.s32.totalorder %s140, %s154
      %p156 = scmp.eq.s32.totalorder %s25, 0
      %p157 = por %p155, %p156
      %s159 = sadd.s32 %s158, 1
      %p162 = scmp.eq.s32.totalorder %s19, 1
      %p163 = scmp.ne.s32.totalorder %s158, %s160
      %p164 = scmp.eq.s32.totalorder %s19, 0
      %p165 = por %p163, %p164
      %p166 = scmp.ne.s32.totalorder %s158, %s160
      %p167 = scmp.eq.s32.totalorder %s24, 1
      %p168 = por %p166, %p167
      %p169 = scmp.ne.s32.totalorder %s160, %s161
      %p170 = scmp.eq.s32.totalorder %s24, 0
      %p171 = por %p169, %p170
      %p172 = scmp.ne.s32.totalorder %s160, %s161
      %p173 = scmp.eq.s32.totalorder %s25, 1
      %p174 = por %p172, %p173
      %p176 = scmp.ne.s32.totalorder %s161, %s175
      %p177 = scmp.eq.s32.totalorder %s25, 0
      %p178 = por %p176, %p177
      %s179 = ssub.s32 %s19, %s26
      %p180 = scmp.eq.s32.totalorder %s179, 0
      %s182 = sadd.s32 %s181, 1
      %s183 = scalar_select %p180, %s181, %s182
      %p186 = pneg %p180
      %p187 = scmp.eq.s32.totalorder %s19, 1
      %p188 = por %p186, %p187
      %p189 = scmp.ne.s32.totalorder %s181, %s184
      %p190 = scmp.eq.s32.totalorder %s19, 0
      %p191 = por %p189, %p190
      %p192 = scmp.ne.s32.totalorder %s181, %s184
      %p193 = scmp.eq.s32.totalorder %s24, 1
      %p194 = por %p192, %p193
      %p195 = scmp.ne.s32.totalorder %s184, %s185
      %p196 = scmp.eq.s32.totalorder %s24, 0
      %p197 = por %p195, %p196
      %p198 = scmp.ne.s32.totalorder %s184, %s185
      %p199 = scmp.eq.s32.totalorder %s25, 1
      %p200 = por %p198, %p199
      %p202 = scmp.ne.s32.totalorder %s185, %s201
      %p203 = scmp.eq.s32.totalorder %s25, 0
      %p204 = por %p202, %p203
      %p205 = scmp.le.s32.totalorder 1, %s19
      %p206 = scmp.lt.s32.totalorder %s19, 3
      %p207 = pnand %p205, %p206
      %p208 = pneg %p207
      // Predicated region
      $region9: #{tpu_custom_call.1} parent=5 // pred_check
        _
      $region10: #{tpu_custom_call.1} parent=5 // pred_check_branch
        %210 = sbr.rel (%p207) target = $region12
      $region11: #{tpu_custom_call.1} parent=5 // pred_region
        %s211 = ssub.s32 %s19, 1
        // Predicated region
        $region13: #{tpu_custom_call.1} parent=11 // pred_check
          %p212 = pneg %p66
        $region14: #{tpu_custom_call.1} parent=11 // pred_check_branch
          %214 = sbr.rel (%p212) target = $region16
        $region15: #{tpu_custom_call.1} parent=11 // pred_region
          _
        $region16: #{tpu_custom_call.1} parent=11 // pred_fallthru
          _
        // Predicated region
        $region17: #{tpu_custom_call.1} parent=11 // pred_check
          %p215 = pneg %p87
        $region18: #{tpu_custom_call.1} parent=11 // pred_check_branch
          %217 = sbr.rel (%p215) target = $region20
        $region19: #{tpu_custom_call.1} parent=11 // pred_region
          _
        $region20: #{tpu_custom_call.1} parent=11 // pred_fallthru
          _
        // Predicated region
        $region21: #{tpu_custom_call.1} parent=11 // pred_check
          %p218 = pneg %p108
        $region22: #{tpu_custom_call.1} parent=11 // pred_check_branch
          %220 = sbr.rel (%p218) target = $region24
        $region23: #{tpu_custom_call.1} parent=11 // pred_region
          _
        $region24: #{tpu_custom_call.1} parent=11 // pred_fallthru
          _
        // Predicated region
        $region25: #{tpu_custom_call.1} parent=11 // pred_check
          %p221 = pneg %p129
        $region26: #{tpu_custom_call.1} parent=11 // pred_check_branch
          %223 = sbr.rel (%p221) target = $region28
        $region27: #{tpu_custom_call.1} parent=11 // pred_region
          _
        $region28: #{tpu_custom_call.1} parent=11 // pred_fallthru
          _
        // Predicated region
        $region29: #{tpu_custom_call.1} parent=11 // pred_check
          %p224 = pneg %p150
        $region30: #{tpu_custom_call.1} parent=11 // pred_check_branch
          %226 = sbr.rel (%p224) target = $region32
        $region31: #{tpu_custom_call.1} parent=11 // pred_region
          _
        $region32: #{tpu_custom_call.1} parent=11 // pred_fallthru
          _
        // Predicated region
        $region33: #{tpu_custom_call.1} parent=11 // pred_check
          %p227 = pneg %p171
        $region34: #{tpu_custom_call.1} parent=11 // pred_check_branch
          %229 = sbr.rel (%p227) target = $region36
        $region35: #{tpu_custom_call.1} parent=11 // pred_region
          _
        $region36: #{tpu_custom_call.1} parent=11 // pred_fallthru
          _
      $region12: #{tpu_custom_call.1} parent=5 // pred_fallthru
        _
      %p230 = scmp.lt.s32.totalorder %s19, 2
      // Predicated region
      $region37: #{tpu_custom_call.1} parent=5 // pred_check
        %p231 = pneg %p230
      $region38: #{tpu_custom_call.1} parent=5 // pred_check_branch
        %233 = sbr.rel (%p231) target = $region40
      $region39: #{tpu_custom_call.1} parent=5 // pred_region
        // Predicated region
        $region41: #{tpu_custom_call.1} parent=39 // pred_check
          %p234 = pneg %p39
        $region42: #{tpu_custom_call.1} parent=39 // pred_check_branch
          %236 = sbr.rel (%p234) target = $region44
        $region43: #{tpu_custom_call.1} parent=39 // pred_region
          %s237 = sand.u32 %s29, 1
          %s238 = scalar_lea.sflag [#allocation4], %s237
          %s239 = sand.u32 %s29, 1
          %s240 = smul.addr %s239, 64
          %s241 = scalar_lea.vmem [#allocation3], %s240
          %s242 = smul.u32 4, %s19
          %s244 = ssub.s32 1024, 1024
          %245 = vsyncadd %s238, %s244
          %s246 = smul.addr %s242, 2
          %s247 = smul.addr %s246, 128
          %s248 = scalar_lea.hbm %s0, %s247
          %s249 = sshll.u32 %s241, 4
          %s250 = int_to_ptr.vmem [resolvable:$true] %s249
          %255 = dma.hbm_to_vmem [thread:$0]  %s248, 1024, %s250, %s238, 128, 128, 8
        $region44: #{tpu_custom_call.1} parent=39 // pred_fallthru
          _
      $region40: #{tpu_custom_call.1} parent=5 // pred_fallthru
        _
      %p256 = scmp.le.s32.totalorder 1, %s19
      %p257 = scmp.lt.s32.totalorder %s19, 3
      %p258 = pnand %p256, %p257
      %p259 = pneg %p258
      // Predicated region
      $region45: #{tpu_custom_call.1} parent=5 // pred_check
        _
      $region46: #{tpu_custom_call.1} parent=5 // pred_check_branch
        %261 = sbr.rel (%p258) target = $region48
      $region47: #{tpu_custom_call.1} parent=5 // pred_region
        %s262 = ssub.s32 %s19, 1
        %s263 = sand.u32 %s32, 1
        %s264 = scalar_lea.sflag [#allocation4], %s263
        %s265 = sand.u32 %s32, 1
        %s266 = smul.addr %s265, 64
        %s267 = scalar_lea.vmem [#allocation3], %s266
        // Predicated region
        $region49: #{tpu_custom_call.1} parent=47 // pred_check
          %p268 = pneg %p45
        $region50: #{tpu_custom_call.1} parent=47 // pred_check_branch
          %270 = sbr.rel (%p268) target = $region52
        $region51: #{tpu_custom_call.1} parent=47 // pred_region
          %271 = dma.done %s264, 1024
        $region52: #{tpu_custom_call.1} parent=47 // pred_fallthru
          _
        %s272 = sand.u32 %s32, 1
        %s273 = scalar_lea.sflag [#allocation4], %s272
        %s274 = sand.u32 %s32, 1
        %s275 = smul.addr %s274, 64
        %s276 = scalar_lea.vmem [#allocation3], %s275
        %p277 = pneg %p45
        %p278 = pneg %p42
        %p279 = pneg %p66
        %p280 = pneg %p63
        %p281 = pneg %p87
        %p282 = pneg %p84
        %p283 = pneg %p108
        %p284 = pneg %p105
        %p285 = pneg %p129
        %p286 = pneg %p126
        %p287 = pneg %p150
        %p288 = pneg %p147
        %p289 = pneg %p171
        %p290 = pneg %p168
        %p291 = pneg %p197
        %p292 = pneg %p194
        %s293 = sand.u32 %s184, 1
        %s294 = scalar_lea.sflag [#allocation5], %s293
        %s295 = sand.u32 %s184, 1
        %s296 = smul.addr %s295, 64
        %s297 = scalar_lea.vmem [#allocation6], %s296
        %s298 = smul.u32 4, %s24
        %s299 = smul.u32 4, %s24
        %v301 = vld [vmem:[%s267] sm:$0xff]
        %v302 = vld [vmem:[%s267 + $0x8] sm:$0xff]
        %v303 = vld [vmem:[%s267 + $0x10] sm:$0xff]
        %v304 = vld [vmem:[%s267 + $0x18] sm:$0xff]
        %v305 = vld [vmem:[%s267 + $0x20] sm:$0xff]
        %v306 = vld [vmem:[%s267 + $0x28] sm:$0xff]
        %v307 = vld [vmem:[%s267 + $0x30] sm:$0xff]
        %v308 = vld [vmem:[%s267 + $0x38] sm:$0xff]
        %v309 = vpack.c.bf16 %v302, %v301
        %v310 = vpack.c.bf16 %v304, %v303
        %v311 = vpack.c.bf16 %v306, %v305
        %v312 = vpack.c.bf16 %v308, %v307
        %v313 = vld [vmem:[%s1] sm:$0xf]
        %v314 = vld [vmem:[%s1 + $0x4] sm:$0xf]
        %v315 = vld [vmem:[%s5 + $0x4] sm:$0x1]
        %v316 = vlaneseq
        %v317 = vshrl.u32 %v316, 7
        %v318 = vsub.s32 0, %v317
        %v319 = vrot.slane %v315, %v318
        %v322 = vunpack.c.l.b16 %v313
        %v323 = vunpack.c.l.b16 %v314
        %v324 = vpack.c.b16 %v323, %v322
        %vm326 = vcmask 130048
        %v328 = vsel %vm326, %v309, 0
        %v331 = vsel %vm326, %v310, 0
        %v334 = vsel %vm326, %v311, 0
        %v337 = vsel %vm326, %v312, 0
        %339 = vmatprep.subr.bf16.mxu0 0
        %340 = vmatpush1.bf16.msra.mxu0 0
        %341 = vmatprep.subr.bf16.mxu0 0
        %342 = vmatpush1.bf16.msra.mxu0 0
        %343 = vmatprep.subr.bf16.mxu0 0
        %344 = vmatpush1.bf16.msra.mxu0 0
        %345 = vmatprep.subr.bf16.mxu0 0
        %346 = vmatpush1.bf16.msra.mxu0 0
        %347 = vmatprep.subr.bf16.mxu0 0
        %348 = vmatpush1.bf16.msra.mxu0 0
        %349 = vmatprep.subr.bf16.mxu0 0
        %350 = vmatpush1.bf16.msra.mxu0 0
        %351 = vmatprep.subr.bf16.mxu0 0
        %352 = vmatpush1.bf16.msra.mxu0 0
        %353 = vmatprep.subr.bf16.mxu0 0
        %354 = vmatpush1.bf16.msra.mxu0 %v324
        %355 = vmatprep.subr.bf16.mxu0 0
        %356 = vmatpush2.bf16.msra.mxu0 0
        %357 = vmatprep.subr.bf16.mxu0 0
        %358 = vmatpush2.bf16.msra.mxu0 0
        %359 = vmatprep.subr.bf16.mxu0 0
        %360 = vmatpush2.bf16.msra.mxu0 0
        %361 = vmatprep.subr.bf16.mxu0 0
        %362 = vmatpush2.bf16.msra.mxu0 0
        %363 = vmatprep.subr.bf16.mxu0 0
        %364 = vmatpush2.bf16.msra.mxu0 0
        %365 = vmatprep.subr.bf16.mxu0 0
        %366 = vmatpush2.bf16.msra.mxu0 0
        %367 = vmatprep.subr.bf16.mxu0 0
        %368 = vmatpush2.bf16.msra.mxu0 0
        %369 = vmatprep.subr.bf16.mxu0 0
        %370 = vmatpush2.bf16.msra.mxu0 0
        %371 = vmatprep.mubr.bf16.mxu0 0
        %372 = vmatmul.mubr.bf16.gmra.mxu0 %v328
        %v373 = vpop.f32.mrf.mxu0
        %v374 = vadd.f32 %v319, %v373
        %v375 = vpop.f32.mrf.mxu0
        %v376 = vpop.f32.mrf.mxu0
        %v377 = vadd.f32 %v319, %v376
        %v378 = vpop.f32.mrf.mxu0
        %379 = vmatprep.mubr.bf16.mxu0 0
        %380 = vmatmul.mubr.bf16.gmra.mxu0 %v331
        %v381 = vpop.f32.mrf.mxu0
        %v382 = vadd.f32 %v319, %v381
        %v383 = vpop.f32.mrf.mxu0
        %v384 = vpop.f32.mrf.mxu0
        %v385 = vadd.f32 %v319, %v384
        %v386 = vpop.f32.mrf.mxu0
        %387 = vmatprep.mubr.bf16.mxu0 0
        %388 = vmatmul.mubr.bf16.gmra.mxu0 %v334
        %v389 = vpop.f32.mrf.mxu0
        %v390 = vadd.f32 %v319, %v389
        %v391 = vpop.f32.mrf.mxu0
        %v392 = vpop.f32.mrf.mxu0
        %v393 = vadd.f32 %v319, %v392
        %v394 = vpop.f32.mrf.mxu0
        %395 = vmatprep.mubr.bf16.mxu0 0
        %396 = vmatmul.mubr.bf16.gmra.mxu0 %v337
        %v397 = vpop.f32.mrf.mxu0
        %v398 = vadd.f32 %v319, %v397
        %v399 = vpop.f32.mrf.mxu0
        %v400 = vpop.f32.mrf.mxu0
        %v401 = vadd.f32 %v319, %v400
        %v402 = vpop.f32.mrf.mxu0
        %403 = vdwg.mxu0
        %v404 = vmax.f32 %v374, 0.0
        %v405 = vmax.f32 %v377, 0.0
        %v406 = vmax.f32 %v382, 0.0
        %v407 = vmax.f32 %v385, 0.0
        %v408 = vmax.f32 %v390, 0.0
        %v409 = vmax.f32 %v393, 0.0
        %v410 = vmax.f32 %v398, 0.0
        %v411 = vmax.f32 %v401, 0.0
        %412 = vst [vmem:[#allocation2] sm:$0xff] %v404
        %413 = vst [vmem:[#allocation2 + $0x20] sm:$0xff] %v405
        %414 = vst [vmem:[#allocation2 + $0x8] sm:$0xff] %v406
        %415 = vst [vmem:[#allocation2 + $0x28] sm:$0xff] %v407
        %416 = vst [vmem:[#allocation2 + $0x10] sm:$0xff] %v408
        %417 = vst [vmem:[#allocation2 + $0x30] sm:$0xff] %v409
        %418 = vst [vmem:[#allocation2 + $0x18] sm:$0xff] %v410
        %419 = vst [vmem:[#allocation2 + $0x38] sm:$0xff] %v411
        %v420 = vld [vmem:[%s3] sm:$0xff]
        %v421 = vld [vmem:[%s3 + $0x8] sm:$0xff]
        %v422 = vld [vmem:[%s4] sm:$0xff]
        %v423 = vld [vmem:[%s4 + $0x8] sm:$0xff]
        %v424 = vld [vmem:[#allocation2] sm:$0xff]
        %v425 = vld [vmem:[#allocation2 + $0x8] sm:$0xff]
        %v426 = vld [vmem:[#allocation2 + $0x10] sm:$0xff]
        %v427 = vld [vmem:[#allocation2 + $0x18] sm:$0xff]
        %v428 = vld [vmem:[#allocation2 + $0x20] sm:$0xff]
        %v429 = vld [vmem:[#allocation2 + $0x28] sm:$0xff]
        %v430 = vld [vmem:[#allocation2 + $0x30] sm:$0xff]
        %v431 = vld [vmem:[#allocation2 + $0x38] sm:$0xff]
        %v433 = vsel %vm326, %v420, 0
        %v436 = vsel %vm326, %v421, 0
        %438 = vmatprep.subr.mxu0 0.0
        %439 = vmatpush1.msra.mxu0 0.0
        %440 = vmatprep.subr.mxu0 0.0
        %441 = vmatpush1.msra.mxu0 0.0
        %442 = vmatprep.subr.mxu0 0.0
        %443 = vmatpush1.msra.mxu0 0.0
        %444 = vmatprep.subr.mxu0 0.0
        %445 = vmatpush1.msra.mxu0 0.0
        %446 = vmatprep.subr.mxu0 0.0
        %447 = vmatpush1.msra.mxu0 0.0
        %448 = vmatprep.subr.mxu0 0.0
        %449 = vmatpush1.msra.mxu0 0.0
        %450 = vmatprep.subr.mxu0 0.0
        %451 = vmatpush1.msra.mxu0 0.0
        %452 = vmatprep.subr.mxu0 0.0
        %453 = vmatpush1.msra.mxu0 0.0
        %454 = vmatprep.subr.mxu0 0.0
        %455 = vmatpush1.msra.mxu0 0.0
        %456 = vmatprep.subr.mxu0 0.0
        %457 = vmatpush1.msra.mxu0 0.0
        %458 = vmatprep.subr.mxu0 0.0
        %459 = vmatpush1.msra.mxu0 0.0
        %460 = vmatprep.subr.mxu0 0.0
        %461 = vmatpush1.msra.mxu0 0.0
        %462 = vmatprep.subr.mxu0 0.0
        %463 = vmatpush1.msra.mxu0 0.0
        %464 = vmatprep.subr.mxu0 0.0
        %465 = vmatpush1.msra.mxu0 0.0
        %466 = vmatprep.subr.mxu0 %v429
        %467 = vmatpush1.msra.mxu0 %v428
        %468 = vmatprep.subr.mxu0 %v425
        %469 = vmatpush1.msra.mxu0 %v424
        %470 = vmatprep.subr.mxu0 0.0
        %471 = vmatpush2.msra.mxu0 0.0
        %472 = vmatprep.subr.mxu0 0.0
        %473 = vmatpush2.msra.mxu0 0.0
        %474 = vmatprep.subr.mxu0 0.0
        %475 = vmatpush2.msra.mxu0 0.0
        %476 = vmatprep.subr.mxu0 0.0
        %477 = vmatpush2.msra.mxu0 0.0
        %478 = vmatprep.subr.mxu0 0.0
        %479 = vmatpush2.msra.mxu0 0.0
        %480 = vmatprep.subr.mxu0 0.0
        %481 = vmatpush2.msra.mxu0 0.0
        %482 = vmatprep.subr.mxu0 0.0
        %483 = vmatpush2.msra.mxu0 0.0
        %484 = vmatprep.subr.mxu0 0.0
        %485 = vmatpush2.msra.mxu0 0.0
        %486 = vmatprep.subr.mxu0 0.0
        %487 = vmatpush2.msra.mxu0 0.0
        %488 = vmatprep.subr.mxu0 0.0
        %489 = vmatpush2.msra.mxu0 0.0
        %490 = vmatprep.subr.mxu0 0.0
        %491 = vmatpush2.msra.mxu0 0.0
        %492 = vmatprep.subr.mxu0 0.0
        %493 = vmatpush2.msra.mxu0 0.0
        %494 = vmatprep.subr.mxu0 0.0
        %495 = vmatpush2.msra.mxu0 0.0
        %496 = vmatprep.subr.mxu0 0.0
        %497 = vmatpush2.msra.mxu0 0.0
        %498 = vmatprep.subr.mxu0 0.0
        %499 = vmatpush2.msra.mxu0 0.0
        %500 = vmatprep.subr.mxu0 0.0
        %501 = vmatpush2.msra.mxu0 0.0
        %502 = vmatprep.mubr.f32.mxu0 0.0
        %503 = vmatmul.mubr.f32.gmra.mxu0 %v433
        %v504 = vpop.f32.mrf.mxu0
        %v505 = vadd.f32 0.0, %v504
        %v506 = vpop.f32.mrf.mxu0
        %v507 = vadd.f32 0.0, %v506
        %508 = vmatprep.mubr.f32.mxu0 0.0
        %509 = vmatmul.mubr.f32.gmra.mxu0 %v436
        %v510 = vpop.f32.mrf.mxu0
        %v511 = vadd.f32 0.0, %v510
        %v512 = vpop.f32.mrf.mxu0
        %v513 = vadd.f32 0.0, %v512
        %514 = vdwg.mxu0
        %515 = vmatprep.subr.mxu0 0.0
        %516 = vmatpush1.msra.mxu0 0.0
        %517 = vmatprep.subr.mxu0 0.0
        %518 = vmatpush1.msra.mxu0 0.0
        %519 = vmatprep.subr.mxu0 0.0
        %520 = vmatpush1.msra.mxu0 0.0
        %521 = vmatprep.subr.mxu0 0.0
        %522 = vmatpush1.msra.mxu0 0.0
        %523 = vmatprep.subr.mxu0 0.0
        %524 = vmatpush1.msra.mxu0 0.0
        %525 = vmatprep.subr.mxu0 0.0
        %526 = vmatpush1.msra.mxu0 0.0
        %527 = vmatprep.subr.mxu0 0.0
        %528 = vmatpush1.msra.mxu0 0.0
        %529 = vmatprep.subr.mxu0 0.0
        %530 = vmatpush1.msra.mxu0 0.0
        %531 = vmatprep.subr.mxu0 0.0
        %532 = vmatpush1.msra.mxu0 0.0
        %533 = vmatprep.subr.mxu0 0.0
        %534 = vmatpush1.msra.mxu0 0.0
        %535 = vmatprep.subr.mxu0 0.0
        %536 = vmatpush1.msra.mxu0 0.0
        %537 = vmatprep.subr.mxu0 0.0
        %538 = vmatpush1.msra.mxu0 0.0
        %539 = vmatprep.subr.mxu0 0.0
        %540 = vmatpush1.msra.mxu0 0.0
        %541 = vmatprep.subr.mxu0 0.0
        %542 = vmatpush1.msra.mxu0 0.0
        %543 = vmatprep.subr.mxu0 %v431
        %544 = vmatpush1.msra.mxu0 %v430
        %545 = vmatprep.subr.mxu0 %v427
        %546 = vmatpush1.msra.mxu0 %v426
        %547 = vmatprep.subr.mxu0 0.0
        %548 = vmatpush2.msra.mxu0 0.0
        %549 = vmatprep.subr.mxu0 0.0
        %550 = vmatpush2.msra.mxu0 0.0
        %551 = vmatprep.subr.mxu0 0.0
        %552 = vmatpush2.msra.mxu0 0.0
        %553 = vmatprep.subr.mxu0 0.0
        %554 = vmatpush2.msra.mxu0 0.0
        %555 = vmatprep.subr.mxu0 0.0
        %556 = vmatpush2.msra.mxu0 0.0
        %557 = vmatprep.subr.mxu0 0.0
        %558 = vmatpush2.msra.mxu0 0.0
        %559 = vmatprep.subr.mxu0 0.0
        %560 = vmatpush2.msra.mxu0 0.0
        %561 = vmatprep.subr.mxu0 0.0
        %562 = vmatpush2.msra.mxu0 0.0
        %563 = vmatprep.subr.mxu0 0.0
        %564 = vmatpush2.msra.mxu0 0.0
        %565 = vmatprep.subr.mxu0 0.0
        %566 = vmatpush2.msra.mxu0 0.0
        %567 = vmatprep.subr.mxu0 0.0
        %568 = vmatpush2.msra.mxu0 0.0
        %569 = vmatprep.subr.mxu0 0.0
        %570 = vmatpush2.msra.mxu0 0.0
        %571 = vmatprep.subr.mxu0 0.0
        %572 = vmatpush2.msra.mxu0 0.0
        %573 = vmatprep.subr.mxu0 0.0
        %574 = vmatpush2.msra.mxu0 0.0
        %575 = vmatprep.subr.mxu0 0.0
        %576 = vmatpush2.msra.mxu0 0.0
        %577 = vmatprep.subr.mxu0 0.0
        %578 = vmatpush2.msra.mxu0 0.0
        %579 = vmatprep.mubr.f32.mxu0 0.0
        %580 = vmatmul.mubr.f32.gmra.mxu0 %v433
        %v581 = vpop.f32.mrf.mxu0
        %v582 = vadd.f32 0.0, %v581
        %v583 = vpop.f32.mrf.mxu0
        %v584 = vadd.f32 0.0, %v583
        %585 = vmatprep.mubr.f32.mxu0 0.0
        %586 = vmatmul.mubr.f32.gmra.mxu0 %v436
        %v587 = vpop.f32.mrf.mxu0
        %v588 = vadd.f32 0.0, %v587
        %v589 = vpop.f32.mrf.mxu0
        %v590 = vadd.f32 0.0, %v589
        %591 = vdwg.mxu0
        %v593 = vsel %vm326, %v422, 0
        %v596 = vsel %vm326, %v423, 0
        %598 = vmatprep.subr.mxu0 0.0
        %599 = vmatpush1.msra.mxu0 0.0
        %600 = vmatprep.subr.mxu0 0.0
        %601 = vmatpush1.msra.mxu0 0.0
        %602 = vmatprep.subr.mxu0 0.0
        %603 = vmatpush1.msra.mxu0 0.0
        %604 = vmatprep.subr.mxu0 0.0
        %605 = vmatpush1.msra.mxu0 0.0
        %606 = vmatprep.subr.mxu0 0.0
        %607 = vmatpush1.msra.mxu0 0.0
        %608 = vmatprep.subr.mxu0 0.0
        %609 = vmatpush1.msra.mxu0 0.0
        %610 = vmatprep.subr.mxu0 0.0
        %611 = vmatpush1.msra.mxu0 0.0
        %612 = vmatprep.subr.mxu0 0.0
        %613 = vmatpush1.msra.mxu0 0.0
        %614 = vmatprep.subr.mxu0 0.0
        %615 = vmatpush1.msra.mxu0 0.0
        %616 = vmatprep.subr.mxu0 0.0
        %617 = vmatpush1.msra.mxu0 0.0
        %618 = vmatprep.subr.mxu0 0.0
        %619 = vmatpush1.msra.mxu0 0.0
        %620 = vmatprep.subr.mxu0 0.0
        %621 = vmatpush1.msra.mxu0 0.0
        %622 = vmatprep.subr.mxu0 0.0
        %623 = vmatpush1.msra.mxu0 0.0
        %624 = vmatprep.subr.mxu0 0.0
        %625 = vmatpush1.msra.mxu0 0.0
        %626 = vmatprep.subr.mxu0 %v429
        %627 = vmatpush1.msra.mxu0 %v428
        %628 = vmatprep.subr.mxu0 %v425
        %629 = vmatpush1.msra.mxu0 %v424
        %630 = vmatprep.subr.mxu0 0.0
        %631 = vmatpush2.msra.mxu0 0.0
        %632 = vmatprep.subr.mxu0 0.0
        %633 = vmatpush2.msra.mxu0 0.0
        %634 = vmatprep.subr.mxu0 0.0
        %635 = vmatpush2.msra.mxu0 0.0
        %636 = vmatprep.subr.mxu0 0.0
        %637 = vmatpush2.msra.mxu0 0.0
        %638 = vmatprep.subr.mxu0 0.0
        %639 = vmatpush2.msra.mxu0 0.0
        %640 = vmatprep.subr.mxu0 0.0
        %641 = vmatpush2.msra.mxu0 0.0
        %642 = vmatprep.subr.mxu0 0.0
        %643 = vmatpush2.msra.mxu0 0.0
        %644 = vmatprep.subr.mxu0 0.0
        %645 = vmatpush2.msra.mxu0 0.0
        %646 = vmatprep.subr.mxu0 0.0
        %647 = vmatpush2.msra.mxu0 0.0
        %648 = vmatprep.subr.mxu0 0.0
        %649 = vmatpush2.msra.mxu0 0.0
        %650 = vmatprep.subr.mxu0 0.0
        %651 = vmatpush2.msra.mxu0 0.0
        %652 = vmatprep.subr.mxu0 0.0
        %653 = vmatpush2.msra.mxu0 0.0
        %654 = vmatprep.subr.mxu0 0.0
        %655 = vmatpush2.msra.mxu0 0.0
        %656 = vmatprep.subr.mxu0 0.0
        %657 = vmatpush2.msra.mxu0 0.0
        %658 = vmatprep.subr.mxu0 0.0
        %659 = vmatpush2.msra.mxu0 0.0
        %660 = vmatprep.subr.mxu0 0.0
        %661 = vmatpush2.msra.mxu0 0.0
        %662 = vmatprep.mubr.f32.mxu0 0.0
        %663 = vmatmul.mubr.f32.gmra.mxu0 %v593
        %v664 = vpop.f32.mrf.mxu0
        %v665 = vadd.f32 0.0, %v664
        %v666 = vpop.f32.mrf.mxu0
        %v667 = vadd.f32 0.0, %v666
        %668 = vmatprep.mubr.f32.mxu0 0.0
        %669 = vmatmul.mubr.f32.gmra.mxu0 %v596
        %v670 = vpop.f32.mrf.mxu0
        %v671 = vadd.f32 0.0, %v670
        %v672 = vpop.f32.mrf.mxu0
        %v673 = vadd.f32 0.0, %v672
        %674 = vdwg.mxu0
        %675 = vmatprep.subr.mxu0 0.0
        %676 = vmatpush1.msra.mxu0 0.0
        %677 = vmatprep.subr.mxu0 0.0
        %678 = vmatpush1.msra.mxu0 0.0
        %679 = vmatprep.subr.mxu0 0.0
        %680 = vmatpush1.msra.mxu0 0.0
        %681 = vmatprep.subr.mxu0 0.0
        %682 = vmatpush1.msra.mxu0 0.0
        %683 = vmatprep.subr.mxu0 0.0
        %684 = vmatpush1.msra.mxu0 0.0
        %685 = vmatprep.subr.mxu0 0.0
        %686 = vmatpush1.msra.mxu0 0.0
        %687 = vmatprep.subr.mxu0 0.0
        %688 = vmatpush1.msra.mxu0 0.0
        %689 = vmatprep.subr.mxu0 0.0
        %690 = vmatpush1.msra.mxu0 0.0
        %691 = vmatprep.subr.mxu0 0.0
        %692 = vmatpush1.msra.mxu0 0.0
        %693 = vmatprep.subr.mxu0 0.0
        %694 = vmatpush1.msra.mxu0 0.0
        %695 = vmatprep.subr.mxu0 0.0
        %696 = vmatpush1.msra.mxu0 0.0
        %697 = vmatprep.subr.mxu0 0.0
        %698 = vmatpush1.msra.mxu0 0.0
        %699 = vmatprep.subr.mxu0 0.0
        %700 = vmatpush1.msra.mxu0 0.0
        %701 = vmatprep.subr.mxu0 0.0
        %702 = vmatpush1.msra.mxu0 0.0
        %703 = vmatprep.subr.mxu0 %v431
        %704 = vmatpush1.msra.mxu0 %v430
        %705 = vmatprep.subr.mxu0 %v427
        %706 = vmatpush1.msra.mxu0 %v426
        %707 = vmatprep.subr.mxu0 0.0
        %708 = vmatpush2.msra.mxu0 0.0
        %709 = vmatprep.subr.mxu0 0.0
        %710 = vmatpush2.msra.mxu0 0.0
        %711 = vmatprep.subr.mxu0 0.0
        %712 = vmatpush2.msra.mxu0 0.0
        %713 = vmatprep.subr.mxu0 0.0
        %714 = vmatpush2.msra.mxu0 0.0
        %715 = vmatprep.subr.mxu0 0.0
        %716 = vmatpush2.msra.mxu0 0.0
        %717 = vmatprep.subr.mxu0 0.0
        %718 = vmatpush2.msra.mxu0 0.0
        %719 = vmatprep.subr.mxu0 0.0
        %720 = vmatpush2.msra.mxu0 0.0
        %721 = vmatprep.subr.mxu0 0.0
        %722 = vmatpush2.msra.mxu0 0.0
        %723 = vmatprep.subr.mxu0 0.0
        %724 = vmatpush2.msra.mxu0 0.0
        %725 = vmatprep.subr.mxu0 0.0
        %726 = vmatpush2.msra.mxu0 0.0
        %727 = vmatprep.subr.mxu0 0.0
        %728 = vmatpush2.msra.mxu0 0.0
        %729 = vmatprep.subr.mxu0 0.0
        %730 = vmatpush2.msra.mxu0 0.0
        %731 = vmatprep.subr.mxu0 0.0
        %732 = vmatpush2.msra.mxu0 0.0
        %733 = vmatprep.subr.mxu0 0.0
        %734 = vmatpush2.msra.mxu0 0.0
        %735 = vmatprep.subr.mxu0 0.0
        %736 = vmatpush2.msra.mxu0 0.0
        %737 = vmatprep.subr.mxu0 0.0
        %738 = vmatpush2.msra.mxu0 0.0
        %739 = vmatprep.mubr.f32.mxu0 0.0
        %740 = vmatmul.mubr.f32.gmra.mxu0 %v593
        %v741 = vpop.f32.mrf.mxu0
        %v742 = vadd.f32 0.0, %v741
        %v743 = vpop.f32.mrf.mxu0
        %v744 = vadd.f32 0.0, %v743
        %745 = vmatprep.mubr.f32.mxu0 0.0
        %746 = vmatmul.mubr.f32.gmra.mxu0 %v596
        %v747 = vpop.f32.mrf.mxu0
        %v748 = vadd.f32 0.0, %v747
        %v749 = vpop.f32.mrf.mxu0
        %v750 = vadd.f32 0.0, %v749
        %751 = vdwg.mxu0
        %v752 = vld [vmem:[%s5] sm:$0xff]
        %v753 = vlaneseq
        %v754 = vshrl.u32 %v753, 7
        %v755 = vsub.s32 0, %v754
        %v756 = vrot.slane %v752, %v755
        %v757 = vmul.f32 %v505, %v756
        %v758 = vmul.f32 %v507, %v756
        %v759 = vmul.f32 %v582, %v756
        %v760 = vmul.f32 %v584, %v756
        %v761 = vmul.f32 %v511, %v756
        %v762 = vmul.f32 %v513, %v756
        %v763 = vmul.f32 %v588, %v756
        %v764 = vmul.f32 %v590, %v756
        %v765 = vlaneseq
        %v766 = vshrl.u32 %v765, 7
        %v767 = vsub.s32 1, %v766
        %v768 = vrot.slane %v752, %v767
        %v769 = vmul.f32 %v665, %v768
        %v770 = vmul.f32 %v667, %v768
        %v771 = vmul.f32 %v742, %v768
        %v772 = vmul.f32 %v744, %v768
        %v773 = vmul.f32 %v671, %v768
        %v774 = vmul.f32 %v673, %v768
        %v775 = vmul.f32 %v748, %v768
        %v776 = vmul.f32 %v750, %v768
        %v777 = vsub.f32 %v757, %v769
        %v778 = vsub.f32 %v758, %v770
        %v779 = vsub.f32 %v759, %v771
        %v780 = vsub.f32 %v760, %v772
        %v781 = vsub.f32 %v761, %v773
        %v782 = vsub.f32 %v762, %v774
        %v783 = vsub.f32 %v763, %v775
        %v784 = vsub.f32 %v764, %v776
        %v785 = vlaneseq
        %v786 = vshrl.u32 %v785, 7
        %v787 = vsub.s32 2, %v786
        %v788 = vrot.slane %v752, %v787
        %v789 = vadd.f32 %v777, %v788
        %v790 = vadd.f32 %v778, %v788
        %v791 = vadd.f32 %v779, %v788
        %v792 = vadd.f32 %v780, %v788
        %v793 = vadd.f32 %v781, %v788
        %v794 = vadd.f32 %v782, %v788
        %v795 = vadd.f32 %v783, %v788
        %v796 = vadd.f32 %v784, %v788
        %v797 = vmax.f32 %v789, 0.0
        %v798 = vmax.f32 %v790, 0.0
        %v799 = vmax.f32 %v791, 0.0
        %v800 = vmax.f32 %v792, 0.0
        %v801 = vmax.f32 %v793, 0.0
        %v802 = vmax.f32 %v794, 0.0
        %v803 = vmax.f32 %v795, 0.0
        %v804 = vmax.f32 %v796, 0.0
        %v805 = vmul.f32 %v665, %v756
        %v806 = vmul.f32 %v667, %v756
        %v807 = vmul.f32 %v742, %v756
        %v808 = vmul.f32 %v744, %v756
        %v809 = vmul.f32 %v671, %v756
        %v810 = vmul.f32 %v673, %v756
        %v811 = vmul.f32 %v748, %v756
        %v812 = vmul.f32 %v750, %v756
        %v813 = vmul.f32 %v505, %v768
        %v814 = vmul.f32 %v507, %v768
        %v815 = vmul.f32 %v582, %v768
        %v816 = vmul.f32 %v584, %v768
        %v817 = vmul.f32 %v511, %v768
        %v818 = vmul.f32 %v513, %v768
        %v819 = vmul.f32 %v588, %v768
        %v820 = vmul.f32 %v590, %v768
        %v821 = vadd.f32 %v805, %v813
        %v822 = vadd.f32 %v806, %v814
        %v823 = vadd.f32 %v807, %v815
        %v824 = vadd.f32 %v808, %v816
        %v825 = vadd.f32 %v809, %v817
        %v826 = vadd.f32 %v810, %v818
        %v827 = vadd.f32 %v811, %v819
        %v828 = vadd.f32 %v812, %v820
        %v829 = vlaneseq
        %v830 = vshrl.u32 %v829, 7
        %v831 = vsub.s32 3, %v830
        %v832 = vrot.slane %v752, %v831
        %v833 = vadd.f32 %v821, %v832
        %v834 = vadd.f32 %v822, %v832
        %v835 = vadd.f32 %v823, %v832
        %v836 = vadd.f32 %v824, %v832
        %v837 = vadd.f32 %v825, %v832
        %v838 = vadd.f32 %v826, %v832
        %v839 = vadd.f32 %v827, %v832
        %v840 = vadd.f32 %v828, %v832
        %v841 = vmax.f32 %v833, 0.0
        %v842 = vmax.f32 %v834, 0.0
        %v843 = vmax.f32 %v835, 0.0
        %v844 = vmax.f32 %v836, 0.0
        %v845 = vmax.f32 %v837, 0.0
        %v846 = vmax.f32 %v838, 0.0
        %v847 = vmax.f32 %v839, 0.0
        %v848 = vmax.f32 %v840, 0.0
        %849 = vmatprep.subr.mxu0 0.0
        %850 = vmatpush1.msra.mxu0 0.0
        %851 = vmatprep.subr.mxu0 0.0
        %852 = vmatpush1.msra.mxu0 0.0
        %853 = vmatprep.subr.mxu0 0.0
        %854 = vmatpush1.msra.mxu0 0.0
        %855 = vmatprep.subr.mxu0 0.0
        %856 = vmatpush1.msra.mxu0 0.0
        %857 = vmatprep.subr.mxu0 0.0
        %858 = vmatpush1.msra.mxu0 0.0
        %859 = vmatprep.subr.mxu0 0.0
        %860 = vmatpush1.msra.mxu0 0.0
        %861 = vmatprep.subr.mxu0 0.0
        %862 = vmatpush1.msra.mxu0 0.0
        %863 = vmatprep.subr.mxu0 0.0
        %864 = vmatpush1.msra.mxu0 0.0
        %865 = vmatprep.subr.mxu0 0.0
        %866 = vmatpush1.msra.mxu0 0.0
        %867 = vmatprep.subr.mxu0 0.0
        %868 = vmatpush1.msra.mxu0 0.0
        %869 = vmatprep.subr.mxu0 0.0
        %870 = vmatpush1.msra.mxu0 0.0
        %871 = vmatprep.subr.mxu0 0.0
        %872 = vmatpush1.msra.mxu0 0.0
        %873 = vmatprep.subr.mxu0 0.0
        %874 = vmatpush1.msra.mxu0 0.0
        %875 = vmatprep.subr.mxu0 0.0
        %876 = vmatpush1.msra.mxu0 0.0
        %877 = vmatprep.subr.mxu0 %v846
        %878 = vmatpush1.msra.mxu0 %v845
        %879 = vmatprep.subr.mxu0 %v842
        %880 = vmatpush1.msra.mxu0 %v841
        %881 = vmatprep.subr.mxu0 0.0
        %882 = vmatpush2.msra.mxu0 0.0
        %883 = vmatprep.subr.mxu0 0.0
        %884 = vmatpush2.msra.mxu0 0.0
        %885 = vmatprep.subr.mxu0 0.0
        %886 = vmatpush2.msra.mxu0 0.0
        %887 = vmatprep.subr.mxu0 0.0
        %888 = vmatpush2.msra.mxu0 0.0
        %889 = vmatprep.subr.mxu0 0.0
        %890 = vmatpush2.msra.mxu0 0.0
        %891 = vmatprep.subr.mxu0 0.0
        %892 = vmatpush2.msra.mxu0 0.0
        %893 = vmatprep.subr.mxu0 0.0
        %894 = vmatpush2.msra.mxu0 0.0
        %895 = vmatprep.subr.mxu0 0.0
        %896 = vmatpush2.msra.mxu0 0.0
        %897 = vmatprep.subr.mxu0 0.0
        %898 = vmatpush2.msra.mxu0 0.0
        %899 = vmatprep.subr.mxu0 0.0
        %900 = vmatpush2.msra.mxu0 0.0
        %901 = vmatprep.subr.mxu0 0.0
        %902 = vmatpush2.msra.mxu0 0.0
        %903 = vmatprep.subr.mxu0 0.0
        %904 = vmatpush2.msra.mxu0 0.0
        %905 = vmatprep.subr.mxu0 0.0
        %906 = vmatpush2.msra.mxu0 0.0
        %907 = vmatprep.subr.mxu0 0.0
        %908 = vmatpush2.msra.mxu0 0.0
        %909 = vmatprep.subr.mxu0 0.0
        %910 = vmatpush2.msra.mxu0 0.0
        %911 = vmatprep.subr.mxu0 0.0
        %912 = vmatpush2.msra.mxu0 0.0
        %913 = vmatprep.mubr.f32.mxu0 0.0
        %914 = vmatmul.mubr.f32.gmra.mxu0 %v593
        %v915 = vpop.f32.mrf.mxu0
        %v916 = vadd.f32 0.0, %v915
        %v917 = vpop.f32.mrf.mxu0
        %v918 = vadd.f32 0.0, %v917
        %919 = vmatprep.mubr.f32.mxu0 0.0
        %920 = vmatmul.mubr.f32.gmra.mxu0 %v596
        %v921 = vpop.f32.mrf.mxu0
        %v922 = vadd.f32 0.0, %v921
        %v923 = vpop.f32.mrf.mxu0
        %v924 = vadd.f32 0.0, %v923
        %925 = vdwg.mxu0
        %926 = vmatprep.subr.mxu0 0.0
        %927 = vmatpush1.msra.mxu0 0.0
        %928 = vmatprep.subr.mxu0 0.0
        %929 = vmatpush1.msra.mxu0 0.0
        %930 = vmatprep.subr.mxu0 0.0
        %931 = vmatpush1.msra.mxu0 0.0
        %932 = vmatprep.subr.mxu0 0.0
        %933 = vmatpush1.msra.mxu0 0.0
        %934 = vmatprep.subr.mxu0 0.0
        %935 = vmatpush1.msra.mxu0 0.0
        %936 = vmatprep.subr.mxu0 0.0
        %937 = vmatpush1.msra.mxu0 0.0
        %938 = vmatprep.subr.mxu0 0.0
        %939 = vmatpush1.msra.mxu0 0.0
        %940 = vmatprep.subr.mxu0 0.0
        %941 = vmatpush1.msra.mxu0 0.0
        %942 = vmatprep.subr.mxu0 0.0
        %943 = vmatpush1.msra.mxu0 0.0
        %944 = vmatprep.subr.mxu0 0.0
        %945 = vmatpush1.msra.mxu0 0.0
        %946 = vmatprep.subr.mxu0 0.0
        %947 = vmatpush1.msra.mxu0 0.0
        %948 = vmatprep.subr.mxu0 0.0
        %949 = vmatpush1.msra.mxu0 0.0
        %950 = vmatprep.subr.mxu0 0.0
        %951 = vmatpush1.msra.mxu0 0.0
        %952 = vmatprep.subr.mxu0 0.0
        %953 = vmatpush1.msra.mxu0 0.0
        %954 = vmatprep.subr.mxu0 %v848
        %955 = vmatpush1.msra.mxu0 %v847
        %956 = vmatprep.subr.mxu0 %v844
        %957 = vmatpush1.msra.mxu0 %v843
        %958 = vmatprep.subr.mxu0 0.0
        %959 = vmatpush2.msra.mxu0 0.0
        %960 = vmatprep.subr.mxu0 0.0
        %961 = vmatpush2.msra.mxu0 0.0
        %962 = vmatprep.subr.mxu0 0.0
        %963 = vmatpush2.msra.mxu0 0.0
        %964 = vmatprep.subr.mxu0 0.0
        %965 = vmatpush2.msra.mxu0 0.0
        %966 = vmatprep.subr.mxu0 0.0
        %967 = vmatpush2.msra.mxu0 0.0
        %968 = vmatprep.subr.mxu0 0.0
        %969 = vmatpush2.msra.mxu0 0.0
        %970 = vmatprep.subr.mxu0 0.0
        %971 = vmatpush2.msra.mxu0 0.0
        %972 = vmatprep.subr.mxu0 0.0
        %973 = vmatpush2.msra.mxu0 0.0
        %974 = vmatprep.subr.mxu0 0.0
        %975 = vmatpush2.msra.mxu0 0.0
        %976 = vmatprep.subr.mxu0 0.0
        %977 = vmatpush2.msra.mxu0 0.0
        %978 = vmatprep.subr.mxu0 0.0
        %979 = vmatpush2.msra.mxu0 0.0
        %980 = vmatprep.subr.mxu0 0.0
        %981 = vmatpush2.msra.mxu0 0.0
        %982 = vmatprep.subr.mxu0 0.0
        %983 = vmatpush2.msra.mxu0 0.0
        %984 = vmatprep.subr.mxu0 0.0
        %985 = vmatpush2.msra.mxu0 0.0
        %986 = vmatprep.subr.mxu0 0.0
        %987 = vmatpush2.msra.mxu0 0.0
        %988 = vmatprep.subr.mxu0 0.0
        %989 = vmatpush2.msra.mxu0 0.0
        %990 = vmatprep.mubr.f32.mxu0 0.0
        %991 = vmatmul.mubr.f32.gmra.mxu0 %v593
        %v992 = vpop.f32.mrf.mxu0
        %v993 = vadd.f32 0.0, %v992
        %v994 = vpop.f32.mrf.mxu0
        %v995 = vadd.f32 0.0, %v994
        %996 = vmatprep.mubr.f32.mxu0 0.0
        %997 = vmatmul.mubr.f32.gmra.mxu0 %v596
        %v998 = vpop.f32.mrf.mxu0
        %v999 = vadd.f32 0.0, %v998
        %v1000 = vpop.f32.mrf.mxu0
        %v1001 = vadd.f32 0.0, %v1000
        %1002 = vdwg.mxu0
        %1003 = vmatprep.subr.mxu0 0.0
        %1004 = vmatpush1.msra.mxu0 0.0
        %1005 = vmatprep.subr.mxu0 0.0
        %1006 = vmatpush1.msra.mxu0 0.0
        %1007 = vmatprep.subr.mxu0 0.0
        %1008 = vmatpush1.msra.mxu0 0.0
        %1009 = vmatprep.subr.mxu0 0.0
        %1010 = vmatpush1.msra.mxu0 0.0
        %1011 = vmatprep.subr.mxu0 0.0
        %1012 = vmatpush1.msra.mxu0 0.0
        %1013 = vmatprep.subr.mxu0 0.0
        %1014 = vmatpush1.msra.mxu0 0.0
        %1015 = vmatprep.subr.mxu0 0.0
        %1016 = vmatpush1.msra.mxu0 0.0
        %1017 = vmatprep.subr.mxu0 0.0
        %1018 = vmatpush1.msra.mxu0 0.0
        %1019 = vmatprep.subr.mxu0 0.0
        %1020 = vmatpush1.msra.mxu0 0.0
        %1021 = vmatprep.subr.mxu0 0.0
        %1022 = vmatpush1.msra.mxu0 0.0
        %1023 = vmatprep.subr.mxu0 0.0
        %1024 = vmatpush1.msra.mxu0 0.0
        %1025 = vmatprep.subr.mxu0 0.0
        %1026 = vmatpush1.msra.mxu0 0.0
        %1027 = vmatprep.subr.mxu0 0.0
        %1028 = vmatpush1.msra.mxu0 0.0
        %1029 = vmatprep.subr.mxu0 0.0
        %1030 = vmatpush1.msra.mxu0 0.0
        %1031 = vmatprep.subr.mxu0 %v802
        %1032 = vmatpush1.msra.mxu0 %v801
        %1033 = vmatprep.subr.mxu0 %v798
        %1034 = vmatpush1.msra.mxu0 %v797
        %1035 = vmatprep.subr.mxu0 0.0
        %1036 = vmatpush2.msra.mxu0 0.0
        %1037 = vmatprep.subr.mxu0 0.0
        %1038 = vmatpush2.msra.mxu0 0.0
        %1039 = vmatprep.subr.mxu0 0.0
        %1040 = vmatpush2.msra.mxu0 0.0
        %1041 = vmatprep.subr.mxu0 0.0
        %1042 = vmatpush2.msra.mxu0 0.0
        %1043 = vmatprep.subr.mxu0 0.0
        %1044 = vmatpush2.msra.mxu0 0.0
        %1045 = vmatprep.subr.mxu0 0.0
        %1046 = vmatpush2.msra.mxu0 0.0
        %1047 = vmatprep.subr.mxu0 0.0
        %1048 = vmatpush2.msra.mxu0 0.0
        %1049 = vmatprep.subr.mxu0 0.0
        %1050 = vmatpush2.msra.mxu0 0.0
        %1051 = vmatprep.subr.mxu0 0.0
        %1052 = vmatpush2.msra.mxu0 0.0
        %1053 = vmatprep.subr.mxu0 0.0
        %1054 = vmatpush2.msra.mxu0 0.0
        %1055 = vmatprep.subr.mxu0 0.0
        %1056 = vmatpush2.msra.mxu0 0.0
        %1057 = vmatprep.subr.mxu0 0.0
        %1058 = vmatpush2.msra.mxu0 0.0
        %1059 = vmatprep.subr.mxu0 0.0
        %1060 = vmatpush2.msra.mxu0 0.0
        %1061 = vmatprep.subr.mxu0 0.0
        %1062 = vmatpush2.msra.mxu0 0.0
        %1063 = vmatprep.subr.mxu0 0.0
        %1064 = vmatpush2.msra.mxu0 0.0
        %1065 = vmatprep.subr.mxu0 0.0
        %1066 = vmatpush2.msra.mxu0 0.0
        %1067 = vmatprep.mubr.f32.mxu0 0.0
        %1068 = vmatmul.mubr.f32.gmra.mxu0 %v433
        %v1069 = vpop.f32.mrf.mxu0
        %v1070 = vadd.f32 %v916, %v1069
        %v1071 = vpop.f32.mrf.mxu0
        %v1072 = vadd.f32 %v918, %v1071
        %1073 = vmatprep.mubr.f32.mxu0 0.0
        %1074 = vmatmul.mubr.f32.gmra.mxu0 %v436
        %v1075 = vpop.f32.mrf.mxu0
        %v1076 = vadd.f32 %v922, %v1075
        %v1077 = vpop.f32.mrf.mxu0
        %v1078 = vadd.f32 %v924, %v1077
        %1079 = vdwg.mxu0
        %1080 = vmatprep.subr.mxu0 0.0
        %1081 = vmatpush1.msra.mxu0 0.0
        %1082 = vmatprep.subr.mxu0 0.0
        %1083 = vmatpush1.msra.mxu0 0.0
        %1084 = vmatprep.subr.mxu0 0.0
        %1085 = vmatpush1.msra.mxu0 0.0
        %1086 = vmatprep.subr.mxu0 0.0
        %1087 = vmatpush1.msra.mxu0 0.0
        %1088 = vmatprep.subr.mxu0 0.0
        %1089 = vmatpush1.msra.mxu0 0.0
        %1090 = vmatprep.subr.mxu0 0.0
        %1091 = vmatpush1.msra.mxu0 0.0
        %1092 = vmatprep.subr.mxu0 0.0
        %1093 = vmatpush1.msra.mxu0 0.0
        %1094 = vmatprep.subr.mxu0 0.0
        %1095 = vmatpush1.msra.mxu0 0.0
        %1096 = vmatprep.subr.mxu0 0.0
        %1097 = vmatpush1.msra.mxu0 0.0
        %1098 = vmatprep.subr.mxu0 0.0
        %1099 = vmatpush1.msra.mxu0 0.0
        %1100 = vmatprep.subr.mxu0 0.0
        %1101 = vmatpush1.msra.mxu0 0.0
        %1102 = vmatprep.subr.mxu0 0.0
        %1103 = vmatpush1.msra.mxu0 0.0
        %1104 = vmatprep.subr.mxu0 0.0
        %1105 = vmatpush1.msra.mxu0 0.0
        %1106 = vmatprep.subr.mxu0 0.0
        %1107 = vmatpush1.msra.mxu0 0.0
        %1108 = vmatprep.subr.mxu0 %v804
        %1109 = vmatpush1.msra.mxu0 %v803
        %1110 = vmatprep.subr.mxu0 %v800
        %1111 = vmatpush1.msra.mxu0 %v799
        %1112 = vmatprep.subr.mxu0 0.0
        %1113 = vmatpush2.msra.mxu0 0.0
        %1114 = vmatprep.subr.mxu0 0.0
        %1115 = vmatpush2.msra.mxu0 0.0
        %1116 = vmatprep.subr.mxu0 0.0
        %1117 = vmatpush2.msra.mxu0 0.0
        %1118 = vmatprep.subr.mxu0 0.0
        %1119 = vmatpush2.msra.mxu0 0.0
        %1120 = vmatprep.subr.mxu0 0.0
        %1121 = vmatpush2.msra.mxu0 0.0
        %1122 = vmatprep.subr.mxu0 0.0
        %1123 = vmatpush2.msra.mxu0 0.0
        %1124 = vmatprep.subr.mxu0 0.0
        %1125 = vmatpush2.msra.mxu0 0.0
        %1126 = vmatprep.subr.mxu0 0.0
        %1127 = vmatpush2.msra.mxu0 0.0
        %1128 = vmatprep.subr.mxu0 0.0
        %1129 = vmatpush2.msra.mxu0 0.0
        %1130 = vmatprep.subr.mxu0 0.0
        %1131 = vmatpush2.msra.mxu0 0.0
        %1132 = vmatprep.subr.mxu0 0.0
        %1133 = vmatpush2.msra.mxu0 0.0
        %1134 = vmatprep.subr.mxu0 0.0
        %1135 = vmatpush2.msra.mxu0 0.0
        %1136 = vmatprep.subr.mxu0 0.0
        %1137 = vmatpush2.msra.mxu0 0.0
        %1138 = vmatprep.subr.mxu0 0.0
        %1139 = vmatpush2.msra.mxu0 0.0
        %1140 = vmatprep.subr.mxu0 0.0
        %1141 = vmatpush2.msra.mxu0 0.0
        %1142 = vmatprep.subr.mxu0 0.0
        %1143 = vmatpush2.msra.mxu0 0.0
        %1144 = vmatprep.mubr.f32.mxu0 0.0
        %1145 = vmatmul.mubr.f32.gmra.mxu0 %v433
        %v1146 = vpop.f32.mrf.mxu0
        %v1147 = vadd.f32 %v993, %v1146
        %v1148 = vpop.f32.mrf.mxu0
        %v1149 = vadd.f32 %v995, %v1148
        %1150 = vmatprep.mubr.f32.mxu0 0.0
        %1151 = vmatmul.mubr.f32.gmra.mxu0 %v436
        %v1152 = vpop.f32.mrf.mxu0
        %v1153 = vadd.f32 %v999, %v1152
        %v1154 = vpop.f32.mrf.mxu0
        %v1155 = vadd.f32 %v1001, %v1154
        %1156 = vdwg.mxu0
        %v1157 = vld [vmem:[%s6] sm:$0x1]
        %v1158 = vpack.c.bf16 %v1076, %v1070
        %v1159 = vld [vmem:[%s2] sm:$0xf]
        %v1160 = vld [vmem:[%s2 + $0x4] sm:$0xf]
        %v1161 = vld [vmem:[%s2 + $0x8] sm:$0xf]
        %v1162 = vld [vmem:[%s2 + $0xc] sm:$0xf]
        %v1163 = vld [vmem:[%s2 + $0x10] sm:$0xf]
        %v1164 = vld [vmem:[%s2 + $0x14] sm:$0xf]
        %v1165 = vld [vmem:[%s2 + $0x18] sm:$0xf]
        %v1166 = vld [vmem:[%s2 + $0x1c] sm:$0xf]
        %v1167 = vld [vmem:[%s2 + $0x20] sm:$0xf]
        %v1168 = vld [vmem:[%s2 + $0x24] sm:$0xf]
        %v1169 = vld [vmem:[%s2 + $0x28] sm:$0xf]
        %v1170 = vld [vmem:[%s2 + $0x2c] sm:$0xf]
        %v1171 = vld [vmem:[%s2 + $0x30] sm:$0xf]
        %v1172 = vld [vmem:[%s2 + $0x34] sm:$0xf]
        %v1173 = vld [vmem:[%s2 + $0x38] sm:$0xf]
        %v1174 = vld [vmem:[%s2 + $0x3c] sm:$0xf]
        %v1176 = vlaneseq
        %v1177 = vshrl.u32 %v1176, 7
        %v1178 = vsub.s32 0, %v1177
        %v1179 = vrot.slane %v1157, %v1178
        %v1197 = vunpack.c.l.b16 %v1159
        %v1198 = vunpack.c.l.b16 %v1160
        %v1199 = vunpack.c.l.b16 %v1161
        %v1200 = vunpack.c.l.b16 %v1162
        %v1201 = vunpack.c.l.b16 %v1163
        %v1202 = vunpack.c.l.b16 %v1164
        %v1203 = vunpack.c.l.b16 %v1165
        %v1204 = vunpack.c.l.b16 %v1166
        %v1205 = vunpack.c.l.b16 %v1167
        %v1206 = vunpack.c.l.b16 %v1168
        %v1207 = vunpack.c.l.b16 %v1169
        %v1208 = vunpack.c.l.b16 %v1170
        %v1209 = vunpack.c.l.b16 %v1171
        %v1210 = vunpack.c.l.b16 %v1172
        %v1211 = vunpack.c.l.b16 %v1173
        %v1212 = vunpack.c.l.b16 %v1174
        %v1213 = vpack.c.b16 %v1198, %v1197
        %v1214 = vpack.c.b16 %v1200, %v1199
        %v1215 = vpack.c.b16 %v1202, %v1201
        %v1216 = vpack.c.b16 %v1204, %v1203
        %v1217 = vpack.c.b16 %v1206, %v1205
        %v1218 = vpack.c.b16 %v1208, %v1207
        %v1219 = vpack.c.b16 %v1210, %v1209
        %v1220 = vpack.c.b16 %v1212, %v1211
        %1229 = vmatprep.subr.bf16.mxu0 0
        %1230 = vmatpush1.bf16.msra.mxu0 %v1220
        %1231 = vmatprep.subr.bf16.mxu0 0
        %1232 = vmatpush1.bf16.msra.mxu0 %v1219
        %1233 = vmatprep.subr.bf16.mxu0 0
        %1234 = vmatpush1.bf16.msra.mxu0 %v1218
        %1235 = vmatprep.subr.bf16.mxu0 0
        %1236 = vmatpush1.bf16.msra.mxu0 %v1217
        %1237 = vmatprep.subr.bf16.mxu0 0
        %1238 = vmatpush1.bf16.msra.mxu0 %v1216
        %1239 = vmatprep.subr.bf16.mxu0 0
        %1240 = vmatpush1.bf16.msra.mxu0 %v1215
        %1241 = vmatprep.subr.bf16.mxu0 0
        %1242 = vmatpush1.bf16.msra.mxu0 %v1214
        %1243 = vmatprep.subr.bf16.mxu0 0
        %1244 = vmatpush1.bf16.msra.mxu0 %v1213
        %1245 = vmatprep.subr.bf16.mxu0 0
        %1246 = vmatpush2.bf16.msra.mxu0 0
        %1247 = vmatprep.subr.bf16.mxu0 0
        %1248 = vmatpush2.bf16.msra.mxu0 0
        %1249 = vmatprep.subr.bf16.mxu0 0
        %1250 = vmatpush2.bf16.msra.mxu0 0
        %1251 = vmatprep.subr.bf16.mxu0 0
        %1252 = vmatpush2.bf16.msra.mxu0 0
        %1253 = vmatprep.subr.bf16.mxu0 0
        %1254 = vmatpush2.bf16.msra.mxu0 0
        %1255 = vmatprep.subr.bf16.mxu0 0
        %1256 = vmatpush2.bf16.msra.mxu0 0
        %1257 = vmatprep.subr.bf16.mxu0 0
        %1258 = vmatpush2.bf16.msra.mxu0 0
        %1259 = vmatprep.subr.bf16.mxu0 0
        %1260 = vmatpush2.bf16.msra.mxu0 0
        %1261 = vmatprep.mubr.bf16.mxu0 0
        %1262 = vmatmul.mubr.bf16.gmra.mxu0 %v1158
        %v1263 = vpop.f32.mrf.mxu0
        %v1264 = vadd.f32 %v1179, %v1263
        %v1265 = vpop.f32.mrf.mxu0
        %v1266 = vpop.f32.mrf.mxu0
        %v1267 = vadd.f32 %v1179, %v1266
        %v1268 = vpop.f32.mrf.mxu0
        %1269 = vdwg.mxu0
        %1270 = vst.msk [vmem:[%s297] sm:$0xff] %vm326, %v1264
        %1271 = vst.msk [vmem:[%s297 + $0x8] sm:$0xff] %vm326, %v1267
        %v1272 = vpack.c.bf16 %v1078, %v1072
        %v1273 = vld [vmem:[%s2] sm:$0xf]
        %v1274 = vld [vmem:[%s2 + $0x4] sm:$0xf]
        %v1275 = vld [vmem:[%s2 + $0x8] sm:$0xf]
        %v1276 = vld [vmem:[%s2 + $0xc] sm:$0xf]
        %v1277 = vld [vmem:[%s2 + $0x10] sm:$0xf]
        %v1278 = vld [vmem:[%s2 + $0x14] sm:$0xf]
        %v1279 = vld [vmem:[%s2 + $0x18] sm:$0xf]
        %v1280 = vld [vmem:[%s2 + $0x1c] sm:$0xf]
        %v1281 = vld [vmem:[%s2 + $0x20] sm:$0xf]
        %v1282 = vld [vmem:[%s2 + $0x24] sm:$0xf]
        %v1283 = vld [vmem:[%s2 + $0x28] sm:$0xf]
        %v1284 = vld [vmem:[%s2 + $0x2c] sm:$0xf]
        %v1285 = vld [vmem:[%s2 + $0x30] sm:$0xf]
        %v1286 = vld [vmem:[%s2 + $0x34] sm:$0xf]
        %v1287 = vld [vmem:[%s2 + $0x38] sm:$0xf]
        %v1288 = vld [vmem:[%s2 + $0x3c] sm:$0xf]
        %v1305 = vunpack.c.l.b16 %v1273
        %v1306 = vunpack.c.l.b16 %v1274
        %v1307 = vunpack.c.l.b16 %v1275
        %v1308 = vunpack.c.l.b16 %v1276
        %v1309 = vunpack.c.l.b16 %v1277
        %v1310 = vunpack.c.l.b16 %v1278
        %v1311 = vunpack.c.l.b16 %v1279
        %v1312 = vunpack.c.l.b16 %v1280
        %v1313 = vunpack.c.l.b16 %v1281
        %v1314 = vunpack.c.l.b16 %v1282
        %v1315 = vunpack.c.l.b16 %v1283
        %v1316 = vunpack.c.l.b16 %v1284
        %v1317 = vunpack.c.l.b16 %v1285
        %v1318 = vunpack.c.l.b16 %v1286
        %v1319 = vunpack.c.l.b16 %v1287
        %v1320 = vunpack.c.l.b16 %v1288
        %v1321 = vpack.c.b16 %v1306, %v1305
        %v1322 = vpack.c.b16 %v1308, %v1307
        %v1323 = vpack.c.b16 %v1310, %v1309
        %v1324 = vpack.c.b16 %v1312, %v1311
        %v1325 = vpack.c.b16 %v1314, %v1313
        %v1326 = vpack.c.b16 %v1316, %v1315
        %v1327 = vpack.c.b16 %v1318, %v1317
        %v1328 = vpack.c.b16 %v1320, %v1319
        %1337 = vmatprep.subr.bf16.mxu0 0
        %1338 = vmatpush1.bf16.msra.mxu0 %v1328
        %1339 = vmatprep.subr.bf16.mxu0 0
        %1340 = vmatpush1.bf16.msra.mxu0 %v1327
        %1341 = vmatprep.subr.bf16.mxu0 0
        %1342 = vmatpush1.bf16.msra.mxu0 %v1326
        %1343 = vmatprep.subr.bf16.mxu0 0
        %1344 = vmatpush1.bf16.msra.mxu0 %v1325
        %1345 = vmatprep.subr.bf16.mxu0 0
        %1346 = vmatpush1.bf16.msra.mxu0 %v1324
        %1347 = vmatprep.subr.bf16.mxu0 0
        %1348 = vmatpush1.bf16.msra.mxu0 %v1323
        %1349 = vmatprep.subr.bf16.mxu0 0
        %1350 = vmatpush1.bf16.msra.mxu0 %v1322
        %1351 = vmatprep.subr.bf16.mxu0 0
        %1352 = vmatpush1.bf16.msra.mxu0 %v1321
        %1353 = vmatprep.subr.bf16.mxu0 0
        %1354 = vmatpush2.bf16.msra.mxu0 0
        %1355 = vmatprep.subr.bf16.mxu0 0
        %1356 = vmatpush2.bf16.msra.mxu0 0
        %1357 = vmatprep.subr.bf16.mxu0 0
        %1358 = vmatpush2.bf16.msra.mxu0 0
        %1359 = vmatprep.subr.bf16.mxu0 0
        %1360 = vmatpush2.bf16.msra.mxu0 0
        %1361 = vmatprep.subr.bf16.mxu0 0
        %1362 = vmatpush2.bf16.msra.mxu0 0
        %1363 = vmatprep.subr.bf16.mxu0 0
        %1364 = vmatpush2.bf16.msra.mxu0 0
        %1365 = vmatprep.subr.bf16.mxu0 0
        %1366 = vmatpush2.bf16.msra.mxu0 0
        %1367 = vmatprep.subr.bf16.mxu0 0
        %1368 = vmatpush2.bf16.msra.mxu0 0
        %1369 = vmatprep.mubr.bf16.mxu0 0
        %1370 = vmatmul.mubr.bf16.gmra.mxu0 %v1272
        %v1371 = vpop.f32.mrf.mxu0
        %v1372 = vadd.f32 %v1179, %v1371
        %v1373 = vpop.f32.mrf.mxu0
        %v1374 = vpop.f32.mrf.mxu0
        %v1375 = vadd.f32 %v1179, %v1374
        %v1376 = vpop.f32.mrf.mxu0
        %1377 = vdwg.mxu0
        %s1378 = scalar_lea.vmem %s297, 16 [#allocation6]
        %1379 = vst.msk [vmem:[%s1378] sm:$0xff] %vm326, %v1372
        %1380 = vst.msk [vmem:[%s1378 + $0x8] sm:$0xff] %vm326, %v1375
        %v1381 = vpack.c.bf16 %v1153, %v1147
        %v1382 = vld [vmem:[%s2] sm:$0xf]
        %v1383 = vld [vmem:[%s2 + $0x4] sm:$0xf]
        %v1384 = vld [vmem:[%s2 + $0x8] sm:$0xf]
        %v1385 = vld [vmem:[%s2 + $0xc] sm:$0xf]
        %v1386 = vld [vmem:[%s2 + $0x10] sm:$0xf]
        %v1387 = vld [vmem:[%s2 + $0x14] sm:$0xf]
        %v1388 = vld [vmem:[%s2 + $0x18] sm:$0xf]
        %v1389 = vld [vmem:[%s2 + $0x1c] sm:$0xf]
        %v1390 = vld [vmem:[%s2 + $0x20] sm:$0xf]
        %v1391 = vld [vmem:[%s2 + $0x24] sm:$0xf]
        %v1392 = vld [vmem:[%s2 + $0x28] sm:$0xf]
        %v1393 = vld [vmem:[%s2 + $0x2c] sm:$0xf]
        %v1394 = vld [vmem:[%s2 + $0x30] sm:$0xf]
        %v1395 = vld [vmem:[%s2 + $0x34] sm:$0xf]
        %v1396 = vld [vmem:[%s2 + $0x38] sm:$0xf]
        %v1397 = vld [vmem:[%s2 + $0x3c] sm:$0xf]
        %v1414 = vunpack.c.l.b16 %v1382
        %v1415 = vunpack.c.l.b16 %v1383
        %v1416 = vunpack.c.l.b16 %v1384
        %v1417 = vunpack.c.l.b16 %v1385
        %v1418 = vunpack.c.l.b16 %v1386
        %v1419 = vunpack.c.l.b16 %v1387
        %v1420 = vunpack.c.l.b16 %v1388
        %v1421 = vunpack.c.l.b16 %v1389
        %v1422 = vunpack.c.l.b16 %v1390
        %v1423 = vunpack.c.l.b16 %v1391
        %v1424 = vunpack.c.l.b16 %v1392
        %v1425 = vunpack.c.l.b16 %v1393
        %v1426 = vunpack.c.l.b16 %v1394
        %v1427 = vunpack.c.l.b16 %v1395
        %v1428 = vunpack.c.l.b16 %v1396
        %v1429 = vunpack.c.l.b16 %v1397
        %v1430 = vpack.c.b16 %v1415, %v1414
        %v1431 = vpack.c.b16 %v1417, %v1416
        %v1432 = vpack.c.b16 %v1419, %v1418
        %v1433 = vpack.c.b16 %v1421, %v1420
        %v1434 = vpack.c.b16 %v1423, %v1422
        %v1435 = vpack.c.b16 %v1425, %v1424
        %v1436 = vpack.c.b16 %v1427, %v1426
        %v1437 = vpack.c.b16 %v1429, %v1428
        %1446 = vmatprep.subr.bf16.mxu0 0
        %1447 = vmatpush1.bf16.msra.mxu0 %v1437
        %1448 = vmatprep.subr.bf16.mxu0 0
        %1449 = vmatpush1.bf16.msra.mxu0 %v1436
        %1450 = vmatprep.subr.bf16.mxu0 0
        %1451 = vmatpush1.bf16.msra.mxu0 %v1435
        %1452 = vmatprep.subr.bf16.mxu0 0
        %1453 = vmatpush1.bf16.msra.mxu0 %v1434
        %1454 = vmatprep.subr.bf16.mxu0 0
        %1455 = vmatpush1.bf16.msra.mxu0 %v1433
        %1456 = vmatprep.subr.bf16.mxu0 0
        %1457 = vmatpush1.bf16.msra.mxu0 %v1432
        %1458 = vmatprep.subr.bf16.mxu0 0
        %1459 = vmatpush1.bf16.msra.mxu0 %v1431
        %1460 = vmatprep.subr.bf16.mxu0 0
        %1461 = vmatpush1.bf16.msra.mxu0 %v1430
        %1462 = vmatprep.subr.bf16.mxu0 0
        %1463 = vmatpush2.bf16.msra.mxu0 0
        %1464 = vmatprep.subr.bf16.mxu0 0
        %1465 = vmatpush2.bf16.msra.mxu0 0
        %1466 = vmatprep.subr.bf16.mxu0 0
        %1467 = vmatpush2.bf16.msra.mxu0 0
        %1468 = vmatprep.subr.bf16.mxu0 0
        %1469 = vmatpush2.bf16.msra.mxu0 0
        %1470 = vmatprep.subr.bf16.mxu0 0
        %1471 = vmatpush2.bf16.msra.mxu0 0
        %1472 = vmatprep.subr.bf16.mxu0 0
        %1473 = vmatpush2.bf16.msra.mxu0 0
        %1474 = vmatprep.subr.bf16.mxu0 0
        %1475 = vmatpush2.bf16.msra.mxu0 0
        %1476 = vmatprep.subr.bf16.mxu0 0
        %1477 = vmatpush2.bf16.msra.mxu0 0
        %1478 = vmatprep.mubr.bf16.mxu0 0
        %1479 = vmatmul.mubr.bf16.gmra.mxu0 %v1381
        %v1480 = vpop.f32.mrf.mxu0
        %v1481 = vadd.f32 %v1179, %v1480
        %v1482 = vpop.f32.mrf.mxu0
        %v1483 = vpop.f32.mrf.mxu0
        %v1484 = vadd.f32 %v1179, %v1483
        %v1485 = vpop.f32.mrf.mxu0
        %1486 = vdwg.mxu0
        %s1487 = scalar_lea.vmem %s297, 32 [#allocation6]
        %1488 = vst.msk [vmem:[%s1487] sm:$0xff] %vm326, %v1481
        %1489 = vst.msk [vmem:[%s1487 + $0x8] sm:$0xff] %vm326, %v1484
        %v1490 = vpack.c.bf16 %v1155, %v1149
        %v1491 = vld [vmem:[%s2] sm:$0xf]
        %v1492 = vld [vmem:[%s2 + $0x4] sm:$0xf]
        %v1493 = vld [vmem:[%s2 + $0x8] sm:$0xf]
        %v1494 = vld [vmem:[%s2 + $0xc] sm:$0xf]
        %v1495 = vld [vmem:[%s2 + $0x10] sm:$0xf]
        %v1496 = vld [vmem:[%s2 + $0x14] sm:$0xf]
        %v1497 = vld [vmem:[%s2 + $0x18] sm:$0xf]
        %v1498 = vld [vmem:[%s2 + $0x1c] sm:$0xf]
        %v1499 = vld [vmem:[%s2 + $0x20] sm:$0xf]
        %v1500 = vld [vmem:[%s2 + $0x24] sm:$0xf]
        %v1501 = vld [vmem:[%s2 + $0x28] sm:$0xf]
        %v1502 = vld [vmem:[%s2 + $0x2c] sm:$0xf]
        %v1503 = vld [vmem:[%s2 + $0x30] sm:$0xf]
        %v1504 = vld [vmem:[%s2 + $0x34] sm:$0xf]
        %v1505 = vld [vmem:[%s2 + $0x38] sm:$0xf]
        %v1506 = vld [vmem:[%s2 + $0x3c] sm:$0xf]
        %v1523 = vunpack.c.l.b16 %v1491
        %v1524 = vunpack.c.l.b16 %v1492
        %v1525 = vunpack.c.l.b16 %v1493
        %v1526 = vunpack.c.l.b16 %v1494
        %v1527 = vunpack.c.l.b16 %v1495
        %v1528 = vunpack.c.l.b16 %v1496
        %v1529 = vunpack.c.l.b16 %v1497
        %v1530 = vunpack.c.l.b16 %v1498
        %v1531 = vunpack.c.l.b16 %v1499
        %v1532 = vunpack.c.l.b16 %v1500
        %v1533 = vunpack.c.l.b16 %v1501
        %v1534 = vunpack.c.l.b16 %v1502
        %v1535 = vunpack.c.l.b16 %v1503
        %v1536 = vunpack.c.l.b16 %v1504
        %v1537 = vunpack.c.l.b16 %v1505
        %v1538 = vunpack.c.l.b16 %v1506
        %v1539 = vpack.c.b16 %v1524, %v1523
        %v1540 = vpack.c.b16 %v1526, %v1525
        %v1541 = vpack.c.b16 %v1528, %v1527
        %v1542 = vpack.c.b16 %v1530, %v1529
        %v1543 = vpack.c.b16 %v1532, %v1531
        %v1544 = vpack.c.b16 %v1534, %v1533
        %v1545 = vpack.c.b16 %v1536, %v1535
        %v1546 = vpack.c.b16 %v1538, %v1537
        %1555 = vmatprep.subr.bf16.mxu0 0
        %1556 = vmatpush1.bf16.msra.mxu0 %v1546
        %1557 = vmatprep.subr.bf16.mxu0 0
        %1558 = vmatpush1.bf16.msra.mxu0 %v1545
        %1559 = vmatprep.subr.bf16.mxu0 0
        %1560 = vmatpush1.bf16.msra.mxu0 %v1544
        %1561 = vmatprep.subr.bf16.mxu0 0
        %1562 = vmatpush1.bf16.msra.mxu0 %v1543
        %1563 = vmatprep.subr.bf16.mxu0 0
        %1564 = vmatpush1.bf16.msra.mxu0 %v1542
        %1565 = vmatprep.subr.bf16.mxu0 0
        %1566 = vmatpush1.bf16.msra.mxu0 %v1541
        %1567 = vmatprep.subr.bf16.mxu0 0
        %1568 = vmatpush1.bf16.msra.mxu0 %v1540
        %1569 = vmatprep.subr.bf16.mxu0 0
        %1570 = vmatpush1.bf16.msra.mxu0 %v1539
        %1571 = vmatprep.subr.bf16.mxu0 0
        %1572 = vmatpush2.bf16.msra.mxu0 0
        %1573 = vmatprep.subr.bf16.mxu0 0
        %1574 = vmatpush2.bf16.msra.mxu0 0
        %1575 = vmatprep.subr.bf16.mxu0 0
        %1576 = vmatpush2.bf16.msra.mxu0 0
        %1577 = vmatprep.subr.bf16.mxu0 0
        %1578 = vmatpush2.bf16.msra.mxu0 0
        %1579 = vmatprep.subr.bf16.mxu0 0
        %1580 = vmatpush2.bf16.msra.mxu0 0
        %1581 = vmatprep.subr.bf16.mxu0 0
        %1582 = vmatpush2.bf16.msra.mxu0 0
        %1583 = vmatprep.subr.bf16.mxu0 0
        %1584 = vmatpush2.bf16.msra.mxu0 0
        %1585 = vmatprep.subr.bf16.mxu0 0
        %1586 = vmatpush2.bf16.msra.mxu0 0
        %1587 = vmatprep.mubr.bf16.mxu0 0
        %1588 = vmatmul.mubr.bf16.gmra.mxu0 %v1490
        %v1589 = vpop.f32.mrf.mxu0
        %v1590 = vadd.f32 %v1179, %v1589
        %v1591 = vpop.f32.mrf.mxu0
        %v1592 = vpop.f32.mrf.mxu0
        %v1593 = vadd.f32 %v1179, %v1592
        %v1594 = vpop.f32.mrf.mxu0
        %1595 = vdwg.mxu0
        %s1596 = scalar_lea.vmem %s297, 48 [#allocation6]
        %1597 = vst.msk [vmem:[%s1596] sm:$0xff] %vm326, %v1590
        %1598 = vst.msk [vmem:[%s1596 + $0x8] sm:$0xff] %vm326, %v1593
        %s1599 = sand.u32 %s184, 1
        %s1600 = scalar_lea.sflag [#allocation5], %s1599
        %s1601 = sand.u32 %s184, 1
        %s1602 = smul.addr %s1601, 64
        %s1603 = scalar_lea.vmem [#allocation6], %s1602
        // Predicated region
        $region53: #{tpu_custom_call.1} parent=47 // pred_check
          %p1604 = pneg %p194
        $region54: #{tpu_custom_call.1} parent=47 // pred_check_branch
          %1606 = sbr.rel (%p1604) target = $region56
        $region55: #{tpu_custom_call.1} parent=47 // pred_region
          %s1607 = smul.u32 4, %s24
          %s1609 = ssub.s32 1024, 1024
          %1610 = vsyncadd %s1600, %s1609
          %s1611 = smul.addr %s1607, 2
          %s1612 = smul.addr %s1611, 128
          %s1613 = scalar_lea.hbm %s7, %s1612
          %s1614 = sshll.u32 %s1603, 4
          %s1615 = int_to_ptr.vmem [resolvable:$true] %s1614
          %1620 = dma.vmem_to_hbm [thread:$0]  %s1615, 1024, %s1613, %s1600, 128, 128, 8
        $region56: #{tpu_custom_call.1} parent=47 // pred_fallthru
          _
      $region48: #{tpu_custom_call.1} parent=5 // pred_fallthru
        _
      %p1621 = scmp.le.s32.totalorder 2, %s19
      // Predicated region
      $region57: #{tpu_custom_call.1} parent=5 // pred_check
        %p1622 = pneg %p1621
      $region58: #{tpu_custom_call.1} parent=5 // pred_check_branch
        %1624 = sbr.rel (%p1622) target = $region60
      $region59: #{tpu_custom_call.1} parent=5 // pred_region
        %s1625 = ssub.s32 %s19, 2
        // Predicated region
        $region61: #{tpu_custom_call.1} parent=59 // pred_check
          %p1626 = pneg %p200
        $region62: #{tpu_custom_call.1} parent=59 // pred_check_branch
          %1628 = sbr.rel (%p1626) target = $region64
        $region63: #{tpu_custom_call.1} parent=59 // pred_region
          %s1629 = sand.u32 %s185, 1
          %s1630 = scalar_lea.sflag [#allocation5], %s1629
          %s1631 = sand.u32 %s185, 1
          %s1632 = smul.addr %s1631, 64
          %s1633 = scalar_lea.vmem [#allocation6], %s1632
          %1634 = dma.done %s1630, 1024
        $region64: #{tpu_custom_call.1} parent=59 // pred_fallthru
          _
      $region60: #{tpu_custom_call.1} parent=5 // pred_fallthru
        _
    $region6: #{tpu_custom_call.1} parent=1 // loop_footer
      %s23 = sadd.s32 1, %s19
    $region7: #{tpu_custom_call.1} parent=1 // loop_footer_branch
      %18 = sbr.rel target = $region3
    $region8: #{tpu_custom_call.1} parent=1 // loop_exit
      _
    %1635 = vsyncpa [#allocation4], 1
    %s1636 = scalar_lea.sflag [#allocation4], 1
    %1637 = vsyncpa %s1636, 1
    %1638 = vsyncpa [#allocation5], 1
    %s1639 = scalar_lea.sflag [#allocation5], 1
    %1640 = vsyncpa %s1639, 1

</llo_original>
